<compile_context>
chip_gen: v7x
topology: tpu7x:2x2x1
jax: 0.10.0
libtpu: 0.0.40
codegen_flags: <defaults>
</compile_context>

<pallas_src>
import numpy as np
import jax
import jax.numpy as jnp
from jax.experimental import pallas as pl
from jax.experimental.pallas import tpu as pltpu

# ---- model dimensions implied by the PyTorch module (input length 416) ----
L_IN = 416
QPH = L_IN // 4           # 104 samples per mod-4 phase
K1, C1 = 4, 32            # conv1: kernel 4, 1 -> 32 channels
L1 = L_IN - K1 + 1        # 413
P1 = L1 // 2              # 206  (MaxPool1d(2))
K2, C2 = 2, 64            # conv2: kernel 2, 32 -> 64 channels
L2 = P1 - K2 + 1          # 205
P2 = L2 // 2              # 102  (MaxPool1d(2))
FLAT = C2 * P2            # 6528 (flattened_size)
H = 64                    # fc1 hidden
NCLS = 3                  # fc2 output
NPAD = 128                # lane-dense padded logits width


# ----------------------------- stage 1: conv / pool ----------------------------------
def conv_kernel(xph_ref, w1_ref, b1_ref, w2a_ref, w2b_ref, b2_ref, out_ref):
    m = P2                                     # 102 pooled output rows
    w0 = w1_ref[0:1, :]
    wk1 = w1_ref[1:2, :]
    wk2 = w1_ref[2:3, :]
    wk3 = w1_ref[3:4, :]
    b1 = b1_ref[...]

    # conv1 raw output at position j is sum_k x[j+k] * w1[k]; with x split into phases
    # x_r[s] = x[4s+r] every needed conv1/pool1 row is a dense elementwise expression.
    def p1_even(lo):
        # p1[2*(s+lo)] = relu(max(h1[4(s+lo)], h1[4(s+lo)+1]) + b1), s = 0..101
        x0 = xph_ref[lo:lo + m, 0:1]
        x1 = xph_ref[lo:lo + m, 1:2]
        x2 = xph_ref[lo:lo + m, 2:3]
        x3 = xph_ref[lo:lo + m, 3:4]
        x0n = xph_ref[lo + 1:lo + 1 + m, 0:1]
        h_a = x0 * w0 + x1 * wk1 + x2 * wk2 + x3 * wk3
        h_b = x1 * w0 + x2 * wk1 + x3 * wk2 + x0n * wk3
        return jnp.maximum(jnp.maximum(h_a, h_b) + b1, 0.0)        # (102, 32)

    def p1_odd(lo):
        # p1[2*(s+lo)+1] = relu(max(h1[4(s+lo)+2], h1[4(s+lo)+3]) + b1), s = 0..101
        x2 = xph_ref[lo:lo + m, 2:3]
        x3 = xph_ref[lo:lo + m, 3:4]
        x0n = xph_ref[lo + 1:lo + 1 + m, 0:1]
        x1n = xph_ref[lo + 1:lo + 1 + m, 1:2]
        x2n = xph_ref[lo + 1:lo + 1 + m, 2:3]
        h_a = x2 * w0 + x3 * wk1 + x0n * wk2 + x1n * wk3
        h_b = x3 * w0 + x0n * wk1 + x1n * wk2 + x2n * wk3
        return jnp.maximum(jnp.maximum(h_a, h_b) + b1, 0.0)        # (102, 32)

    pe = p1_even(0)        # p1[2u]     u = 0..101
    po = p1_odd(0)         # p1[2u+1]   u = 0..101
    pe1 = p1_even(1)       # p1[2u+2]   u = 0..101

    # conv2 (32->64, k=2) at even/odd positions; MaxPool1d(2) + bias + ReLU folded.
    w2a = w2a_ref[...]
    w2b = w2b_ref[...]
    h2_even = (jnp.dot(pe, w2a, preferred_element_type=jnp.float32)
               + jnp.dot(po, w2b, preferred_element_type=jnp.float32))
    h2_odd = (jnp.dot(po, w2a, preferred_element_type=jnp.float32)
              + jnp.dot(pe1, w2b, preferred_element_type=jnp.float32))
    out_ref[...] = jnp.maximum(jnp.maximum(h2_even, h2_odd) + b2_ref[...], 0.0)


# ----------------------------- stage 2: fc1 / fc2 ------------------------------------
def fc_kernel(flat_ref, wf1_ref, bf1_ref, wf2_ref, bf2_ref, out_ref):
    f1 = jnp.dot(flat_ref[...], wf1_ref[...], preferred_element_type=jnp.float32)
    f1 = jnp.maximum(f1 + bf1_ref[...], 0.0)
    # dropout(p=0.5) is identity at inference time.
    # TODO(synk): train-mode stochastic dropout masking is not reproduced (eval semantics).
    out_ref[...] = (jnp.dot(f1, wf2_ref[...], preferred_element_type=jnp.float32)
                    + bf2_ref[...])


def _const_spec(shape):
    zeros = (0,) * len(shape)
    return pl.BlockSpec(shape, lambda i, _z=zeros: _z)


@jax.jit
def csi1dcnn_forward(x, params):
    """x: (B, 1, 416) float32 (PyTorch NCW Conv1d layout). Returns (B, 3)."""
    W1, B1, W2, B2, WF1, BF1, WF2, BF2 = params
    B = x.shape[0]
    assert x.shape[1] == 1 and x.shape[2] == L_IN
    sig = x[:, 0, :].astype(jnp.float32)                            # (B, 416)
    xph = sig.reshape(B, QPH, 4)                                    # (B, 104, 4): xph[b,s,r] = x[b,4s+r]

    # ---- weight layout prep (pure layout plumbing, done once at trace time) ----
    w1 = jnp.transpose(W1[:, 0, :], (1, 0))                         # (4, 32)   [k, c_out]
    b1 = B1.reshape(1, C1)
    w2a = jnp.transpose(W2[:, :, 0], (1, 0))                        # (32, 64)  [c_in, c_out]
    w2b = jnp.transpose(W2[:, :, 1], (1, 0))                        # (32, 64)
    b2 = B2.reshape(1, C2)
    # PyTorch flattens (B, 64, 102) channel-major (index = c*102 + t).  The conv kernel
    # emits (t, c); re-permute fc1's weight to t-major (row = t*64 + c) so a plain
    # reshape of the stage-1 output matches -- no in-kernel flatten needed.
    wf1 = jnp.transpose(WF1.reshape(H, C2, P2), (2, 1, 0)).reshape(FLAT, H)   # (6528, 64)
    bf1 = BF1.reshape(1, H)
    wf2 = jnp.pad(jnp.transpose(WF2, (1, 0)), ((0, 0), (0, NPAD - NCLS)))     # (64, 128)
    bf2 = jnp.pad(BF2.reshape(1, NCLS), ((0, 0), (0, NPAD - NCLS)))           # (1, 128)

    # ---- stage 1: conv/pool stack, one batch element per grid step ----
    pooled = pl.pallas_call(
        conv_kernel,
        out_shape=jax.ShapeDtypeStruct((B, P2, C2), jnp.float32),
        grid=(B,),
        in_specs=[
            pl.BlockSpec((None, QPH, 4), lambda i: (i, 0, 0)),      # input phases
            _const_spec((K1, C1)),                                  # w1
            _const_spec((1, C1)),                                   # b1
            _const_spec((C1, C2)),                                  # w2a
            _const_spec((C1, C2)),                                  # w2b
            _const_spec((1, C2)),                                   # b2
        ],
        out_specs=pl.BlockSpec((None, P2, C2), lambda i: (i, 0, 0)),
        compiler_params=pltpu.CompilerParams(
            dimension_semantics=("parallel",)),
    )(xph, w1, b1, w2a, w2b, b2)                                    # (B, 102, 64)

    # ---- stage 2: fc1 + fc2, batch-tiled M for real MXU utilization ----
    flat = pooled.reshape(B, FLAT)                                  # index = t*64 + c
    bp8 = ((B + 7) // 8) * 8
    b_tile = min(128, bp8)
    bp = ((bp8 + b_tile - 1) // b_tile) * b_tile
    if bp != B:
        flat = jnp.pad(flat, ((0, bp - B), (0, 0)))

    logits = pl.pallas_call(
        fc_kernel,
        out_shape=jax.ShapeDtypeStruct((bp, NPAD), jnp.float32),
        grid=(bp // b_tile,),
        in_specs=[
            pl.BlockSpec((b_tile, FLAT), lambda i: (i, 0)),         # pooled, flattened
            _const_spec((FLAT, H)),                                 # fc1 weight (t-major)
            _const_spec((1, H)),                                    # fc1 bias
            _const_spec((H, NPAD)),                                 # fc2 weight (padded lanes)
            _const_spec((1, NPAD)),                                 # fc2 bias  (padded lanes)
        ],
        out_specs=pl.BlockSpec((b_tile, NPAD), lambda i: (i, 0)),
        compiler_params=pltpu.CompilerParams(
            dimension_semantics=("parallel",)),
    )(flat, wf1, bf1, wf2, bf2)

    return logits[:B, :NCLS]


def csi1dcnn_reference(x, params):
    """Pure-JAX re-derivation of the PyTorch forward (eval mode), PyTorch layouts."""
    W1, B1, W2, B2, WF1, BF1, WF2, BF2 = params
    xs = x[:, 0, :]                                                 # (B, 416)
    windows = jnp.stack([xs[:, k:k + L1] for k in range(K1)], axis=-1)   # (B, 413, 4)
    h1 = jnp.einsum('btk,ck->bct', windows, W1[:, 0, :]) + B1[None, :, None]
    h1 = jnp.maximum(h1, 0.0)                                       # (B, 32, 413)
    p1 = jnp.maximum(h1[:, :, 0:2 * P1:2], h1[:, :, 1:2 * P1:2])    # (B, 32, 206)
    h2 = (jnp.einsum('bct,oc->bot', p1[:, :, 0:L2], W2[:, :, 0])
          + jnp.einsum('bct,oc->bot', p1[:, :, 1:L2 + 1], W2[:, :, 1])
          + B2[None, :, None])
    h2 = jnp.maximum(h2, 0.0)                                       # (B, 64, 205)
    p2 = jnp.maximum(h2[:, :, 0:2 * P2:2], h2[:, :, 1:2 * P2:2])    # (B, 64, 102)
    flat = p2.reshape(x.shape[0], -1)                               # (B, 6528)
    f1 = jnp.maximum(flat @ WF1.T + BF1, 0.0)
    return f1 @ WF2.T + BF2


if __name__ == "__main__":
    key = jax.random.PRNGKey(0)
    ks = jax.random.split(key, 9)

    def u(k, shape, fan_in):
        bound = 2.0 / np.sqrt(fan_in)
        return jax.random.uniform(k, shape, jnp.float32, -bound, bound)

    # Deterministic synthetic parameters (PyTorch parameter shapes).
    W1 = u(ks[0], (C1, 1, K1), 1 * K1)        # conv1.weight (32, 1, 4)
    B1 = u(ks[1], (C1,), 1 * K1)              # conv1.bias
    W2 = u(ks[2], (C2, C1, K2), C1 * K2)      # conv2.weight (64, 32, 2)
    B2 = u(ks[3], (C2,), C1 * K2)             # conv2.bias
    WF1 = u(ks[4], (H, FLAT), FLAT)           # fc1.weight (64, 6528)
    BF1 = u(ks[5], (H,), FLAT)                # fc1.bias
    WF2 = u(ks[6], (NCLS, H), H)              # fc2.weight (3, 64)
    BF2 = u(ks[7], (NCLS,), H)                # fc2.bias
    params = (W1, B1, W2, B2, WF1, BF1, WF2, BF2)

    # Input: batch=2, 1 channel, length 416 (the length the module's fc1 requires).
    x = jax.random.normal(ks[8], (2, 1, L_IN), jnp.float32)

    out = csi1dcnn_forward(x, params)
    out = jax.block_until_ready(out)
    assert out.shape == (2, NCLS)

    ref = csi1dcnn_reference(x, params)
    np.testing.assert_allclose(np.asarray(out), np.asarray(ref), rtol=5e-2, atol=5e-2)
    print("KERNEL_OK")
</pallas_src>

<mosaic_0001>
module attributes {stable_mosaic.version = 11 : i64} {
  func.func @conv_kernel(%arg0: i32, %arg1: memref<1x104x4xf32, #tpu.memory_space<vmem>>, %arg2: memref<4x32xf32, #tpu.memory_space<vmem>>, %arg3: memref<1x32xf32, #tpu.memory_space<vmem>>, %arg4: memref<32x64xf32, #tpu.memory_space<vmem>>, %arg5: memref<32x64xf32, #tpu.memory_space<vmem>>, %arg6: memref<1x64xf32, #tpu.memory_space<vmem>>, %arg7: memref<1x102x64xf32, #tpu.memory_space<vmem>>) attributes {dimension_semantics = [#tpu.dimension_semantics<parallel>], iteration_bounds = array<i64: 2>, scalar_prefetch = 0 : i64, scratch_operands = 0 : i64, tpu.core_type = #tpu.core_type<tc>, window_params = [{transform_indices = @transform_0, window_bounds = array<i64: 1, 104, 4>}, {pipeline_mode = #tpu.pipeline_mode<synchronous>, transform_indices = @transform_1, window_bounds = array<i64: 4, 32>}, {pipeline_mode = #tpu.pipeline_mode<synchronous>, transform_indices = @transform_2, window_bounds = array<i64: 1, 32>}, {pipeline_mode = #tpu.pipeline_mode<synchronous>, transform_indices = @transform_3, window_bounds = array<i64: 32, 64>}, {pipeline_mode = #tpu.pipeline_mode<synchronous>, transform_indices = @transform_4, window_bounds = array<i64: 32, 64>}, {pipeline_mode = #tpu.pipeline_mode<synchronous>, transform_indices = @transform_5, window_bounds = array<i64: 1, 64>}, {transform_indices = @transform_6, window_bounds = array<i64: 1, 102, 64>}]} {
    %c0 = arith.constant 0 : index
    %c0_0 = arith.constant 0 : index
    %0 = vector.load %arg2[%c0, %c0_0] : memref<4x32xf32, #tpu.memory_space<vmem>>, vector<1x32xf32>
    %c1 = arith.constant 1 : index
    %c0_1 = arith.constant 0 : index
    %1 = vector.load %arg2[%c1, %c0_1] : memref<4x32xf32, #tpu.memory_space<vmem>>, vector<1x32xf32>
    %c2 = arith.constant 2 : index
    %c0_2 = arith.constant 0 : index
    %2 = vector.load %arg2[%c2, %c0_2] : memref<4x32xf32, #tpu.memory_space<vmem>>, vector<1x32xf32>
    %c3 = arith.constant 3 : index
    %c0_3 = arith.constant 0 : index
    %3 = vector.load %arg2[%c3, %c0_3] : memref<4x32xf32, #tpu.memory_space<vmem>>, vector<1x32xf32>
    %c0_4 = arith.constant 0 : index
    %c0_5 = arith.constant 0 : index
    %4 = vector.load %arg3[%c0_4, %c0_5] : memref<1x32xf32, #tpu.memory_space<vmem>>, vector<1x32xf32>
    %c0_6 = arith.constant 0 : index
    %c0_7 = arith.constant 0 : index
    %c0_8 = arith.constant 0 : index
    %5 = vector.load %arg1[%c0_6, %c0_7, %c0_8] : memref<1x104x4xf32, #tpu.memory_space<vmem>>, vector<1x102x1xf32>
    %6 = vector.shape_cast %5 : vector<1x102x1xf32> to vector<102x1xf32>
    %c0_9 = arith.constant 0 : index
    %c0_10 = arith.constant 0 : index
    %c1_11 = arith.constant 1 : index
    %7 = vector.load %arg1[%c0_9, %c0_10, %c1_11] : memref<1x104x4xf32, #tpu.memory_space<vmem>>, vector<1x102x1xf32>
    %8 = vector.shape_cast %7 : vector<1x102x1xf32> to vector<102x1xf32>
    %c0_12 = arith.constant 0 : index
    %c0_13 = arith.constant 0 : index
    %c2_14 = arith.constant 2 : index
    %9 = vector.load %arg1[%c0_12, %c0_13, %c2_14] : memref<1x104x4xf32, #tpu.memory_space<vmem>>, vector<1x102x1xf32>
    %10 = vector.shape_cast %9 : vector<1x102x1xf32> to vector<102x1xf32>
    %c0_15 = arith.constant 0 : index
    %c0_16 = arith.constant 0 : index
    %c3_17 = arith.constant 3 : index
    %11 = vector.load %arg1[%c0_15, %c0_16, %c3_17] : memref<1x104x4xf32, #tpu.memory_space<vmem>>, vector<1x102x1xf32>
    %12 = vector.shape_cast %11 : vector<1x102x1xf32> to vector<102x1xf32>
    %c0_18 = arith.constant 0 : index
    %c1_19 = arith.constant 1 : index
    %c0_20 = arith.constant 0 : index
    %13 = vector.load %arg1[%c0_18, %c1_19, %c0_20] : memref<1x104x4xf32, #tpu.memory_space<vmem>>, vector<1x102x1xf32>
    %14 = vector.shape_cast %13 : vector<1x102x1xf32> to vector<102x1xf32>
    %15 = vector.broadcast %6 : vector<102x1xf32> to vector<102x32xf32>
    %16 = vector.broadcast %0 : vector<1x32xf32> to vector<102x32xf32>
    %17 = arith.mulf %15, %16 : vector<102x32xf32>
    %18 = vector.broadcast %8 : vector<102x1xf32> to vector<102x32xf32>
    %19 = vector.broadcast %1 : vector<1x32xf32> to vector<102x32xf32>
    %20 = arith.mulf %18, %19 : vector<102x32xf32>
    %21 = arith.addf %17, %20 : vector<102x32xf32>
    %22 = vector.broadcast %10 : vector<102x1xf32> to vector<102x32xf32>
    %23 = vector.broadcast %2 : vector<1x32xf32> to vector<102x32xf32>
    %24 = arith.mulf %22, %23 : vector<102x32xf32>
    %25 = arith.addf %21, %24 : vector<102x32xf32>
    %26 = vector.broadcast %12 : vector<102x1xf32> to vector<102x32xf32>
    %27 = vector.broadcast %3 : vector<1x32xf32> to vector<102x32xf32>
    %28 = arith.mulf %26, %27 : vector<102x32xf32>
    %29 = arith.addf %25, %28 : vector<102x32xf32>
    %30 = vector.broadcast %8 : vector<102x1xf32> to vector<102x32xf32>
    %31 = vector.broadcast %0 : vector<1x32xf32> to vector<102x32xf32>
    %32 = arith.mulf %30, %31 : vector<102x32xf32>
    %33 = vector.broadcast %10 : vector<102x1xf32> to vector<102x32xf32>
    %34 = vector.broadcast %1 : vector<1x32xf32> to vector<102x32xf32>
    %35 = arith.mulf %33, %34 : vector<102x32xf32>
    %36 = arith.addf %32, %35 : vector<102x32xf32>
    %37 = vector.broadcast %12 : vector<102x1xf32> to vector<102x32xf32>
    %38 = vector.broadcast %2 : vector<1x32xf32> to vector<102x32xf32>
    %39 = arith.mulf %37, %38 : vector<102x32xf32>
    %40 = arith.addf %36, %39 : vector<102x32xf32>
    %41 = vector.broadcast %14 : vector<102x1xf32> to vector<102x32xf32>
    %42 = vector.broadcast %3 : vector<1x32xf32> to vector<102x32xf32>
    %43 = arith.mulf %41, %42 : vector<102x32xf32>
    %44 = arith.addf %40, %43 : vector<102x32xf32>
    %45 = arith.maximumf %29, %44 : vector<102x32xf32>
    %46 = vector.broadcast %4 : vector<1x32xf32> to vector<102x32xf32>
    %47 = arith.addf %45, %46 : vector<102x32xf32>
    %cst = arith.constant 0.000000e+00 : f32
    %48 = vector.broadcast %cst : f32 to vector<102x32xf32>
    %49 = arith.maximumf %47, %48 : vector<102x32xf32>
    %c0_21 = arith.constant 0 : index
    %c0_22 = arith.constant 0 : index
    %c2_23 = arith.constant 2 : index
    %50 = vector.load %arg1[%c0_21, %c0_22, %c2_23] : memref<1x104x4xf32, #tpu.memory_space<vmem>>, vector<1x102x1xf32>
    %51 = vector.shape_cast %50 : vector<1x102x1xf32> to vector<102x1xf32>
    %c0_24 = arith.constant 0 : index
    %c0_25 = arith.constant 0 : index
    %c3_26 = arith.constant 3 : index
    %52 = vector.load %arg1[%c0_24, %c0_25, %c3_26] : memref<1x104x4xf32, #tpu.memory_space<vmem>>, vector<1x102x1xf32>
    %53 = vector.shape_cast %52 : vector<1x102x1xf32> to vector<102x1xf32>
    %c0_27 = arith.constant 0 : index
    %c1_28 = arith.constant 1 : index
    %c0_29 = arith.constant 0 : index
    %54 = vector.load %arg1[%c0_27, %c1_28, %c0_29] : memref<1x104x4xf32, #tpu.memory_space<vmem>>, vector<1x102x1xf32>
    %55 = vector.shape_cast %54 : vector<1x102x1xf32> to vector<102x1xf32>
    %c0_30 = arith.constant 0 : index
    %c1_31 = arith.constant 1 : index
    %c1_32 = arith.constant 1 : index
    %56 = vector.load %arg1[%c0_30, %c1_31, %c1_32] : memref<1x104x4xf32, #tpu.memory_space<vmem>>, vector<1x102x1xf32>
    %57 = vector.shape_cast %56 : vector<1x102x1xf32> to vector<102x1xf32>
    %c0_33 = arith.constant 0 : index
    %c1_34 = arith.constant 1 : index
    %c2_35 = arith.constant 2 : index
    %58 = vector.load %arg1[%c0_33, %c1_34, %c2_35] : memref<1x104x4xf32, #tpu.memory_space<vmem>>, vector<1x102x1xf32>
    %59 = vector.shape_cast %58 : vector<1x102x1xf32> to vector<102x1xf32>
    %60 = vector.broadcast %51 : vector<102x1xf32> to vector<102x32xf32>
    %61 = vector.broadcast %0 : vector<1x32xf32> to vector<102x32xf32>
    %62 = arith.mulf %60, %61 : vector<102x32xf32>
    %63 = vector.broadcast %53 : vector<102x1xf32> to vector<102x32xf32>
    %64 = vector.broadcast %1 : vector<1x32xf32> to vector<102x32xf32>
    %65 = arith.mulf %63, %64 : vector<102x32xf32>
    %66 = arith.addf %62, %65 : vector<102x32xf32>
    %67 = vector.broadcast %55 : vector<102x1xf32> to vector<102x32xf32>
    %68 = vector.broadcast %2 : vector<1x32xf32> to vector<102x32xf32>
    %69 = arith.mulf %67, %68 : vector<102x32xf32>
    %70 = arith.addf %66, %69 : vector<102x32xf32>
    %71 = vector.broadcast %57 : vector<102x1xf32> to vector<102x32xf32>
    %72 = vector.broadcast %3 : vector<1x32xf32> to vector<102x32xf32>
    %73 = arith.mulf %71, %72 : vector<102x32xf32>
    %74 = arith.addf %70, %73 : vector<102x32xf32>
    %75 = vector.broadcast %53 : vector<102x1xf32> to vector<102x32xf32>
    %76 = vector.broadcast %0 : vector<1x32xf32> to vector<102x32xf32>
    %77 = arith.mulf %75, %76 : vector<102x32xf32>
    %78 = vector.broadcast %55 : vector<102x1xf32> to vector<102x32xf32>
    %79 = vector.broadcast %1 : vector<1x32xf32> to vector<102x32xf32>
    %80 = arith.mulf %78, %79 : vector<102x32xf32>
    %81 = arith.addf %77, %80 : vector<102x32xf32>
    %82 = vector.broadcast %57 : vector<102x1xf32> to vector<102x32xf32>
    %83 = vector.broadcast %2 : vector<1x32xf32> to vector<102x32xf32>
    %84 = arith.mulf %82, %83 : vector<102x32xf32>
    %85 = arith.addf %81, %84 : vector<102x32xf32>
    %86 = vector.broadcast %59 : vector<102x1xf32> to vector<102x32xf32>
    %87 = vector.broadcast %3 : vector<1x32xf32> to vector<102x32xf32>
    %88 = arith.mulf %86, %87 : vector<102x32xf32>
    %89 = arith.addf %85, %88 : vector<102x32xf32>
    %90 = arith.maximumf %74, %89 : vector<102x32xf32>
    %91 = vector.broadcast %4 : vector<1x32xf32> to vector<102x32xf32>
    %92 = arith.addf %90, %91 : vector<102x32xf32>
    %cst_36 = arith.constant 0.000000e+00 : f32
    %93 = vector.broadcast %cst_36 : f32 to vector<102x32xf32>
    %94 = arith.maximumf %92, %93 : vector<102x32xf32>
    %c0_37 = arith.constant 0 : index
    %c1_38 = arith.constant 1 : index
    %c0_39 = arith.constant 0 : index
    %95 = vector.load %arg1[%c0_37, %c1_38, %c0_39] : memref<1x104x4xf32, #tpu.memory_space<vmem>>, vector<1x102x1xf32>
    %96 = vector.shape_cast %95 : vector<1x102x1xf32> to vector<102x1xf32>
    %c0_40 = arith.constant 0 : index
    %c1_41 = arith.constant 1 : index
    %c1_42 = arith.constant 1 : index
    %97 = vector.load %arg1[%c0_40, %c1_41, %c1_42] : memref<1x104x4xf32, #tpu.memory_space<vmem>>, vector<1x102x1xf32>
    %98 = vector.shape_cast %97 : vector<1x102x1xf32> to vector<102x1xf32>
    %c0_43 = arith.constant 0 : index
    %c1_44 = arith.constant 1 : index
    %c2_45 = arith.constant 2 : index
    %99 = vector.load %arg1[%c0_43, %c1_44, %c2_45] : memref<1x104x4xf32, #tpu.memory_space<vmem>>, vector<1x102x1xf32>
    %100 = vector.shape_cast %99 : vector<1x102x1xf32> to vector<102x1xf32>
    %c0_46 = arith.constant 0 : index
    %c1_47 = arith.constant 1 : index
    %c3_48 = arith.constant 3 : index
    %101 = vector.load %arg1[%c0_46, %c1_47, %c3_48] : memref<1x104x4xf32, #tpu.memory_space<vmem>>, vector<1x102x1xf32>
    %102 = vector.shape_cast %101 : vector<1x102x1xf32> to vector<102x1xf32>
    %c0_49 = arith.constant 0 : index
    %c2_50 = arith.constant 2 : index
    %c0_51 = arith.constant 0 : index
    %103 = vector.load %arg1[%c0_49, %c2_50, %c0_51] : memref<1x104x4xf32, #tpu.memory_space<vmem>>, vector<1x102x1xf32>
    %104 = vector.shape_cast %103 : vector<1x102x1xf32> to vector<102x1xf32>
    %105 = vector.broadcast %96 : vector<102x1xf32> to vector<102x32xf32>
    %106 = vector.broadcast %0 : vector<1x32xf32> to vector<102x32xf32>
    %107 = arith.mulf %105, %106 : vector<102x32xf32>
    %108 = vector.broadcast %98 : vector<102x1xf32> to vector<102x32xf32>
    %109 = vector.broadcast %1 : vector<1x32xf32> to vector<102x32xf32>
    %110 = arith.mulf %108, %109 : vector<102x32xf32>
    %111 = arith.addf %107, %110 : vector<102x32xf32>
    %112 = vector.broadcast %100 : vector<102x1xf32> to vector<102x32xf32>
    %113 = vector.broadcast %2 : vector<1x32xf32> to vector<102x32xf32>
    %114 = arith.mulf %112, %113 : vector<102x32xf32>
    %115 = arith.addf %111, %114 : vector<102x32xf32>
    %116 = vector.broadcast %102 : vector<102x1xf32> to vector<102x32xf32>
    %117 = vector.broadcast %3 : vector<1x32xf32> to vector<102x32xf32>
    %118 = arith.mulf %116, %117 : vector<102x32xf32>
    %119 = arith.addf %115, %118 : vector<102x32xf32>
    %120 = vector.broadcast %98 : vector<102x1xf32> to vector<102x32xf32>
    %121 = vector.broadcast %0 : vector<1x32xf32> to vector<102x32xf32>
    %122 = arith.mulf %120, %121 : vector<102x32xf32>
    %123 = vector.broadcast %100 : vector<102x1xf32> to vector<102x32xf32>
    %124 = vector.broadcast %1 : vector<1x32xf32> to vector<102x32xf32>
    %125 = arith.mulf %123, %124 : vector<102x32xf32>
    %126 = arith.addf %122, %125 : vector<102x32xf32>
    %127 = vector.broadcast %102 : vector<102x1xf32> to vector<102x32xf32>
    %128 = vector.broadcast %2 : vector<1x32xf32> to vector<102x32xf32>
    %129 = arith.mulf %127, %128 : vector<102x32xf32>
    %130 = arith.addf %126, %129 : vector<102x32xf32>
    %131 = vector.broadcast %104 : vector<102x1xf32> to vector<102x32xf32>
    %132 = vector.broadcast %3 : vector<1x32xf32> to vector<102x32xf32>
    %133 = arith.mulf %131, %132 : vector<102x32xf32>
    %134 = arith.addf %130, %133 : vector<102x32xf32>
    %135 = arith.maximumf %119, %134 : vector<102x32xf32>
    %136 = vector.broadcast %4 : vector<1x32xf32> to vector<102x32xf32>
    %137 = arith.addf %135, %136 : vector<102x32xf32>
    %cst_52 = arith.constant 0.000000e+00 : f32
    %138 = vector.broadcast %cst_52 : f32 to vector<102x32xf32>
    %139 = arith.maximumf %137, %138 : vector<102x32xf32>
    %c0_53 = arith.constant 0 : index
    %c0_54 = arith.constant 0 : index
    %140 = vector.load %arg4[%c0_53, %c0_54] : memref<32x64xf32, #tpu.memory_space<vmem>>, vector<32x64xf32>
    %c0_55 = arith.constant 0 : index
    %c0_56 = arith.constant 0 : index
    %141 = vector.load %arg5[%c0_55, %c0_56] : memref<32x64xf32, #tpu.memory_space<vmem>>, vector<32x64xf32>
    %cst_57 = arith.constant dense<0.000000e+00> : vector<102x64xf32>
    %142 = tpu.matmul %49, %140, %cst_57 {dimension_numbers = #tpu.dot_dimension_numbers<[1], [0], [0], [1], [0, 0, 1, 1], [], []>} : vector<102x32xf32>, vector<32x64xf32>, vector<102x64xf32> -> vector<102x64xf32>
    %cst_58 = arith.constant dense<0.000000e+00> : vector<102x64xf32>
    %143 = tpu.matmul %94, %141, %cst_58 {dimension_numbers = #tpu.dot_dimension_numbers<[1], [0], [0], [1], [0, 0, 1, 1], [], []>} : vector<102x32xf32>, vector<32x64xf32>, vector<102x64xf32> -> vector<102x64xf32>
    %144 = arith.addf %142, %143 : vector<102x64xf32>
    %cst_59 = arith.constant dense<0.000000e+00> : vector<102x64xf32>
    %145 = tpu.matmul %94, %140, %cst_59 {dimension_numbers = #tpu.dot_dimension_numbers<[1], [0], [0], [1], [0, 0, 1, 1], [], []>} : vector<102x32xf32>, vector<32x64xf32>, vector<102x64xf32> -> vector<102x64xf32>
    %cst_60 = arith.constant dense<0.000000e+00> : vector<102x64xf32>
    %146 = tpu.matmul %139, %141, %cst_60 {dimension_numbers = #tpu.dot_dimension_numbers<[1], [0], [0], [1], [0, 0, 1, 1], [], []>} : vector<102x32xf32>, vector<32x64xf32>, vector<102x64xf32> -> vector<102x64xf32>
    %147 = arith.addf %145, %146 : vector<102x64xf32>
    %148 = arith.maximumf %144, %147 : vector<102x64xf32>
    %c0_61 = arith.constant 0 : index
    %c0_62 = arith.constant 0 : index
    %149 = vector.load %arg6[%c0_61, %c0_62] : memref<1x64xf32, #tpu.memory_space<vmem>>, vector<1x64xf32>
    %150 = vector.broadcast %149 : vector<1x64xf32> to vector<102x64xf32>
    %151 = arith.addf %148, %150 : vector<102x64xf32>
    %cst_63 = arith.constant 0.000000e+00 : f32
    %152 = vector.broadcast %cst_63 : f32 to vector<102x64xf32>
    %153 = arith.maximumf %151, %152 : vector<102x64xf32>
    %c0_64 = arith.constant 0 : index
    %c0_65 = arith.constant 0 : index
    %c0_66 = arith.constant 0 : index
    %154 = vector.load %arg7[%c0_64, %c0_65, %c0_66] : memref<1x102x64xf32, #tpu.memory_space<vmem>>, vector<1x102x64xf32>
    %155 = vector.shape_cast %154 : vector<1x102x64xf32> to vector<102x64xf32>
    %156 = vector.shape_cast %153 : vector<102x64xf32> to vector<1x102x64xf32>
    tpu.vector_store %arg7[%c0_64, %c0_65, %c0_66], %156 {strides = array<i32>} : memref<1x102x64xf32, #tpu.memory_space<vmem>>, vector<1x102x64xf32>,
    return
  }
  func.func @transform_0(%arg0: i32) -> (i32, i32, i32) {
    %c0_i32 = arith.constant 0 : i32
    %c0_i32_0 = arith.constant 0 : i32
    %c0_i32_1 = arith.constant 0 : i32
    return %arg0, %c0_i32, %c0_i32_0 : i32, i32, i32
  }
  func.func @transform_1(%arg0: i32) -> (i32, i32) {
    %c0_i32 = arith.constant 0 : i32
    %c0_i32_0 = arith.constant 0 : i32
    %c0_i32_1 = arith.constant 0 : i32
    return %c0_i32, %c0_i32_0 : i32, i32
  }
  func.func @transform_2(%arg0: i32) -> (i32, i32) {
    %c0_i32 = arith.constant 0 : i32
    %c0_i32_0 = arith.constant 0 : i32
    %c0_i32_1 = arith.constant 0 : i32
    return %c0_i32, %c0_i32_0 : i32, i32
  }
  func.func @transform_3(%arg0: i32) -> (i32, i32) {
    %c0_i32 = arith.constant 0 : i32
    %c0_i32_0 = arith.constant 0 : i32
    %c0_i32_1 = arith.constant 0 : i32
    return %c0_i32, %c0_i32_0 : i32, i32
  }
  func.func @transform_4(%arg0: i32) -> (i32, i32) {
    %c0_i32 = arith.constant 0 : i32
    %c0_i32_0 = arith.constant 0 : i32
    %c0_i32_1 = arith.constant 0 : i32
    return %c0_i32, %c0_i32_0 : i32, i32
  }
  func.func @transform_5(%arg0: i32) -> (i32, i32) {
    %c0_i32 = arith.constant 0 : i32
    %c0_i32_0 = arith.constant 0 : i32
    %c0_i32_1 = arith.constant 0 : i32
    return %c0_i32, %c0_i32_0 : i32, i32
  }
  func.func @transform_6(%arg0: i32) -> (i32, i32, i32) {
    %c0_i32 = arith.constant 0 : i32
    %c0_i32_0 = arith.constant 0 : i32
    %c0_i32_1 = arith.constant 0 : i32
    return %arg0, %c0_i32, %c0_i32_0 : i32, i32, i32
  }
}

module attributes {stable_mosaic.version = 11 : i64} {
  func.func @fc_kernel(%arg0: i32, %arg1: memref<8x6528xf32, #tpu.memory_space<vmem>>, %arg2: memref<6528x64xf32, #tpu.memory_space<vmem>>, %arg3: memref<1x64xf32, #tpu.memory_space<vmem>>, %arg4: memref<64x128xf32, #tpu.memory_space<vmem>>, %arg5: memref<1x128xf32, #tpu.memory_space<vmem>>, %arg6: memref<8x128xf32, #tpu.memory_space<vmem>>) attributes {dimension_semantics = [#tpu.dimension_semantics<parallel>], iteration_bounds = array<i64: 1>, scalar_prefetch = 0 : i64, scratch_operands = 0 : i64, tpu.core_type = #tpu.core_type<tc>, window_params = [{transform_indices = @transform_0, window_bounds = array<i64: 8, 6528>}, {pipeline_mode = #tpu.pipeline_mode<synchronous>, transform_indices = @transform_1, window_bounds = array<i64: 6528, 64>}, {pipeline_mode = #tpu.pipeline_mode<synchronous>, transform_indices = @transform_2, window_bounds = array<i64: 1, 64>}, {pipeline_mode = #tpu.pipeline_mode<synchronous>, transform_indices = @transform_3, window_bounds = array<i64: 64, 128>}, {pipeline_mode = #tpu.pipeline_mode<synchronous>, transform_indices = @transform_4, window_bounds = array<i64: 1, 128>}, {transform_indices = @transform_5, window_bounds = array<i64: 8, 128>}]} {
    %c0 = arith.constant 0 : index
    %c0_0 = arith.constant 0 : index
    %0 = vector.load %arg1[%c0, %c0_0] : memref<8x6528xf32, #tpu.memory_space<vmem>>, vector<8x6528xf32>
    %c0_1 = arith.constant 0 : index
    %c0_2 = arith.constant 0 : index
    %1 = vector.load %arg2[%c0_1, %c0_2] : memref<6528x64xf32, #tpu.memory_space<vmem>>, vector<6528x64xf32>
    %cst = arith.constant dense<0.000000e+00> : vector<8x64xf32>
    %2 = tpu.matmul %0, %1, %cst {dimension_numbers = #tpu.dot_dimension_numbers<[1], [0], [0], [1], [0, 0, 1, 1], [], []>} : vector<8x6528xf32>, vector<6528x64xf32>, vector<8x64xf32> -> vector<8x64xf32>
    %c0_3 = arith.constant 0 : index
    %c0_4 = arith.constant 0 : index
    %3 = vector.load %arg3[%c0_3, %c0_4] : memref<1x64xf32, #tpu.memory_space<vmem>>, vector<1x64xf32>
    %4 = vector.broadcast %3 : vector<1x64xf32> to vector<8x64xf32>
    %5 = arith.addf %2, %4 : vector<8x64xf32>
    %cst_5 = arith.constant 0.000000e+00 : f32
    %6 = vector.broadcast %cst_5 : f32 to vector<8x64xf32>
    %7 = arith.maximumf %5, %6 : vector<8x64xf32>
    %c0_6 = arith.constant 0 : index
    %c0_7 = arith.constant 0 : index
    %8 = vector.load %arg4[%c0_6, %c0_7] : memref<64x128xf32, #tpu.memory_space<vmem>>, vector<64x128xf32>
    %cst_8 = arith.constant dense<0.000000e+00> : vector<8x128xf32>
    %9 = tpu.matmul %7, %8, %cst_8 {dimension_numbers = #tpu.dot_dimension_numbers<[1], [0], [0], [1], [0, 0, 1, 1], [], []>} : vector<8x64xf32>, vector<64x128xf32>, vector<8x128xf32> -> vector<8x128xf32>
    %c0_9 = arith.constant 0 : index
    %c0_10 = arith.constant 0 : index
    %10 = vector.load %arg5[%c0_9, %c0_10] : memref<1x128xf32, #tpu.memory_space<vmem>>, vector<1x128xf32>
    %11 = vector.broadcast %10 : vector<1x128xf32> to vector<8x128xf32>
    %12 = arith.addf %9, %11 : vector<8x128xf32>
    %c0_11 = arith.constant 0 : index
    %c0_12 = arith.constant 0 : index
    %13 = vector.load %arg6[%c0_11, %c0_12] : memref<8x128xf32, #tpu.memory_space<vmem>>, vector<8x128xf32>
    tpu.vector_store %arg6[%c0_11, %c0_12], %12 {strides = array<i32>} : memref<8x128xf32, #tpu.memory_space<vmem>>, vector<8x128xf32>,
    return
  }
  func.func @transform_0(%arg0: i32) -> (i32, i32) {
    %c0_i32 = arith.constant 0 : i32
    %c0_i32_0 = arith.constant 0 : i32
    return %arg0, %c0_i32 : i32, i32
  }
  func.func @transform_1(%arg0: i32) -> (i32, i32) {
    %c0_i32 = arith.constant 0 : i32
    %c0_i32_0 = arith.constant 0 : i32
    %c0_i32_1 = arith.constant 0 : i32
    return %c0_i32, %c0_i32_0 : i32, i32
  }
  func.func @transform_2(%arg0: i32) -> (i32, i32) {
    %c0_i32 = arith.constant 0 : i32
    %c0_i32_0 = arith.constant 0 : i32
    %c0_i32_1 = arith.constant 0 : i32
    return %c0_i32, %c0_i32_0 : i32, i32
  }
  func.func @transform_3(%arg0: i32) -> (i32, i32) {
    %c0_i32 = arith.constant 0 : i32
    %c0_i32_0 = arith.constant 0 : i32
    %c0_i32_1 = arith.constant 0 : i32
    return %c0_i32, %c0_i32_0 : i32, i32
  }
  func.func @transform_4(%arg0: i32) -> (i32, i32) {
    %c0_i32 = arith.constant 0 : i32
    %c0_i32_0 = arith.constant 0 : i32
    %c0_i32_1 = arith.constant 0 : i32
    return %c0_i32, %c0_i32_0 : i32, i32
  }
  func.func @transform_5(%arg0: i32) -> (i32, i32) {
    %c0_i32 = arith.constant 0 : i32
    %c0_i32_0 = arith.constant 0 : i32
    return %arg0, %c0_i32 : i32, i32
  }
}

</mosaic_0001>

<llo_original>
// kernel: squeeze.4
$region0: #{squeeze.4}
  %s0 = inlined_call_operand.vmem [shape: f32[2,416], index: 0, kind: input, shape index: {}]
  %s1 = inlined_call_operand.vmem [shape: f32[2,104,4], index: 1, kind: output, shape index: {}]
  $region1: #{squeeze.4} parent=0
    #allocation0 [shape = 'u8[16384]{0}', space=vmem, size = 0x4000, scoped, tag = 'scoped mem for input reshape']
    %s3 = sshllo.u32 0, 2
    %s4 = smul.addr 2, 3
    %s5 = scalar_lea.vmem %s0, %s4
    %v6 = vld [vmem:[%s5] sm:%s3]
    %s7 = scalar_lea.vmem [#allocation0], 24
    %8 = vst [vmem:[%s7] sm:%s3] %v6
    %s9 = smul.addr 2, 2
    %s10 = scalar_lea.vmem %s0, %s9
    %v11 = vld [vmem:[%s10] sm:%s3]
    %s12 = scalar_lea.vmem [#allocation0], 16
    %13 = vst [vmem:[%s12] sm:%s3] %v11
    %s14 = scalar_lea.vmem %s0, 2
    %v15 = vld [vmem:[%s14] sm:%s3]
    %s16 = scalar_lea.vmem [#allocation0], 8
    %17 = vst [vmem:[%s16] sm:%s3] %v15
    %v18 = vld [vmem:[%s0] sm:%s3]
    %19 = vst [vmem:[#allocation0] sm:%s3] %v18
    %v20 = vld [vmem:[#allocation0] sm:$0x3]
    %vm21 = vcmask 31744
    %22 = vst.msk [vmem:[%s1] ss:$104 sm:$0x3] %vm21, %v20
    %s23 = scalar_lea.vmem [#allocation0], 8
    %v24 = vld [vmem:[%s23] sm:$0x3]
    %vm25 = vcmask 31744
    %s26 = scalar_lea.vmem %s1, 32
    %27 = vst.msk [vmem:[%s26] ss:$104 sm:$0x3] %vm25, %v24
    %s28 = scalar_lea.vmem [#allocation0], 16
    %v29 = vld [vmem:[%s28] sm:$0x3]
    %vm30 = vcmask 31744
    %s31 = scalar_lea.vmem %s1, 64
    %32 = vst.msk [vmem:[%s31] ss:$104 sm:$0x3] %vm30, %v29
    %s33 = scalar_lea.vmem [#allocation0], 24
    %v34 = vld [vmem:[%s33] sm:$0x3]
    %vm35 = vcmask 31744
    %s36 = scalar_lea.vmem %s1, 96
    %37 = vst.msk [vmem:[%s36] ss:$104 sm:$0x3] %vm35, %v34
    %v38 = vld.sshfl [vmem:[#allocation0] sm:$0xff pattern:$0x99999810]
    %s39 = scalar_lea.vmem [#allocation0], 16
    %v40 = vld.sshfl [vmem:[%s39] sm:$0xff pattern:$0x98100000]
    %vm41 = vcmask 1047556
    %v42 = vsel %vm41, %v40, %v38
    %43 = vrot.lane.b32.xlu0 %v42, 124
    %v44 = vpop.permute.xlu0 %43
    %vm45 = vcmask 31744
    %s46 = scalar_lea.vmem %s1, 1
    %47 = vst.msk [vmem:[%s46] ss:$104 sm:$0x3] %vm45, %v44
    %s48 = scalar_lea.vmem %s1, 4294967121
    %49 = vst.msk [vmem:[%s48] ss:$104 sm:$0xc] %vm45, %v44
    %s50 = scalar_lea.vmem %s1, 4294966945
    %51 = vst.msk [vmem:[%s50] ss:$104 sm:$0x30] %vm45, %v44
    %s52 = scalar_lea.vmem %s1, 4294966769
    %53 = vst.msk [vmem:[%s52] ss:$104 sm:$0xc0] %vm45, %v44
    %v54 = vld.sshfl [vmem:[#allocation0] sm:$0xff pattern:$0x99999810]
    %s55 = scalar_lea.vmem [#allocation0], 16
    %v56 = vld.sshfl [vmem:[%s55] sm:$0xff pattern:$0x98100000]
    %vm57 = vcmask 1047556
    %v58 = vsel %vm57, %v56, %v54
    %59 = vrot.lane.b32.xlu0 %v58, 120
    %v60 = vpop.permute.xlu0 %59
    %vm61 = vcmask 31744
    %s62 = scalar_lea.vmem %s1, 2
    %63 = vst.msk [vmem:[%s62] ss:$104 sm:$0x3] %vm61, %v60
    %s64 = scalar_lea.vmem %s1, 4294967122
    %65 = vst.msk [vmem:[%s64] ss:$104 sm:$0xc] %vm61, %v60
    %s66 = scalar_lea.vmem %s1, 4294966946
    %67 = vst.msk [vmem:[%s66] ss:$104 sm:$0x30] %vm61, %v60
    %s68 = scalar_lea.vmem %s1, 4294966770
    %69 = vst.msk [vmem:[%s68] ss:$104 sm:$0xc0] %vm61, %v60
    %v70 = vld.sshfl [vmem:[#allocation0] sm:$0xff pattern:$0x99999810]
    %s71 = scalar_lea.vmem [#allocation0], 16
    %v72 = vld.sshfl [vmem:[%s71] sm:$0xff pattern:$0x98100000]
    %vm73 = vcmask 1047556
    %v74 = vsel %vm73, %v72, %v70
    %75 = vrot.lane.b32.xlu0 %v74, 116
    %v76 = vpop.permute.xlu0 %75
    %vm77 = vcmask 31744
    %s78 = scalar_lea.vmem %s1, 3
    %79 = vst.msk [vmem:[%s78] ss:$104 sm:$0x3] %vm77, %v76
    %s80 = scalar_lea.vmem %s1, 4294967123
    %81 = vst.msk [vmem:[%s80] ss:$104 sm:$0xc] %vm77, %v76
    %s82 = scalar_lea.vmem %s1, 4294966947
    %83 = vst.msk [vmem:[%s82] ss:$104 sm:$0x30] %vm77, %v76
    %s84 = scalar_lea.vmem %s1, 4294966771
    %85 = vst.msk [vmem:[%s84] ss:$104 sm:$0xc0] %vm77, %v76
    %v86 = vld.sshfl [vmem:[#allocation0] sm:$0xff pattern:$0x99999810]
    %s87 = scalar_lea.vmem [#allocation0], 16
    %v88 = vld.sshfl [vmem:[%s87] sm:$0xff pattern:$0x98100000]
    %vm89 = vcmask 1047556
    %v90 = vsel %vm89, %v88, %v86
    %91 = vrot.lane.b32.xlu0 %v90, 112
    %v92 = vpop.permute.xlu0 %91
    %vm93 = vcmask 31744
    %s94 = scalar_lea.vmem %s1, 4
    %95 = vst.msk [vmem:[%s94] ss:$104 sm:$0x3] %vm93, %v92
    %s96 = scalar_lea.vmem %s1, 4294967124
    %97 = vst.msk [vmem:[%s96] ss:$104 sm:$0xc] %vm93, %v92
    %s98 = scalar_lea.vmem %s1, 4294966948
    %99 = vst.msk [vmem:[%s98] ss:$104 sm:$0x30] %vm93, %v92
    %s100 = scalar_lea.vmem %s1, 4294966772
    %101 = vst.msk [vmem:[%s100] ss:$104 sm:$0xc0] %vm93, %v92
    %v102 = vld.sshfl [vmem:[#allocation0] sm:$0xff pattern:$0x99999810]
    %s103 = scalar_lea.vmem [#allocation0], 16
    %v104 = vld.sshfl [vmem:[%s103] sm:$0xff pattern:$0x98100000]
    %vm105 = vcmask 1047556
    %v106 = vsel %vm105, %v104, %v102
    %107 = vrot.lane.b32.xlu0 %v106, 108
    %v108 = vpop.permute.xlu0 %107
    %vm109 = vcmask 31744
    %s110 = scalar_lea.vmem %s1, 5
    %111 = vst.msk [vmem:[%s110] ss:$104 sm:$0x3] %vm109, %v108
    %s112 = scalar_lea.vmem %s1, 4294967125
    %113 = vst.msk [vmem:[%s112] ss:$104 sm:$0xc] %vm109, %v108
    %s114 = scalar_lea.vmem %s1, 4294966949
    %115 = vst.msk [vmem:[%s114] ss:$104 sm:$0x30] %vm109, %v108
    %s116 = scalar_lea.vmem %s1, 4294966773
    %117 = vst.msk [vmem:[%s116] ss:$104 sm:$0xc0] %vm109, %v108
    %v118 = vld.sshfl [vmem:[#allocation0] sm:$0xff pattern:$0x99999810]
    %s119 = scalar_lea.vmem [#allocation0], 16
    %v120 = vld.sshfl [vmem:[%s119] sm:$0xff pattern:$0x98100000]
    %vm121 = vcmask 1047556
    %v122 = vsel %vm121, %v120, %v118
    %123 = vrot.lane.b32.xlu0 %v122, 104
    %v124 = vpop.permute.xlu0 %123
    %vm125 = vcmask 31744
    %s126 = scalar_lea.vmem %s1, 6
    %127 = vst.msk [vmem:[%s126] ss:$104 sm:$0x3] %vm125, %v124
    %s128 = scalar_lea.vmem %s1, 4294967126
    %129 = vst.msk [vmem:[%s128] ss:$104 sm:$0xc] %vm125, %v124
    %s130 = scalar_lea.vmem %s1, 4294966950
    %131 = vst.msk [vmem:[%s130] ss:$104 sm:$0x30] %vm125, %v124
    %s132 = scalar_lea.vmem %s1, 4294966774
    %133 = vst.msk [vmem:[%s132] ss:$104 sm:$0xc0] %vm125, %v124
    %v134 = vld.sshfl [vmem:[#allocation0] sm:$0xff pattern:$0x99999810]
    %s135 = scalar_lea.vmem [#allocation0], 16
    %v136 = vld.sshfl [vmem:[%s135] sm:$0xff pattern:$0x98100000]
    %vm137 = vcmask 1047556
    %v138 = vsel %vm137, %v136, %v134
    %139 = vrot.lane.b32.xlu0 %v138, 100
    %v140 = vpop.permute.xlu0 %139
    %vm141 = vcmask 31744
    %s142 = scalar_lea.vmem %s1, 7
    %143 = vst.msk [vmem:[%s142] ss:$104 sm:$0x3] %vm141, %v140
    %s144 = scalar_lea.vmem %s1, 4294967127
    %145 = vst.msk [vmem:[%s144] ss:$104 sm:$0xc] %vm141, %v140
    %s146 = scalar_lea.vmem %s1, 4294966951
    %147 = vst.msk [vmem:[%s146] ss:$104 sm:$0x30] %vm141, %v140
    %s148 = scalar_lea.vmem %s1, 4294966775
    %149 = vst.msk [vmem:[%s148] ss:$104 sm:$0xc0] %vm141, %v140
    %v150 = vld.sshfl [vmem:[#allocation0] sm:$0xff pattern:$0x99999810]
    %s151 = scalar_lea.vmem [#allocation0], 12
    %v152 = vld [vmem:[%s151] sm:$0x30]
    %vm153 = vcmask 1045508
    %v154 = vsel %vm153, %v152, %v150
    %155 = vrot.lane.b32.xlu0 %v154, 96
    %v156 = vpop.permute.xlu0 %155
    %vm157 = vcmask 31744
    %s158 = scalar_lea.vmem %s1, 8
    %159 = vst.msk [vmem:[%s158] ss:$104 sm:$0x3] %vm157, %v156
    %s160 = scalar_lea.vmem %s1, 4294967128
    %161 = vst.msk [vmem:[%s160] ss:$104 sm:$0xc] %vm157, %v156
    %s162 = scalar_lea.vmem %s1, 4294966952
    %163 = vst.msk [vmem:[%s162] ss:$104 sm:$0x30] %vm157, %v156
    %v164 = vld.sshfl [vmem:[#allocation0] sm:$0xff pattern:$0x99999810]
    %s165 = scalar_lea.vmem [#allocation0], 12
    %v166 = vld [vmem:[%s165] sm:$0x30]
    %vm167 = vcmask 1045508
    %v168 = vsel %vm167, %v166, %v164
    %169 = vrot.lane.b32.xlu0 %v168, 92
    %v170 = vpop.permute.xlu0 %169
    %vm171 = vcmask 31744
    %s172 = scalar_lea.vmem %s1, 9
    %173 = vst.msk [vmem:[%s172] ss:$104 sm:$0x3] %vm171, %v170
    %s174 = scalar_lea.vmem %s1, 4294967129
    %175 = vst.msk [vmem:[%s174] ss:$104 sm:$0xc] %vm171, %v170
    %s176 = scalar_lea.vmem %s1, 4294966953
    %177 = vst.msk [vmem:[%s176] ss:$104 sm:$0x30] %vm171, %v170
    %v178 = vld.sshfl [vmem:[#allocation0] sm:$0xff pattern:$0x99999810]
    %s179 = scalar_lea.vmem [#allocation0], 12
    %v180 = vld [vmem:[%s179] sm:$0x30]
    %vm181 = vcmask 1045508
    %v182 = vsel %vm181, %v180, %v178
    %183 = vrot.lane.b32.xlu0 %v182, 88
    %v184 = vpop.permute.xlu0 %183
    %vm185 = vcmask 31744
    %s186 = scalar_lea.vmem %s1, 10
    %187 = vst.msk [vmem:[%s186] ss:$104 sm:$0x3] %vm185, %v184
    %s188 = scalar_lea.vmem %s1, 4294967130
    %189 = vst.msk [vmem:[%s188] ss:$104 sm:$0xc] %vm185, %v184
    %s190 = scalar_lea.vmem %s1, 4294966954
    %191 = vst.msk [vmem:[%s190] ss:$104 sm:$0x30] %vm185, %v184
    %v192 = vld.sshfl [vmem:[#allocation0] sm:$0xff pattern:$0x99999810]
    %s193 = scalar_lea.vmem [#allocation0], 12
    %v194 = vld [vmem:[%s193] sm:$0x30]
    %vm195 = vcmask 1045508
    %v196 = vsel %vm195, %v194, %v192
    %197 = vrot.lane.b32.xlu0 %v196, 84
    %v198 = vpop.permute.xlu0 %197
    %vm199 = vcmask 31744
    %s200 = scalar_lea.vmem %s1, 11
    %201 = vst.msk [vmem:[%s200] ss:$104 sm:$0x3] %vm199, %v198
    %s202 = scalar_lea.vmem %s1, 4294967131
    %203 = vst.msk [vmem:[%s202] ss:$104 sm:$0xc] %vm199, %v198
    %s204 = scalar_lea.vmem %s1, 4294966955
    %205 = vst.msk [vmem:[%s204] ss:$104 sm:$0x30] %vm199, %v198
    %v206 = vld.sshfl [vmem:[#allocation0] sm:$0xff pattern:$0x99999810]
    %s207 = scalar_lea.vmem [#allocation0], 12
    %v208 = vld [vmem:[%s207] sm:$0x30]
    %vm209 = vcmask 1045508
    %v210 = vsel %vm209, %v208, %v206
    %211 = vrot.lane.b32.xlu0 %v210, 80
    %v212 = vpop.permute.xlu0 %211
    %vm213 = vcmask 31744
    %s214 = scalar_lea.vmem %s1, 12
    %215 = vst.msk [vmem:[%s214] ss:$104 sm:$0x3] %vm213, %v212
    %s216 = scalar_lea.vmem %s1, 4294967132
    %217 = vst.msk [vmem:[%s216] ss:$104 sm:$0xc] %vm213, %v212
    %s218 = scalar_lea.vmem %s1, 4294966956
    %219 = vst.msk [vmem:[%s218] ss:$104 sm:$0x30] %vm213, %v212
    %v220 = vld.sshfl [vmem:[#allocation0] sm:$0xff pattern:$0x99999810]
    %s221 = scalar_lea.vmem [#allocation0], 12
    %v222 = vld [vmem:[%s221] sm:$0x30]
    %vm223 = vcmask 1045508
    %v224 = vsel %vm223, %v222, %v220
    %225 = vrot.lane.b32.xlu0 %v224, 76
    %v226 = vpop.permute.xlu0 %225
    %vm227 = vcmask 31744
    %s228 = scalar_lea.vmem %s1, 13
    %229 = vst.msk [vmem:[%s228] ss:$104 sm:$0x3] %vm227, %v226
    %s230 = scalar_lea.vmem %s1, 4294967133
    %231 = vst.msk [vmem:[%s230] ss:$104 sm:$0xc] %vm227, %v226
    %s232 = scalar_lea.vmem %s1, 4294966957
    %233 = vst.msk [vmem:[%s232] ss:$104 sm:$0x30] %vm227, %v226
    %v234 = vld.sshfl [vmem:[#allocation0] sm:$0xff pattern:$0x99999810]
    %s235 = scalar_lea.vmem [#allocation0], 12
    %v236 = vld [vmem:[%s235] sm:$0x30]
    %vm237 = vcmask 1045508
    %v238 = vsel %vm237, %v236, %v234
    %239 = vrot.lane.b32.xlu0 %v238, 72
    %v240 = vpop.permute.xlu0 %239
    %vm241 = vcmask 31744
    %s242 = scalar_lea.vmem %s1, 14
    %243 = vst.msk [vmem:[%s242] ss:$104 sm:$0x3] %vm241, %v240
    %s244 = scalar_lea.vmem %s1, 4294967134
    %245 = vst.msk [vmem:[%s244] ss:$104 sm:$0xc] %vm241, %v240
    %s246 = scalar_lea.vmem %s1, 4294966958
    %247 = vst.msk [vmem:[%s246] ss:$104 sm:$0x30] %vm241, %v240
    %v248 = vld.sshfl [vmem:[#allocation0] sm:$0xff pattern:$0x99999810]
    %s249 = scalar_lea.vmem [#allocation0], 12
    %v250 = vld [vmem:[%s249] sm:$0x30]
    %vm251 = vcmask 1045508
    %v252 = vsel %vm251, %v250, %v248
    %253 = vrot.lane.b32.xlu0 %v252, 68
    %v254 = vpop.permute.xlu0 %253
    %vm255 = vcmask 31744
    %s256 = scalar_lea.vmem %s1, 15
    %257 = vst.msk [vmem:[%s256] ss:$104 sm:$0x3] %vm255, %v254
    %s258 = scalar_lea.vmem %s1, 4294967135
    %259 = vst.msk [vmem:[%s258] ss:$104 sm:$0xc] %vm255, %v254
    %s260 = scalar_lea.vmem %s1, 4294966959
    %261 = vst.msk [vmem:[%s260] ss:$104 sm:$0x30] %vm255, %v254
    %v262 = vld.sshfl [vmem:[#allocation0] sm:$0xff pattern:$0x99999810]
    %s263 = scalar_lea.vmem [#allocation0], 12
    %v264 = vld [vmem:[%s263] sm:$0x30]
    %vm265 = vcmask 1045508
    %v266 = vsel %vm265, %v264, %v262
    %267 = vrot.lane.b32.xlu0 %v266, 64
    %v268 = vpop.permute.xlu0 %267
    %vm269 = vcmask 31744
    %s270 = scalar_lea.vmem %s1, 16
    %271 = vst.msk [vmem:[%s270] ss:$104 sm:$0x3] %vm269, %v268
    %s272 = scalar_lea.vmem %s1, 4294967136
    %273 = vst.msk [vmem:[%s272] ss:$104 sm:$0xc] %vm269, %v268
    %s274 = scalar_lea.vmem %s1, 4294966960
    %275 = vst.msk [vmem:[%s274] ss:$104 sm:$0x30] %vm269, %v268
    %v276 = vld.sshfl [vmem:[#allocation0] sm:$0xff pattern:$0x99999810]
    %s277 = scalar_lea.vmem [#allocation0], 12
    %v278 = vld [vmem:[%s277] sm:$0x30]
    %vm279 = vcmask 1045508
    %v280 = vsel %vm279, %v278, %v276
    %281 = vrot.lane.b32.xlu0 %v280, 60
    %v282 = vpop.permute.xlu0 %281
    %vm283 = vcmask 31744
    %s284 = scalar_lea.vmem %s1, 17
    %285 = vst.msk [vmem:[%s284] ss:$104 sm:$0x3] %vm283, %v282
    %s286 = scalar_lea.vmem %s1, 4294967137
    %287 = vst.msk [vmem:[%s286] ss:$104 sm:$0xc] %vm283, %v282
    %s288 = scalar_lea.vmem %s1, 4294966961
    %289 = vst.msk [vmem:[%s288] ss:$104 sm:$0x30] %vm283, %v282
    %v290 = vld.sshfl [vmem:[#allocation0] sm:$0xff pattern:$0x99999810]
    %s291 = scalar_lea.vmem [#allocation0], 12
    %v292 = vld [vmem:[%s291] sm:$0x30]
    %vm293 = vcmask 1045508
    %v294 = vsel %vm293, %v292, %v290
    %295 = vrot.lane.b32.xlu0 %v294, 56
    %v296 = vpop.permute.xlu0 %295
    %vm297 = vcmask 31744
    %s298 = scalar_lea.vmem %s1, 18
    %299 = vst.msk [vmem:[%s298] ss:$104 sm:$0x3] %vm297, %v296
    %s300 = scalar_lea.vmem %s1, 4294967138
    %301 = vst.msk [vmem:[%s300] ss:$104 sm:$0xc] %vm297, %v296
    %s302 = scalar_lea.vmem %s1, 4294966962
    %303 = vst.msk [vmem:[%s302] ss:$104 sm:$0x30] %vm297, %v296
    %v304 = vld.sshfl [vmem:[#allocation0] sm:$0xff pattern:$0x99999810]
    %s305 = scalar_lea.vmem [#allocation0], 12
    %v306 = vld [vmem:[%s305] sm:$0x30]
    %vm307 = vcmask 1045508
    %v308 = vsel %vm307, %v306, %v304
    %309 = vrot.lane.b32.xlu0 %v308, 52
    %v310 = vpop.permute.xlu0 %309
    %vm311 = vcmask 31744
    %s312 = scalar_lea.vmem %s1, 19
    %313 = vst.msk [vmem:[%s312] ss:$104 sm:$0x3] %vm311, %v310
    %s314 = scalar_lea.vmem %s1, 4294967139
    %315 = vst.msk [vmem:[%s314] ss:$104 sm:$0xc] %vm311, %v310
    %s316 = scalar_lea.vmem %s1, 4294966963
    %317 = vst.msk [vmem:[%s316] ss:$104 sm:$0x30] %vm311, %v310
    %v318 = vld.sshfl [vmem:[#allocation0] sm:$0xff pattern:$0x99999810]
    %s319 = scalar_lea.vmem [#allocation0], 12
    %v320 = vld [vmem:[%s319] sm:$0x30]
    %vm321 = vcmask 1045508
    %v322 = vsel %vm321, %v320, %v318
    %323 = vrot.lane.b32.xlu0 %v322, 48
    %v324 = vpop.permute.xlu0 %323
    %vm325 = vcmask 31744
    %s326 = scalar_lea.vmem %s1, 20
    %327 = vst.msk [vmem:[%s326] ss:$104 sm:$0x3] %vm325, %v324
    %s328 = scalar_lea.vmem %s1, 4294967140
    %329 = vst.msk [vmem:[%s328] ss:$104 sm:$0xc] %vm325, %v324
    %s330 = scalar_lea.vmem %s1, 4294966964
    %331 = vst.msk [vmem:[%s330] ss:$104 sm:$0x30] %vm325, %v324
    %v332 = vld.sshfl [vmem:[#allocation0] sm:$0xff pattern:$0x99999810]
    %s333 = scalar_lea.vmem [#allocation0], 12
    %v334 = vld [vmem:[%s333] sm:$0x30]
    %vm335 = vcmask 1045508
    %v336 = vsel %vm335, %v334, %v332
    %337 = vrot.lane.b32.xlu0 %v336, 44
    %v338 = vpop.permute.xlu0 %337
    %vm339 = vcmask 31744
    %s340 = scalar_lea.vmem %s1, 21
    %341 = vst.msk [vmem:[%s340] ss:$104 sm:$0x3] %vm339, %v338
    %s342 = scalar_lea.vmem %s1, 4294967141
    %343 = vst.msk [vmem:[%s342] ss:$104 sm:$0xc] %vm339, %v338
    %s344 = scalar_lea.vmem %s1, 4294966965
    %345 = vst.msk [vmem:[%s344] ss:$104 sm:$0x30] %vm339, %v338
    %v346 = vld.sshfl [vmem:[#allocation0] sm:$0xff pattern:$0x99999810]
    %s347 = scalar_lea.vmem [#allocation0], 12
    %v348 = vld [vmem:[%s347] sm:$0x30]
    %vm349 = vcmask 1045508
    %v350 = vsel %vm349, %v348, %v346
    %351 = vrot.lane.b32.xlu0 %v350, 40
    %v352 = vpop.permute.xlu0 %351
    %vm353 = vcmask 31744
    %s354 = scalar_lea.vmem %s1, 22
    %355 = vst.msk [vmem:[%s354] ss:$104 sm:$0x3] %vm353, %v352
    %s356 = scalar_lea.vmem %s1, 4294967142
    %357 = vst.msk [vmem:[%s356] ss:$104 sm:$0xc] %vm353, %v352
    %s358 = scalar_lea.vmem %s1, 4294966966
    %359 = vst.msk [vmem:[%s358] ss:$104 sm:$0x30] %vm353, %v352
    %v360 = vld.sshfl [vmem:[#allocation0] sm:$0xff pattern:$0x99999810]
    %s361 = scalar_lea.vmem [#allocation0], 12
    %v362 = vld [vmem:[%s361] sm:$0x30]
    %vm363 = vcmask 1045508
    %v364 = vsel %vm363, %v362, %v360
    %365 = vrot.lane.b32.xlu0 %v364, 36
    %v366 = vpop.permute.xlu0 %365
    %vm367 = vcmask 31744
    %s368 = scalar_lea.vmem %s1, 23
    %369 = vst.msk [vmem:[%s368] ss:$104 sm:$0x3] %vm367, %v366
    %s370 = scalar_lea.vmem %s1, 4294967143
    %371 = vst.msk [vmem:[%s370] ss:$104 sm:$0xc] %vm367, %v366
    %s372 = scalar_lea.vmem %s1, 4294966967
    %373 = vst.msk [vmem:[%s372] ss:$104 sm:$0x30] %vm367, %v366
    %v374 = vld.sshfl [vmem:[#allocation0] sm:$0xff pattern:$0x88888901]
    %s375 = scalar_lea.vmem [#allocation0], 21
    %s376 = smov 48
    %v377 = vld [vmem:[%s375] ss:$-1 sm:%s376]
    %vm378 = vcmask 1045508
    %v379 = vsel %vm378, %v377, %v374
    %380 = vrot.lane.b32.xlu0 %v379, 32
    %v381 = vpop.permute.xlu0 %380
    %vm382 = vcmask 31744
    %s383 = scalar_lea.vmem %s1, 128
    %384 = vst.msk [vmem:[%s383] ss:$-104 sm:$0x3] %vm382, %v381
    %s385 = scalar_lea.vmem %s1, 368
    %386 = vst.msk [vmem:[%s385] ss:$-104 sm:$0xc] %vm382, %v381
    %s387 = scalar_lea.vmem %s1, 608
    %388 = vst.msk [vmem:[%s387] ss:$-104 sm:$0x30] %vm382, %v381
    %v389 = vld.sshfl [vmem:[#allocation0] sm:$0xff pattern:$0x88888901]
    %s390 = scalar_lea.vmem [#allocation0], 21
    %s391 = smov 48
    %v392 = vld [vmem:[%s390] ss:$-1 sm:%s391]
    %vm393 = vcmask 1045508
    %v394 = vsel %vm393, %v392, %v389
    %395 = vrot.lane.b32.xlu0 %v394, 28
    %v396 = vpop.permute.xlu0 %395
    %vm397 = vcmask 31744
    %s398 = scalar_lea.vmem %s1, 129
    %399 = vst.msk [vmem:[%s398] ss:$-104 sm:$0x3] %vm397, %v396
    %s400 = scalar_lea.vmem %s1, 369
    %401 = vst.msk [vmem:[%s400] ss:$-104 sm:$0xc] %vm397, %v396
    %s402 = scalar_lea.vmem %s1, 609
    %403 = vst.msk [vmem:[%s402] ss:$-104 sm:$0x30] %vm397, %v396
    %v404 = vld.sshfl [vmem:[#allocation0] sm:$0xff pattern:$0x88888901]
    %s405 = scalar_lea.vmem [#allocation0], 21
    %s406 = smov 48
    %v407 = vld [vmem:[%s405] ss:$-1 sm:%s406]
    %vm408 = vcmask 1045508
    %v409 = vsel %vm408, %v407, %v404
    %410 = vrot.lane.b32.xlu0 %v409, 24
    %v411 = vpop.permute.xlu0 %410
    %vm412 = vcmask 31744
    %s413 = scalar_lea.vmem %s1, 130
    %414 = vst.msk [vmem:[%s413] ss:$-104 sm:$0x3] %vm412, %v411
    %s415 = scalar_lea.vmem %s1, 370
    %416 = vst.msk [vmem:[%s415] ss:$-104 sm:$0xc] %vm412, %v411
    %s417 = scalar_lea.vmem %s1, 610
    %418 = vst.msk [vmem:[%s417] ss:$-104 sm:$0x30] %vm412, %v411
    %v419 = vld.sshfl [vmem:[#allocation0] sm:$0xff pattern:$0x88888901]
    %s420 = scalar_lea.vmem [#allocation0], 21
    %s421 = smov 48
    %v422 = vld [vmem:[%s420] ss:$-1 sm:%s421]
    %vm423 = vcmask 1045508
    %v424 = vsel %vm423, %v422, %v419
    %425 = vrot.lane.b32.xlu0 %v424, 20
    %v426 = vpop.permute.xlu0 %425
    %vm427 = vcmask 31744
    %s428 = scalar_lea.vmem %s1, 131
    %429 = vst.msk [vmem:[%s428] ss:$-104 sm:$0x3] %vm427, %v426
    %s430 = scalar_lea.vmem %s1, 371
    %431 = vst.msk [vmem:[%s430] ss:$-104 sm:$0xc] %vm427, %v426
    %s432 = scalar_lea.vmem %s1, 611
    %433 = vst.msk [vmem:[%s432] ss:$-104 sm:$0x30] %vm427, %v426
    %v434 = vld.sshfl [vmem:[#allocation0] sm:$0xff pattern:$0x88888901]
    %s435 = scalar_lea.vmem [#allocation0], 21
    %s436 = smov 48
    %v437 = vld [vmem:[%s435] ss:$-1 sm:%s436]
    %vm438 = vcmask 1045508
    %v439 = vsel %vm438, %v437, %v434
    %440 = vrot.lane.b32.xlu0 %v439, 16
    %v441 = vpop.permute.xlu0 %440
    %vm442 = vcmask 31744
    %s443 = scalar_lea.vmem %s1, 132
    %444 = vst.msk [vmem:[%s443] ss:$-104 sm:$0x3] %vm442, %v441
    %s445 = scalar_lea.vmem %s1, 372
    %446 = vst.msk [vmem:[%s445] ss:$-104 sm:$0xc] %vm442, %v441
    %s447 = scalar_lea.vmem %s1, 612
    %448 = vst.msk [vmem:[%s447] ss:$-104 sm:$0x30] %vm442, %v441
    %v449 = vld.sshfl [vmem:[#allocation0] sm:$0xff pattern:$0x88888901]
    %s450 = scalar_lea.vmem [#allocation0], 21
    %s451 = smov 48
    %v452 = vld [vmem:[%s450] ss:$-1 sm:%s451]
    %vm453 = vcmask 1045508
    %v454 = vsel %vm453, %v452, %v449
    %455 = vrot.lane.b32.xlu0 %v454, 12
    %v456 = vpop.permute.xlu0 %455
    %vm457 = vcmask 31744
    %s458 = scalar_lea.vmem %s1, 133
    %459 = vst.msk [vmem:[%s458] ss:$-104 sm:$0x3] %vm457, %v456
    %s460 = scalar_lea.vmem %s1, 373
    %461 = vst.msk [vmem:[%s460] ss:$-104 sm:$0xc] %vm457, %v456
    %s462 = scalar_lea.vmem %s1, 613
    %463 = vst.msk [vmem:[%s462] ss:$-104 sm:$0x30] %vm457, %v456
    %v464 = vld.sshfl [vmem:[#allocation0] sm:$0xff pattern:$0x88888901]
    %s465 = scalar_lea.vmem [#allocation0], 21
    %s466 = smov 48
    %v467 = vld [vmem:[%s465] ss:$-1 sm:%s466]
    %vm468 = vcmask 1045508
    %v469 = vsel %vm468, %v467, %v464
    %470 = vrot.lane.b32.xlu0 %v469, 8
    %v471 = vpop.permute.xlu0 %470
    %vm472 = vcmask 31744
    %s473 = scalar_lea.vmem %s1, 134
    %474 = vst.msk [vmem:[%s473] ss:$-104 sm:$0x3] %vm472, %v471
    %s475 = scalar_lea.vmem %s1, 374
    %476 = vst.msk [vmem:[%s475] ss:$-104 sm:$0xc] %vm472, %v471
    %s477 = scalar_lea.vmem %s1, 614
    %478 = vst.msk [vmem:[%s477] ss:$-104 sm:$0x30] %vm472, %v471
    %v479 = vld.sshfl [vmem:[#allocation0] sm:$0xff pattern:$0x88888901]
    %s480 = scalar_lea.vmem [#allocation0], 21
    %s481 = smov 48
    %v482 = vld [vmem:[%s480] ss:$-1 sm:%s481]
    %vm483 = vcmask 1045508
    %v484 = vsel %vm483, %v482, %v479
    %485 = vrot.lane.b32.xlu0 %v484, 4
    %v486 = vpop.permute.xlu0 %485
    %vm487 = vcmask 31744
    %s488 = scalar_lea.vmem %s1, 135
    %489 = vst.msk [vmem:[%s488] ss:$-104 sm:$0x3] %vm487, %v486
    %s490 = scalar_lea.vmem %s1, 375
    %491 = vst.msk [vmem:[%s490] ss:$-104 sm:$0xc] %vm487, %v486
    %s492 = scalar_lea.vmem %s1, 615
    %493 = vst.msk [vmem:[%s492] ss:$-104 sm:$0x30] %vm487, %v486

// kernel: csi1dcnn_forward.2
$region0: #{csi1dcnn_forward.2}
  #allocation0 [shape = 'u32[]', space=smem, size = 0x4, offset = 0x4, fixed_abs, tag = 'smem constant byte address 0x4 - core index']
  #allocation1 [shape = 'u32[144,128]{1,0:T(1,128)}', space=vmem, size = 0x12000, scoped, tag = 'internal scratch']
  %s0 = inlined_call_operand.vmem [shape: f32[2,104,4], index: 0, kind: input, shape index: {}]
  %s1 = inlined_call_operand.hbm [shape: f32[4,32], index: 1, kind: input, shape index: {}]
  %s2 = inlined_call_operand.hbm [shape: f32[1,32], index: 2, kind: input, shape index: {}]
  %s3 = inlined_call_operand.vmem [shape: f32[32,64], index: 3, kind: input, shape index: {}]
  %s4 = inlined_call_operand.vmem [shape: f32[32,64], index: 4, kind: input, shape index: {}]
  %s5 = inlined_call_operand.hbm [shape: f32[1,64], index: 5, kind: input, shape index: {}]
  %s6 = inlined_call_operand.vmem [shape: f32[2,102,64], index: 6, kind: output, shape index: {}]
  %s7 = sld [smem:[#allocation0]]
  $region69: #{csi1dcnn_forward.2} parent=0
    _
  %s9 = ssub.s32 1, %s7
  %s10 = scalar_select 0, %s9, %s7
  $region1: #{csi1dcnn_forward.2} parent=0
    #allocation2 [shape = 'u8[2048]{0}', space=vmem, size = 0x800, scoped, tag = 'input window, operand 1, single buffered']
    #allocation3 [shape = 's32[2]{0}', space=sflag, size = 0x8, scoped, tag = 'scoped memory for csi1dcnn_forward.2']
    #allocation4 [shape = 'u8[512]{0}', space=vmem, size = 0x400, scoped, tag = 'input window, operand 2, single buffered']
    #allocation5 [shape = 's32[1]{0}', space=sflag, size = 0x4, scoped, tag = 'scoped memory for csi1dcnn_forward.2']
    #allocation6 [shape = 'u8[512]{0}', space=vmem, size = 0x400, scoped, tag = 'input window, operand 5, single buffered']
    %11 = vsyncpa [#allocation3], 0
    %12 = vsyncpa [#allocation5], 0
    loop: start=0, step=1, limit=4
    $region2: #{csi1dcnn_forward.2} parent=1 // loop_pre_header
      _
    $region3: #{csi1dcnn_forward.2} parent=1 // loop_header
      %s14 = sphi 0, %s18
      %p15 = scmp.ge.s32.totalorder %s14, 4
      %s24 = sphi 0, %s26
      %s27 = sphi 0, %s24
      %s28 = sphi 0, %s27
      %s44 = sphi 0, %s28
      %s48 = sphi 0, %s48
      %s50 = sphi 0, %s48
      %s51 = sphi 0, %s50
      %s65 = sphi 0, %s51
      %s69 = sphi 0, %s69
      %s71 = sphi 0, %s69
      %s72 = sphi 0, %s71
      %s86 = sphi 0, %s72
      %s90 = sphi 0, %s90
      %s92 = sphi 0, %s90
      %s93 = sphi 0, %s92
      %s107 = sphi 0, %s93
      %s111 = sphi 0, %s111
      %s113 = sphi 0, %s111
      %s114 = sphi 0, %s113
      %s128 = sphi 0, %s114
      %s132 = sphi 0, %s132
      %s134 = sphi 0, %s132
      %s135 = sphi 0, %s134
      %s149 = sphi 0, %s135
      %s155 = sphi 0, %s157
      %s158 = sphi 0, %s155
      %s159 = sphi 0, %s158
      %s175 = sphi 0, %s159
    $region4: #{csi1dcnn_forward.2} parent=1 // loop_header_branch
      %17 = sbr.rel (%p15) target = $region8
    $region5: #{csi1dcnn_forward.2} parent=1 // loop_body
      %s19 = ssub.s32 %s14, 1
      %s20 = ssub.s32 %s14, 2
      %s21 = sadd.s32 %s14, 1
      %s22 = ssub.s32 %s14, %s21
      %p23 = scmp.eq.s32.totalorder %s22, 0
      %s25 = sadd.s32 %s24, 1
      %s26 = scalar_select %p23, %s24, %s25
      %p29 = pneg %p23
      %p30 = scmp.eq.s32.totalorder %s14, 1
      %p31 = por %p29, %p30
      %p32 = scmp.ne.s32.totalorder %s24, %s27
      %p33 = scmp.eq.s32.totalorder %s14, 0
      %p34 = por %p32, %p33
      %p35 = scmp.ne.s32.totalorder %s24, %s27
      %p36 = scmp.eq.s32.totalorder %s19, 1
      %p37 = por %p35, %p36
      %p38 = scmp.ne.s32.totalorder %s27, %s28
      %p39 = scmp.eq.s32.totalorder %s19, 0
      %p40 = por %p38, %p39
      %p41 = scmp.ne.s32.totalorder %s27, %s28
      %p42 = scmp.eq.s32.totalorder %s20, 1
      %p43 = por %p41, %p42
      %p45 = scmp.ne.s32.totalorder %s28, %s44
      %p46 = scmp.eq.s32.totalorder %s20, 0
      %p47 = por %p45, %p46
      %s49 = sadd.s32 %s48, 1
      %p52 = scmp.eq.s32.totalorder %s14, 1
      %p53 = scmp.ne.s32.totalorder %s48, %s50
      %p54 = scmp.eq.s32.totalorder %s14, 0
      %p55 = por %p53, %p54
      %p56 = scmp.ne.s32.totalorder %s48, %s50
      %p57 = scmp.eq.s32.totalorder %s19, 1
      %p58 = por %p56, %p57
      %p59 = scmp.ne.s32.totalorder %s50, %s51
      %p60 = scmp.eq.s32.totalorder %s19, 0
      %p61 = por %p59, %p60
      %p62 = scmp.ne.s32.totalorder %s50, %s51
      %p63 = scmp.eq.s32.totalorder %s20, 1
      %p64 = por %p62, %p63
      %p66 = scmp.ne.s32.totalorder %s51, %s65
      %p67 = scmp.eq.s32.totalorder %s20, 0
      %p68 = por %p66, %p67
      %s70 = sadd.s32 %s69, 1
      %p73 = scmp.eq.s32.totalorder %s14, 1
      %p74 = scmp.ne.s32.totalorder %s69, %s71
      %p75 = scmp.eq.s32.totalorder %s14, 0
      %p76 = por %p74, %p75
      %p77 = scmp.ne.s32.totalorder %s69, %s71
      %p78 = scmp.eq.s32.totalorder %s19, 1
      %p79 = por %p77, %p78
      %p80 = scmp.ne.s32.totalorder %s71, %s72
      %p81 = scmp.eq.s32.totalorder %s19, 0
      %p82 = por %p80, %p81
      %p83 = scmp.ne.s32.totalorder %s71, %s72
      %p84 = scmp.eq.s32.totalorder %s20, 1
      %p85 = por %p83, %p84
      %p87 = scmp.ne.s32.totalorder %s72, %s86
      %p88 = scmp.eq.s32.totalorder %s20, 0
      %p89 = por %p87, %p88
      %s91 = sadd.s32 %s90, 1
      %p94 = scmp.eq.s32.totalorder %s14, 1
      %p95 = scmp.ne.s32.totalorder %s90, %s92
      %p96 = scmp.eq.s32.totalorder %s14, 0
      %p97 = por %p95, %p96
      %p98 = scmp.ne.s32.totalorder %s90, %s92
      %p99 = scmp.eq.s32.totalorder %s19, 1
      %p100 = por %p98, %p99
      %p101 = scmp.ne.s32.totalorder %s92, %s93
      %p102 = scmp.eq.s32.totalorder %s19, 0
      %p103 = por %p101, %p102
      %p104 = scmp.ne.s32.totalorder %s92, %s93
      %p105 = scmp.eq.s32.totalorder %s20, 1
      %p106 = por %p104, %p105
      %p108 = scmp.ne.s32.totalorder %s93, %s107
      %p109 = scmp.eq.s32.totalorder %s20, 0
      %p110 = por %p108, %p109
      %s112 = sadd.s32 %s111, 1
      %p115 = scmp.eq.s32.totalorder %s14, 1
      %p116 = scmp.ne.s32.totalorder %s111, %s113
      %p117 = scmp.eq.s32.totalorder %s14, 0
      %p118 = por %p116, %p117
      %p119 = scmp.ne.s32.totalorder %s111, %s113
      %p120 = scmp.eq.s32.totalorder %s19, 1
      %p121 = por %p119, %p120
      %p122 = scmp.ne.s32.totalorder %s113, %s114
      %p123 = scmp.eq.s32.totalorder %s19, 0
      %p124 = por %p122, %p123
      %p125 = scmp.ne.s32.totalorder %s113, %s114
      %p126 = scmp.eq.s32.totalorder %s20, 1
      %p127 = por %p125, %p126
      %p129 = scmp.ne.s32.totalorder %s114, %s128
      %p130 = scmp.eq.s32.totalorder %s20, 0
      %p131 = por %p129, %p130
      %s133 = sadd.s32 %s132, 1
      %p136 = scmp.eq.s32.totalorder %s14, 1
      %p137 = scmp.ne.s32.totalorder %s132, %s134
      %p138 = scmp.eq.s32.totalorder %s14, 0
      %p139 = por %p137, %p138
      %p140 = scmp.ne.s32.totalorder %s132, %s134
      %p141 = scmp.eq.s32.totalorder %s19, 1
      %p142 = por %p140, %p141
      %p143 = scmp.ne.s32.totalorder %s134, %s135
      %p144 = scmp.eq.s32.totalorder %s19, 0
      %p145 = por %p143, %p144
      %p146 = scmp.ne.s32.totalorder %s134, %s135
      %p147 = scmp.eq.s32.totalorder %s20, 1
      %p148 = por %p146, %p147
      %p150 = scmp.ne.s32.totalorder %s135, %s149
      %p151 = scmp.eq.s32.totalorder %s20, 0
      %p152 = por %p150, %p151
      %s153 = ssub.s32 %s14, %s21
      %p154 = scmp.eq.s32.totalorder %s153, 0
      %s156 = sadd.s32 %s155, 1
      %s157 = scalar_select %p154, %s155, %s156
      %p160 = pneg %p154
      %p161 = scmp.eq.s32.totalorder %s14, 1
      %p162 = por %p160, %p161
      %p163 = scmp.ne.s32.totalorder %s155, %s158
      %p164 = scmp.eq.s32.totalorder %s14, 0
      %p165 = por %p163, %p164
      %p166 = scmp.ne.s32.totalorder %s155, %s158
      %p167 = scmp.eq.s32.totalorder %s19, 1
      %p168 = por %p166, %p167
      %p169 = scmp.ne.s32.totalorder %s158, %s159
      %p170 = scmp.eq.s32.totalorder %s19, 0
      %p171 = por %p169, %p170
      %p172 = scmp.ne.s32.totalorder %s158, %s159
      %p173 = scmp.eq.s32.totalorder %s20, 1
      %p174 = por %p172, %p173
      %p176 = scmp.ne.s32.totalorder %s159, %s175
      %p177 = scmp.eq.s32.totalorder %s20, 0
      %p178 = por %p176, %p177
      %p179 = scmp.le.s32.totalorder 1, %s14
      %p180 = scmp.lt.s32.totalorder %s14, 3
      %p181 = pnand %p179, %p180
      %p182 = pneg %p181
      // Predicated region
      $region9: #{csi1dcnn_forward.2} parent=5 // pred_check
        _
      $region10: #{csi1dcnn_forward.2} parent=5 // pred_check_branch
        %184 = sbr.rel (%p181) target = $region12
      $region11: #{csi1dcnn_forward.2} parent=5 // pred_region
        %s185 = ssub.s32 %s14, 1
        // Predicated region
        $region13: #{csi1dcnn_forward.2} parent=11 // pred_check
          %p186 = pneg %p61
        $region14: #{csi1dcnn_forward.2} parent=11 // pred_check_branch
          %188 = sbr.rel (%p186) target = $region16
        $region15: #{csi1dcnn_forward.2} parent=11 // pred_region
          %s190 = ssub.s32 64, 64
          %191 = vsyncadd [#allocation3], %s190
          %s193 = sshll.u32 [#allocation2], 4
          %s194 = int_to_ptr.vmem [resolvable:$true] %s193
          %196 = dma.hbm_to_vmem [thread:$0]  %s1, 64, %s194, [#allocation3]
        $region16: #{csi1dcnn_forward.2} parent=11 // pred_fallthru
          _
        // Predicated region
        $region17: #{csi1dcnn_forward.2} parent=11 // pred_check
          %p197 = pneg %p82
        $region18: #{csi1dcnn_forward.2} parent=11 // pred_check_branch
          %199 = sbr.rel (%p197) target = $region20
        $region19: #{csi1dcnn_forward.2} parent=11 // pred_region
          %s201 = ssub.s32 16, 16
          %202 = vsyncadd [#allocation5], %s201
          %s204 = sshll.u32 [#allocation4], 4
          %s205 = int_to_ptr.vmem [resolvable:$true] %s204
          %207 = dma.hbm_to_vmem [thread:$0]  %s2, 16, %s205, [#allocation5]
        $region20: #{csi1dcnn_forward.2} parent=11 // pred_fallthru
          _
        // Predicated region
        $region21: #{csi1dcnn_forward.2} parent=11 // pred_check
          %p208 = pneg %p103
        $region22: #{csi1dcnn_forward.2} parent=11 // pred_check_branch
          %210 = sbr.rel (%p208) target = $region24
        $region23: #{csi1dcnn_forward.2} parent=11 // pred_region
          _
        $region24: #{csi1dcnn_forward.2} parent=11 // pred_fallthru
          _
        // Predicated region
        $region25: #{csi1dcnn_forward.2} parent=11 // pred_check
          %p211 = pneg %p124
        $region26: #{csi1dcnn_forward.2} parent=11 // pred_check_branch
          %213 = sbr.rel (%p211) target = $region28
        $region27: #{csi1dcnn_forward.2} parent=11 // pred_region
          _
        $region28: #{csi1dcnn_forward.2} parent=11 // pred_fallthru
          _
        // Predicated region
        $region29: #{csi1dcnn_forward.2} parent=11 // pred_check
          %p214 = pneg %p145
        $region30: #{csi1dcnn_forward.2} parent=11 // pred_check_branch
          %216 = sbr.rel (%p214) target = $region32
        $region31: #{csi1dcnn_forward.2} parent=11 // pred_region
          %s218 = ssub.s32 16, 16
          %219 = vsyncadd [#allocation5], %s218
          %s221 = sshll.u32 [#allocation6], 4
          %s222 = int_to_ptr.vmem [resolvable:$true] %s221
          %224 = dma.hbm_to_vmem [thread:$0]  %s5, 16, %s222, [#allocation5]
        $region32: #{csi1dcnn_forward.2} parent=11 // pred_fallthru
          _
      $region12: #{csi1dcnn_forward.2} parent=5 // pred_fallthru
        _
      %p225 = scmp.lt.s32.totalorder %s14, 2
      // Predicated region
      $region33: #{csi1dcnn_forward.2} parent=5 // pred_check
        %p226 = pneg %p225
      $region34: #{csi1dcnn_forward.2} parent=5 // pred_check_branch
        %228 = sbr.rel (%p226) target = $region36
      $region35: #{csi1dcnn_forward.2} parent=5 // pred_region
        // Predicated region
        $region37: #{csi1dcnn_forward.2} parent=35 // pred_check
          %p229 = pneg %p34
        $region38: #{csi1dcnn_forward.2} parent=35 // pred_check_branch
          %231 = sbr.rel (%p229) target = $region40
        $region39: #{csi1dcnn_forward.2} parent=35 // pred_region
          %p232 = scmp.lt.s32.totalorder %s14, 1
          %s233 = scalar_select %p232, %s14, 1
          %s234 = smul.addr %s233, 13
          %s235 = smul.addr %s234, 8
          %s236 = scalar_lea.vmem %s0, %s235
        $region40: #{csi1dcnn_forward.2} parent=35 // pred_fallthru
          _
      $region36: #{csi1dcnn_forward.2} parent=5 // pred_fallthru
        _
      %p237 = scmp.le.s32.totalorder 1, %s14
      %p238 = scmp.lt.s32.totalorder %s14, 3
      %p239 = pnand %p237, %p238
      %p240 = pneg %p239
      // Predicated region
      $region41: #{csi1dcnn_forward.2} parent=5 // pred_check
        _
      $region42: #{csi1dcnn_forward.2} parent=5 // pred_check_branch
        %242 = sbr.rel (%p239) target = $region44
      $region43: #{csi1dcnn_forward.2} parent=5 // pred_region
        %s243 = ssub.s32 %s14, 1
        // Predicated region
        $region45: #{csi1dcnn_forward.2} parent=43 // pred_check
          %p244 = pneg %p61
        $region46: #{csi1dcnn_forward.2} parent=43 // pred_check_branch
          %246 = sbr.rel (%p244) target = $region48
        $region47: #{csi1dcnn_forward.2} parent=43 // pred_region
          %247 = dma.done [#allocation3], 64
        $region48: #{csi1dcnn_forward.2} parent=43 // pred_fallthru
          _
        // Predicated region
        $region49: #{csi1dcnn_forward.2} parent=43 // pred_check
          %p248 = pneg %p82
        $region50: #{csi1dcnn_forward.2} parent=43 // pred_check_branch
          %250 = sbr.rel (%p248) target = $region52
        $region51: #{csi1dcnn_forward.2} parent=43 // pred_region
          %251 = dma.done [#allocation5], 16
        $region52: #{csi1dcnn_forward.2} parent=43 // pred_fallthru
          _
        // Predicated region
        $region53: #{csi1dcnn_forward.2} parent=43 // pred_check
          %p252 = pneg %p145
        $region54: #{csi1dcnn_forward.2} parent=43 // pred_check_branch
          %254 = sbr.rel (%p252) target = $region56
        $region55: #{csi1dcnn_forward.2} parent=43 // pred_region
          %255 = dma.done [#allocation5], 16
        $region56: #{csi1dcnn_forward.2} parent=43 // pred_fallthru
          _
        %p256 = scmp.lt.s32.totalorder %s19, 1
        %s257 = scalar_select %p256, %s19, 1
        %s258 = smul.addr %s257, 13
        %s259 = smul.addr %s258, 8
        %s260 = scalar_lea.vmem %s0, %s259
        %p261 = pneg %p40
        %p262 = pneg %p37
        %p263 = pneg %p61
        %p264 = pneg %p58
        %p265 = pneg %p82
        %p266 = pneg %p79
        %p267 = pneg %p103
        %p268 = pneg %p100
        %p269 = pneg %p124
        %p270 = pneg %p121
        %p271 = pneg %p145
        %p272 = pneg %p142
        %p273 = pneg %p171
        %p274 = pneg %p168
        %p275 = scmp.lt.s32.totalorder %s19, 1
        %s276 = scalar_select %p275, %s19, 1
        %s277 = smul.addr %s276, 13
        %s278 = smul.addr %s277, 8
        %s279 = scalar_lea.vmem %s6, %s278
        %p280 = scmp.lt.s32.totalorder %s19, 1
        %s281 = scalar_select %p280, %s19, 1
        %s282 = smul.addr %s281, 13
        %s283 = smul.addr %s282, 8
        %s284 = scalar_lea.vmem %s0, %s283
        %p285 = scmp.lt.s32.totalorder %s19, 1
        %s286 = scalar_select %p285, %s19, 1
        %s287 = smul.addr %s286, 13
        %s288 = smul.addr %s287, 8
        %s289 = scalar_lea.vmem %s6, %s288
        %v290 = vld [vmem:[#allocation2] sm:$0x1]
        %v291 = vld [vmem:[#allocation2 + $0x1] sm:$0x1]
        %v292 = vld [vmem:[#allocation2 + $0x2] sm:$0x1]
        %v293 = vld [vmem:[#allocation2 + $0x3] sm:$0x1]
        %v294 = vld [vmem:[#allocation4] sm:$0x1]
        %v295 = vld [vmem:[%s284] sm:$0xff]
        %v296 = vld [vmem:[%s284 + $0x8] sm:$0xff]
        %v297 = vld [vmem:[%s284 + $0x10] sm:$0xff]
        %v298 = vld [vmem:[%s284 + $0x18] sm:$0xff]
        %v299 = vld [vmem:[%s284 + $0x20] sm:$0xff]
        %v300 = vld [vmem:[%s284 + $0x28] sm:$0xff]
        %v301 = vld [vmem:[%s284 + $0x30] sm:$0xff]
        %v302 = vld [vmem:[%s284 + $0x38] sm:$0xff]
        %v303 = vld [vmem:[%s284 + $0x40] sm:$0xff]
        %v304 = vld [vmem:[%s284 + $0x48] sm:$0xff]
        %v305 = vld [vmem:[%s284 + $0x50] sm:$0xff]
        %v306 = vld [vmem:[%s284 + $0x58] sm:$0xff]
        %v307 = vld [vmem:[%s284 + $0x60] sm:$0x3f]
        %v308 = vld [vmem:[%s284 + $0x1] sm:$0xff]
        %v309 = vld [vmem:[%s284 + $0x9] sm:$0xff]
        %v310 = vld [vmem:[%s284 + $0x11] sm:$0xff]
        %v311 = vld [vmem:[%s284 + $0x19] sm:$0xff]
        %v312 = vld [vmem:[%s284 + $0x21] sm:$0xff]
        %v313 = vld [vmem:[%s284 + $0x29] sm:$0xff]
        %v314 = vld [vmem:[%s284 + $0x31] sm:$0xff]
        %v315 = vld [vmem:[%s284 + $0x39] sm:$0xff]
        %v316 = vld [vmem:[%s284 + $0x41] sm:$0xff]
        %v317 = vld [vmem:[%s284 + $0x49] sm:$0xff]
        %v318 = vld [vmem:[%s284 + $0x51] sm:$0xff]
        %v319 = vld [vmem:[%s284 + $0x59] sm:$0xff]
        %v320 = vld [vmem:[%s284 + $0x61] sm:$0x3f]
        %322 = vset.pattern.permute.xlu0 0
        %323 = vperm.xlu0 %322, %v295
        %v324 = vpop.permute.xlu0 %323
        %327 = vset.pattern.permute.xlu0 0
        %328 = vperm.xlu0 %327, %v296
        %v329 = vpop.permute.xlu0 %328
        %332 = vset.pattern.permute.xlu0 0
        %333 = vperm.xlu0 %332, %v297
        %v334 = vpop.permute.xlu0 %333
        %337 = vset.pattern.permute.xlu0 0
        %338 = vperm.xlu0 %337, %v298
        %v339 = vpop.permute.xlu0 %338
        %342 = vset.pattern.permute.xlu0 0
        %343 = vperm.xlu0 %342, %v299
        %v344 = vpop.permute.xlu0 %343
        %347 = vset.pattern.permute.xlu0 0
        %348 = vperm.xlu0 %347, %v300
        %v349 = vpop.permute.xlu0 %348
        %352 = vset.pattern.permute.xlu0 0
        %353 = vperm.xlu0 %352, %v301
        %v354 = vpop.permute.xlu0 %353
        %357 = vset.pattern.permute.xlu0 0
        %358 = vperm.xlu0 %357, %v302
        %v359 = vpop.permute.xlu0 %358
        %362 = vset.pattern.permute.xlu0 0
        %363 = vperm.xlu0 %362, %v303
        %v364 = vpop.permute.xlu0 %363
        %367 = vset.pattern.permute.xlu0 0
        %368 = vperm.xlu0 %367, %v304
        %v369 = vpop.permute.xlu0 %368
        %372 = vset.pattern.permute.xlu0 0
        %373 = vperm.xlu0 %372, %v305
        %v374 = vpop.permute.xlu0 %373
        %377 = vset.pattern.permute.xlu0 0
        %378 = vperm.xlu0 %377, %v306
        %v379 = vpop.permute.xlu0 %378
        %382 = vset.pattern.permute.xlu0 0
        %383 = vperm.xlu0 %382, %v307
        %v384 = vpop.permute.xlu0 %383
        %v386 = vlaneseq
        %v387 = vshrl.u32 %v386, 7
        %v388 = vsub.s32 0, %v387
        %v389 = vrot.slane %v290, %v388
        %v390 = vmul.f32 %v324, %v389
        %v391 = vmul.f32 %v329, %v389
        %v392 = vmul.f32 %v334, %v389
        %v393 = vmul.f32 %v339, %v389
        %v394 = vmul.f32 %v344, %v389
        %v395 = vmul.f32 %v349, %v389
        %v396 = vmul.f32 %v354, %v389
        %v397 = vmul.f32 %v359, %v389
        %v398 = vmul.f32 %v364, %v389
        %v399 = vmul.f32 %v369, %v389
        %v400 = vmul.f32 %v374, %v389
        %v401 = vmul.f32 %v379, %v389
        %v402 = vmul.f32 %v384, %v389
        %403 = vset.pattern.permute.xlu0 1
        %404 = vperm.xlu0 %403, %v295
        %v405 = vpop.permute.xlu0 %404
        %407 = vset.pattern.permute.xlu0 1
        %408 = vperm.xlu0 %407, %v296
        %v409 = vpop.permute.xlu0 %408
        %411 = vset.pattern.permute.xlu0 1
        %412 = vperm.xlu0 %411, %v297
        %v413 = vpop.permute.xlu0 %412
        %415 = vset.pattern.permute.xlu0 1
        %416 = vperm.xlu0 %415, %v298
        %v417 = vpop.permute.xlu0 %416
        %419 = vset.pattern.permute.xlu0 1
        %420 = vperm.xlu0 %419, %v299
        %v421 = vpop.permute.xlu0 %420
        %423 = vset.pattern.permute.xlu0 1
        %424 = vperm.xlu0 %423, %v300
        %v425 = vpop.permute.xlu0 %424
        %427 = vset.pattern.permute.xlu0 1
        %428 = vperm.xlu0 %427, %v301
        %v429 = vpop.permute.xlu0 %428
        %431 = vset.pattern.permute.xlu0 1
        %432 = vperm.xlu0 %431, %v302
        %v433 = vpop.permute.xlu0 %432
        %435 = vset.pattern.permute.xlu0 1
        %436 = vperm.xlu0 %435, %v303
        %v437 = vpop.permute.xlu0 %436
        %439 = vset.pattern.permute.xlu0 1
        %440 = vperm.xlu0 %439, %v304
        %v441 = vpop.permute.xlu0 %440
        %443 = vset.pattern.permute.xlu0 1
        %444 = vperm.xlu0 %443, %v305
        %v445 = vpop.permute.xlu0 %444
        %447 = vset.pattern.permute.xlu0 1
        %448 = vperm.xlu0 %447, %v306
        %v449 = vpop.permute.xlu0 %448
        %451 = vset.pattern.permute.xlu0 1
        %452 = vperm.xlu0 %451, %v307
        %v453 = vpop.permute.xlu0 %452
        %v455 = vlaneseq
        %v456 = vshrl.u32 %v455, 7
        %v457 = vsub.s32 0, %v456
        %v458 = vrot.slane %v291, %v457
        %v459 = vmul.f32 %v405, %v458
        %v460 = vmul.f32 %v409, %v458
        %v461 = vmul.f32 %v413, %v458
        %v462 = vmul.f32 %v417, %v458
        %v463 = vmul.f32 %v421, %v458
        %v464 = vmul.f32 %v425, %v458
        %v465 = vmul.f32 %v429, %v458
        %v466 = vmul.f32 %v433, %v458
        %v467 = vmul.f32 %v437, %v458
        %v468 = vmul.f32 %v441, %v458
        %v469 = vmul.f32 %v445, %v458
        %v470 = vmul.f32 %v449, %v458
        %v471 = vmul.f32 %v453, %v458
        %v472 = vadd.f32 %v390, %v459
        %v473 = vadd.f32 %v391, %v460
        %v474 = vadd.f32 %v392, %v461
        %v475 = vadd.f32 %v393, %v462
        %v476 = vadd.f32 %v394, %v463
        %v477 = vadd.f32 %v395, %v464
        %v478 = vadd.f32 %v396, %v465
        %v479 = vadd.f32 %v397, %v466
        %v480 = vadd.f32 %v398, %v467
        %v481 = vadd.f32 %v399, %v468
        %v482 = vadd.f32 %v400, %v469
        %v483 = vadd.f32 %v401, %v470
        %v484 = vadd.f32 %v402, %v471
        %485 = vset.pattern.permute.xlu0 2
        %486 = vperm.xlu0 %485, %v295
        %v487 = vpop.permute.xlu0 %486
        %489 = vset.pattern.permute.xlu0 2
        %490 = vperm.xlu0 %489, %v296
        %v491 = vpop.permute.xlu0 %490
        %493 = vset.pattern.permute.xlu0 2
        %494 = vperm.xlu0 %493, %v297
        %v495 = vpop.permute.xlu0 %494
        %497 = vset.pattern.permute.xlu0 2
        %498 = vperm.xlu0 %497, %v298
        %v499 = vpop.permute.xlu0 %498
        %501 = vset.pattern.permute.xlu0 2
        %502 = vperm.xlu0 %501, %v299
        %v503 = vpop.permute.xlu0 %502
        %505 = vset.pattern.permute.xlu0 2
        %506 = vperm.xlu0 %505, %v300
        %v507 = vpop.permute.xlu0 %506
        %509 = vset.pattern.permute.xlu0 2
        %510 = vperm.xlu0 %509, %v301
        %v511 = vpop.permute.xlu0 %510
        %513 = vset.pattern.permute.xlu0 2
        %514 = vperm.xlu0 %513, %v302
        %v515 = vpop.permute.xlu0 %514
        %517 = vset.pattern.permute.xlu0 2
        %518 = vperm.xlu0 %517, %v303
        %v519 = vpop.permute.xlu0 %518
        %521 = vset.pattern.permute.xlu0 2
        %522 = vperm.xlu0 %521, %v304
        %v523 = vpop.permute.xlu0 %522
        %525 = vset.pattern.permute.xlu0 2
        %526 = vperm.xlu0 %525, %v305
        %v527 = vpop.permute.xlu0 %526
        %529 = vset.pattern.permute.xlu0 2
        %530 = vperm.xlu0 %529, %v306
        %v531 = vpop.permute.xlu0 %530
        %533 = vset.pattern.permute.xlu0 2
        %534 = vperm.xlu0 %533, %v307
        %v535 = vpop.permute.xlu0 %534
        %v537 = vlaneseq
        %v538 = vshrl.u32 %v537, 7
        %v539 = vsub.s32 0, %v538
        %v540 = vrot.slane %v292, %v539
        %v541 = vmul.f32 %v487, %v540
        %v542 = vmul.f32 %v491, %v540
        %v543 = vmul.f32 %v495, %v540
        %v544 = vmul.f32 %v499, %v540
        %v545 = vmul.f32 %v503, %v540
        %v546 = vmul.f32 %v507, %v540
        %v547 = vmul.f32 %v511, %v540
        %v548 = vmul.f32 %v515, %v540
        %v549 = vmul.f32 %v519, %v540
        %v550 = vmul.f32 %v523, %v540
        %v551 = vmul.f32 %v527, %v540
        %v552 = vmul.f32 %v531, %v540
        %v553 = vmul.f32 %v535, %v540
        %v554 = vadd.f32 %v472, %v541
        %v555 = vadd.f32 %v473, %v542
        %v556 = vadd.f32 %v474, %v543
        %v557 = vadd.f32 %v475, %v544
        %v558 = vadd.f32 %v476, %v545
        %v559 = vadd.f32 %v477, %v546
        %v560 = vadd.f32 %v478, %v547
        %v561 = vadd.f32 %v479, %v548
        %v562 = vadd.f32 %v480, %v549
        %v563 = vadd.f32 %v481, %v550
        %v564 = vadd.f32 %v482, %v551
        %v565 = vadd.f32 %v483, %v552
        %v566 = vadd.f32 %v484, %v553
        %567 = vset.pattern.permute.xlu0 3
        %568 = vperm.xlu0 %567, %v295
        %v569 = vpop.permute.xlu0 %568
        %571 = vset.pattern.permute.xlu0 3
        %572 = vperm.xlu0 %571, %v296
        %v573 = vpop.permute.xlu0 %572
        %575 = vset.pattern.permute.xlu0 3
        %576 = vperm.xlu0 %575, %v297
        %v577 = vpop.permute.xlu0 %576
        %579 = vset.pattern.permute.xlu0 3
        %580 = vperm.xlu0 %579, %v298
        %v581 = vpop.permute.xlu0 %580
        %583 = vset.pattern.permute.xlu0 3
        %584 = vperm.xlu0 %583, %v299
        %v585 = vpop.permute.xlu0 %584
        %587 = vset.pattern.permute.xlu0 3
        %588 = vperm.xlu0 %587, %v300
        %v589 = vpop.permute.xlu0 %588
        %591 = vset.pattern.permute.xlu0 3
        %592 = vperm.xlu0 %591, %v301
        %v593 = vpop.permute.xlu0 %592
        %595 = vset.pattern.permute.xlu0 3
        %596 = vperm.xlu0 %595, %v302
        %v597 = vpop.permute.xlu0 %596
        %599 = vset.pattern.permute.xlu0 3
        %600 = vperm.xlu0 %599, %v303
        %v601 = vpop.permute.xlu0 %600
        %603 = vset.pattern.permute.xlu0 3
        %604 = vperm.xlu0 %603, %v304
        %v605 = vpop.permute.xlu0 %604
        %607 = vset.pattern.permute.xlu0 3
        %608 = vperm.xlu0 %607, %v305
        %v609 = vpop.permute.xlu0 %608
        %611 = vset.pattern.permute.xlu0 3
        %612 = vperm.xlu0 %611, %v306
        %v613 = vpop.permute.xlu0 %612
        %615 = vset.pattern.permute.xlu0 3
        %616 = vperm.xlu0 %615, %v307
        %v617 = vpop.permute.xlu0 %616
        %v619 = vlaneseq
        %v620 = vshrl.u32 %v619, 7
        %v621 = vsub.s32 0, %v620
        %v622 = vrot.slane %v293, %v621
        %v623 = vmul.f32 %v569, %v622
        %v624 = vmul.f32 %v573, %v622
        %v625 = vmul.f32 %v577, %v622
        %v626 = vmul.f32 %v581, %v622
        %v627 = vmul.f32 %v585, %v622
        %v628 = vmul.f32 %v589, %v622
        %v629 = vmul.f32 %v593, %v622
        %v630 = vmul.f32 %v597, %v622
        %v631 = vmul.f32 %v601, %v622
        %v632 = vmul.f32 %v605, %v622
        %v633 = vmul.f32 %v609, %v622
        %v634 = vmul.f32 %v613, %v622
        %v635 = vmul.f32 %v617, %v622
        %v636 = vadd.f32 %v554, %v623
        %v637 = vadd.f32 %v555, %v624
        %v638 = vadd.f32 %v556, %v625
        %v639 = vadd.f32 %v557, %v626
        %v640 = vadd.f32 %v558, %v627
        %v641 = vadd.f32 %v559, %v628
        %v642 = vadd.f32 %v560, %v629
        %v643 = vadd.f32 %v561, %v630
        %v644 = vadd.f32 %v562, %v631
        %v645 = vadd.f32 %v563, %v632
        %v646 = vadd.f32 %v564, %v633
        %v647 = vadd.f32 %v565, %v634
        %v648 = vadd.f32 %v566, %v635
        %v649 = vmul.f32 %v405, %v389
        %v650 = vmul.f32 %v409, %v389
        %v651 = vmul.f32 %v413, %v389
        %v652 = vmul.f32 %v417, %v389
        %v653 = vmul.f32 %v421, %v389
        %v654 = vmul.f32 %v425, %v389
        %v655 = vmul.f32 %v429, %v389
        %v656 = vmul.f32 %v433, %v389
        %v657 = vmul.f32 %v437, %v389
        %v658 = vmul.f32 %v441, %v389
        %v659 = vmul.f32 %v445, %v389
        %v660 = vmul.f32 %v449, %v389
        %v661 = vmul.f32 %v453, %v389
        %v662 = vmul.f32 %v487, %v458
        %v663 = vmul.f32 %v491, %v458
        %v664 = vmul.f32 %v495, %v458
        %v665 = vmul.f32 %v499, %v458
        %v666 = vmul.f32 %v503, %v458
        %v667 = vmul.f32 %v507, %v458
        %v668 = vmul.f32 %v511, %v458
        %v669 = vmul.f32 %v515, %v458
        %v670 = vmul.f32 %v519, %v458
        %v671 = vmul.f32 %v523, %v458
        %v672 = vmul.f32 %v527, %v458
        %v673 = vmul.f32 %v531, %v458
        %v674 = vmul.f32 %v535, %v458
        %v675 = vadd.f32 %v649, %v662
        %v676 = vadd.f32 %v650, %v663
        %v677 = vadd.f32 %v651, %v664
        %v678 = vadd.f32 %v652, %v665
        %v679 = vadd.f32 %v653, %v666
        %v680 = vadd.f32 %v654, %v667
        %v681 = vadd.f32 %v655, %v668
        %v682 = vadd.f32 %v656, %v669
        %v683 = vadd.f32 %v657, %v670
        %v684 = vadd.f32 %v658, %v671
        %v685 = vadd.f32 %v659, %v672
        %v686 = vadd.f32 %v660, %v673
        %v687 = vadd.f32 %v661, %v674
        %v688 = vmul.f32 %v569, %v540
        %v689 = vmul.f32 %v573, %v540
        %v690 = vmul.f32 %v577, %v540
        %v691 = vmul.f32 %v581, %v540
        %v692 = vmul.f32 %v585, %v540
        %v693 = vmul.f32 %v589, %v540
        %v694 = vmul.f32 %v593, %v540
        %v695 = vmul.f32 %v597, %v540
        %v696 = vmul.f32 %v601, %v540
        %v697 = vmul.f32 %v605, %v540
        %v698 = vmul.f32 %v609, %v540
        %v699 = vmul.f32 %v613, %v540
        %v700 = vmul.f32 %v617, %v540
        %v701 = vadd.f32 %v675, %v688
        %v702 = vadd.f32 %v676, %v689
        %v703 = vadd.f32 %v677, %v690
        %v704 = vadd.f32 %v678, %v691
        %v705 = vadd.f32 %v679, %v692
        %v706 = vadd.f32 %v680, %v693
        %v707 = vadd.f32 %v681, %v694
        %v708 = vadd.f32 %v682, %v695
        %v709 = vadd.f32 %v683, %v696
        %v710 = vadd.f32 %v684, %v697
        %v711 = vadd.f32 %v685, %v698
        %v712 = vadd.f32 %v686, %v699
        %v713 = vadd.f32 %v687, %v700
        %715 = vset.pattern.permute.xlu0 0
        %716 = vperm.xlu0 %715, %v308
        %v717 = vpop.permute.xlu0 %716
        %720 = vset.pattern.permute.xlu0 0
        %721 = vperm.xlu0 %720, %v309
        %v722 = vpop.permute.xlu0 %721
        %725 = vset.pattern.permute.xlu0 0
        %726 = vperm.xlu0 %725, %v310
        %v727 = vpop.permute.xlu0 %726
        %730 = vset.pattern.permute.xlu0 0
        %731 = vperm.xlu0 %730, %v311
        %v732 = vpop.permute.xlu0 %731
        %735 = vset.pattern.permute.xlu0 0
        %736 = vperm.xlu0 %735, %v312
        %v737 = vpop.permute.xlu0 %736
        %740 = vset.pattern.permute.xlu0 0
        %741 = vperm.xlu0 %740, %v313
        %v742 = vpop.permute.xlu0 %741
        %745 = vset.pattern.permute.xlu0 0
        %746 = vperm.xlu0 %745, %v314
        %v747 = vpop.permute.xlu0 %746
        %750 = vset.pattern.permute.xlu0 0
        %751 = vperm.xlu0 %750, %v315
        %v752 = vpop.permute.xlu0 %751
        %755 = vset.pattern.permute.xlu0 0
        %756 = vperm.xlu0 %755, %v316
        %v757 = vpop.permute.xlu0 %756
        %760 = vset.pattern.permute.xlu0 0
        %761 = vperm.xlu0 %760, %v317
        %v762 = vpop.permute.xlu0 %761
        %765 = vset.pattern.permute.xlu0 0
        %766 = vperm.xlu0 %765, %v318
        %v767 = vpop.permute.xlu0 %766
        %770 = vset.pattern.permute.xlu0 0
        %771 = vperm.xlu0 %770, %v319
        %v772 = vpop.permute.xlu0 %771
        %775 = vset.pattern.permute.xlu0 0
        %776 = vperm.xlu0 %775, %v320
        %v777 = vpop.permute.xlu0 %776
        %v779 = vmul.f32 %v717, %v622
        %v780 = vmul.f32 %v722, %v622
        %v781 = vmul.f32 %v727, %v622
        %v782 = vmul.f32 %v732, %v622
        %v783 = vmul.f32 %v737, %v622
        %v784 = vmul.f32 %v742, %v622
        %v785 = vmul.f32 %v747, %v622
        %v786 = vmul.f32 %v752, %v622
        %v787 = vmul.f32 %v757, %v622
        %v788 = vmul.f32 %v762, %v622
        %v789 = vmul.f32 %v767, %v622
        %v790 = vmul.f32 %v772, %v622
        %v791 = vmul.f32 %v777, %v622
        %v792 = vadd.f32 %v701, %v779
        %v793 = vadd.f32 %v702, %v780
        %v794 = vadd.f32 %v703, %v781
        %v795 = vadd.f32 %v704, %v782
        %v796 = vadd.f32 %v705, %v783
        %v797 = vadd.f32 %v706, %v784
        %v798 = vadd.f32 %v707, %v785
        %v799 = vadd.f32 %v708, %v786
        %v800 = vadd.f32 %v709, %v787
        %v801 = vadd.f32 %v710, %v788
        %v802 = vadd.f32 %v711, %v789
        %v803 = vadd.f32 %v712, %v790
        %v804 = vadd.f32 %v713, %v791
        %v805 = vmax.f32 %v636, %v792
        %v806 = vmax.f32 %v637, %v793
        %v807 = vmax.f32 %v638, %v794
        %v808 = vmax.f32 %v639, %v795
        %v809 = vmax.f32 %v640, %v796
        %v810 = vmax.f32 %v641, %v797
        %v811 = vmax.f32 %v642, %v798
        %v812 = vmax.f32 %v643, %v799
        %v813 = vmax.f32 %v644, %v800
        %v814 = vmax.f32 %v645, %v801
        %v815 = vmax.f32 %v646, %v802
        %v816 = vmax.f32 %v647, %v803
        %v817 = vmax.f32 %v648, %v804
        %v819 = vlaneseq
        %v820 = vshrl.u32 %v819, 7
        %v821 = vsub.s32 0, %v820
        %v822 = vrot.slane %v294, %v821
        %v824 = vadd.f32 %v805, %v822
        %v825 = vadd.f32 %v806, %v822
        %v826 = vadd.f32 %v807, %v822
        %v827 = vadd.f32 %v808, %v822
        %v828 = vadd.f32 %v809, %v822
        %v829 = vadd.f32 %v810, %v822
        %v830 = vadd.f32 %v811, %v822
        %v831 = vadd.f32 %v812, %v822
        %v832 = vadd.f32 %v813, %v822
        %v833 = vadd.f32 %v814, %v822
        %v834 = vadd.f32 %v815, %v822
        %v835 = vadd.f32 %v816, %v822
        %v836 = vadd.f32 %v817, %v822
        %v837 = vmax.f32 %v824, 0.0
        %v838 = vmax.f32 %v825, 0.0
        %v839 = vmax.f32 %v826, 0.0
        %v840 = vmax.f32 %v827, 0.0
        %v841 = vmax.f32 %v828, 0.0
        %v842 = vmax.f32 %v829, 0.0
        %v843 = vmax.f32 %v830, 0.0
        %v844 = vmax.f32 %v831, 0.0
        %v845 = vmax.f32 %v832, 0.0
        %v846 = vmax.f32 %v833, 0.0
        %v847 = vmax.f32 %v834, 0.0
        %v848 = vmax.f32 %v835, 0.0
        %v849 = vmax.f32 %v836, 0.0
        %v850 = vmul.f32 %v487, %v389
        %v851 = vmul.f32 %v491, %v389
        %v852 = vmul.f32 %v495, %v389
        %v853 = vmul.f32 %v499, %v389
        %v854 = vmul.f32 %v503, %v389
        %v855 = vmul.f32 %v507, %v389
        %v856 = vmul.f32 %v511, %v389
        %v857 = vmul.f32 %v515, %v389
        %v858 = vmul.f32 %v519, %v389
        %v859 = vmul.f32 %v523, %v389
        %v860 = vmul.f32 %v527, %v389
        %v861 = vmul.f32 %v531, %v389
        %v862 = vmul.f32 %v535, %v389
        %v863 = vmul.f32 %v569, %v458
        %v864 = vmul.f32 %v573, %v458
        %v865 = vmul.f32 %v577, %v458
        %v866 = vmul.f32 %v581, %v458
        %v867 = vmul.f32 %v585, %v458
        %v868 = vmul.f32 %v589, %v458
        %v869 = vmul.f32 %v593, %v458
        %v870 = vmul.f32 %v597, %v458
        %v871 = vmul.f32 %v601, %v458
        %v872 = vmul.f32 %v605, %v458
        %v873 = vmul.f32 %v609, %v458
        %v874 = vmul.f32 %v613, %v458
        %v875 = vmul.f32 %v617, %v458
        %v876 = vadd.f32 %v850, %v863
        %v877 = vadd.f32 %v851, %v864
        %v878 = vadd.f32 %v852, %v865
        %v879 = vadd.f32 %v853, %v866
        %v880 = vadd.f32 %v854, %v867
        %v881 = vadd.f32 %v855, %v868
        %v882 = vadd.f32 %v856, %v869
        %v883 = vadd.f32 %v857, %v870
        %v884 = vadd.f32 %v858, %v871
        %v885 = vadd.f32 %v859, %v872
        %v886 = vadd.f32 %v860, %v873
        %v887 = vadd.f32 %v861, %v874
        %v888 = vadd.f32 %v862, %v875
        %v889 = vmul.f32 %v717, %v540
        %v890 = vmul.f32 %v722, %v540
        %v891 = vmul.f32 %v727, %v540
        %v892 = vmul.f32 %v732, %v540
        %v893 = vmul.f32 %v737, %v540
        %v894 = vmul.f32 %v742, %v540
        %v895 = vmul.f32 %v747, %v540
        %v896 = vmul.f32 %v752, %v540
        %v897 = vmul.f32 %v757, %v540
        %v898 = vmul.f32 %v762, %v540
        %v899 = vmul.f32 %v767, %v540
        %v900 = vmul.f32 %v772, %v540
        %v901 = vmul.f32 %v777, %v540
        %v902 = vadd.f32 %v876, %v889
        %v903 = vadd.f32 %v877, %v890
        %v904 = vadd.f32 %v878, %v891
        %v905 = vadd.f32 %v879, %v892
        %v906 = vadd.f32 %v880, %v893
        %v907 = vadd.f32 %v881, %v894
        %v908 = vadd.f32 %v882, %v895
        %v909 = vadd.f32 %v883, %v896
        %v910 = vadd.f32 %v884, %v897
        %v911 = vadd.f32 %v885, %v898
        %v912 = vadd.f32 %v886, %v899
        %v913 = vadd.f32 %v887, %v900
        %v914 = vadd.f32 %v888, %v901
        %915 = vset.pattern.permute.xlu0 1
        %916 = vperm.xlu0 %915, %v308
        %v917 = vpop.permute.xlu0 %916
        %919 = vset.pattern.permute.xlu0 1
        %920 = vperm.xlu0 %919, %v309
        %v921 = vpop.permute.xlu0 %920
        %923 = vset.pattern.permute.xlu0 1
        %924 = vperm.xlu0 %923, %v310
        %v925 = vpop.permute.xlu0 %924
        %927 = vset.pattern.permute.xlu0 1
        %928 = vperm.xlu0 %927, %v311
        %v929 = vpop.permute.xlu0 %928
        %931 = vset.pattern.permute.xlu0 1
        %932 = vperm.xlu0 %931, %v312
        %v933 = vpop.permute.xlu0 %932
        %935 = vset.pattern.permute.xlu0 1
        %936 = vperm.xlu0 %935, %v313
        %v937 = vpop.permute.xlu0 %936
        %939 = vset.pattern.permute.xlu0 1
        %940 = vperm.xlu0 %939, %v314
        %v941 = vpop.permute.xlu0 %940
        %943 = vset.pattern.permute.xlu0 1
        %944 = vperm.xlu0 %943, %v315
        %v945 = vpop.permute.xlu0 %944
        %947 = vset.pattern.permute.xlu0 1
        %948 = vperm.xlu0 %947, %v316
        %v949 = vpop.permute.xlu0 %948
        %951 = vset.pattern.permute.xlu0 1
        %952 = vperm.xlu0 %951, %v317
        %v953 = vpop.permute.xlu0 %952
        %955 = vset.pattern.permute.xlu0 1
        %956 = vperm.xlu0 %955, %v318
        %v957 = vpop.permute.xlu0 %956
        %959 = vset.pattern.permute.xlu0 1
        %960 = vperm.xlu0 %959, %v319
        %v961 = vpop.permute.xlu0 %960
        %963 = vset.pattern.permute.xlu0 1
        %964 = vperm.xlu0 %963, %v320
        %v965 = vpop.permute.xlu0 %964
        %v967 = vmul.f32 %v917, %v622
        %v968 = vmul.f32 %v921, %v622
        %v969 = vmul.f32 %v925, %v622
        %v970 = vmul.f32 %v929, %v622
        %v971 = vmul.f32 %v933, %v622
        %v972 = vmul.f32 %v937, %v622
        %v973 = vmul.f32 %v941, %v622
        %v974 = vmul.f32 %v945, %v622
        %v975 = vmul.f32 %v949, %v622
        %v976 = vmul.f32 %v953, %v622
        %v977 = vmul.f32 %v957, %v622
        %v978 = vmul.f32 %v961, %v622
        %v979 = vmul.f32 %v965, %v622
        %v980 = vadd.f32 %v902, %v967
        %v981 = vadd.f32 %v903, %v968
        %v982 = vadd.f32 %v904, %v969
        %v983 = vadd.f32 %v905, %v970
        %v984 = vadd.f32 %v906, %v971
        %v985 = vadd.f32 %v907, %v972
        %v986 = vadd.f32 %v908, %v973
        %v987 = vadd.f32 %v909, %v974
        %v988 = vadd.f32 %v910, %v975
        %v989 = vadd.f32 %v911, %v976
        %v990 = vadd.f32 %v912, %v977
        %v991 = vadd.f32 %v913, %v978
        %v992 = vadd.f32 %v914, %v979
        %v993 = vmul.f32 %v569, %v389
        %v994 = vmul.f32 %v573, %v389
        %v995 = vmul.f32 %v577, %v389
        %v996 = vmul.f32 %v581, %v389
        %v997 = vmul.f32 %v585, %v389
        %v998 = vmul.f32 %v589, %v389
        %v999 = vmul.f32 %v593, %v389
        %v1000 = vmul.f32 %v597, %v389
        %v1001 = vmul.f32 %v601, %v389
        %v1002 = vmul.f32 %v605, %v389
        %v1003 = vmul.f32 %v609, %v389
        %v1004 = vmul.f32 %v613, %v389
        %v1005 = vmul.f32 %v617, %v389
        %v1006 = vmul.f32 %v717, %v458
        %v1007 = vmul.f32 %v722, %v458
        %v1008 = vmul.f32 %v727, %v458
        %v1009 = vmul.f32 %v732, %v458
        %v1010 = vmul.f32 %v737, %v458
        %v1011 = vmul.f32 %v742, %v458
        %v1012 = vmul.f32 %v747, %v458
        %v1013 = vmul.f32 %v752, %v458
        %v1014 = vmul.f32 %v757, %v458
        %v1015 = vmul.f32 %v762, %v458
        %v1016 = vmul.f32 %v767, %v458
        %v1017 = vmul.f32 %v772, %v458
        %v1018 = vmul.f32 %v777, %v458
        %v1019 = vadd.f32 %v993, %v1006
        %v1020 = vadd.f32 %v994, %v1007
        %v1021 = vadd.f32 %v995, %v1008
        %v1022 = vadd.f32 %v996, %v1009
        %v1023 = vadd.f32 %v997, %v1010
        %v1024 = vadd.f32 %v998, %v1011
        %v1025 = vadd.f32 %v999, %v1012
        %v1026 = vadd.f32 %v1000, %v1013
        %v1027 = vadd.f32 %v1001, %v1014
        %v1028 = vadd.f32 %v1002, %v1015
        %v1029 = vadd.f32 %v1003, %v1016
        %v1030 = vadd.f32 %v1004, %v1017
        %v1031 = vadd.f32 %v1005, %v1018
        %v1032 = vmul.f32 %v917, %v540
        %v1033 = vmul.f32 %v921, %v540
        %v1034 = vmul.f32 %v925, %v540
        %v1035 = vmul.f32 %v929, %v540
        %v1036 = vmul.f32 %v933, %v540
        %v1037 = vmul.f32 %v937, %v540
        %v1038 = vmul.f32 %v941, %v540
        %v1039 = vmul.f32 %v945, %v540
        %v1040 = vmul.f32 %v949, %v540
        %v1041 = vmul.f32 %v953, %v540
        %v1042 = vmul.f32 %v957, %v540
        %v1043 = vmul.f32 %v961, %v540
        %v1044 = vmul.f32 %v965, %v540
        %v1045 = vadd.f32 %v1019, %v1032
        %v1046 = vadd.f32 %v1020, %v1033
        %v1047 = vadd.f32 %v1021, %v1034
        %v1048 = vadd.f32 %v1022, %v1035
        %v1049 = vadd.f32 %v1023, %v1036
        %v1050 = vadd.f32 %v1024, %v1037
        %v1051 = vadd.f32 %v1025, %v1038
        %v1052 = vadd.f32 %v1026, %v1039
        %v1053 = vadd.f32 %v1027, %v1040
        %v1054 = vadd.f32 %v1028, %v1041
        %v1055 = vadd.f32 %v1029, %v1042
        %v1056 = vadd.f32 %v1030, %v1043
        %v1057 = vadd.f32 %v1031, %v1044
        %1058 = vset.pattern.permute.xlu0 2
        %1059 = vperm.xlu0 %1058, %v308
        %v1060 = vpop.permute.xlu0 %1059
        %1062 = vset.pattern.permute.xlu0 2
        %1063 = vperm.xlu0 %1062, %v309
        %v1064 = vpop.permute.xlu0 %1063
        %1066 = vset.pattern.permute.xlu0 2
        %1067 = vperm.xlu0 %1066, %v310
        %v1068 = vpop.permute.xlu0 %1067
        %1070 = vset.pattern.permute.xlu0 2
        %1071 = vperm.xlu0 %1070, %v311
        %v1072 = vpop.permute.xlu0 %1071
        %1074 = vset.pattern.permute.xlu0 2
        %1075 = vperm.xlu0 %1074, %v312
        %v1076 = vpop.permute.xlu0 %1075
        %1078 = vset.pattern.permute.xlu0 2
        %1079 = vperm.xlu0 %1078, %v313
        %v1080 = vpop.permute.xlu0 %1079
        %1082 = vset.pattern.permute.xlu0 2
        %1083 = vperm.xlu0 %1082, %v314
        %v1084 = vpop.permute.xlu0 %1083
        %1086 = vset.pattern.permute.xlu0 2
        %1087 = vperm.xlu0 %1086, %v315
        %v1088 = vpop.permute.xlu0 %1087
        %1090 = vset.pattern.permute.xlu0 2
        %1091 = vperm.xlu0 %1090, %v316
        %v1092 = vpop.permute.xlu0 %1091
        %1094 = vset.pattern.permute.xlu0 2
        %1095 = vperm.xlu0 %1094, %v317
        %v1096 = vpop.permute.xlu0 %1095
        %1098 = vset.pattern.permute.xlu0 2
        %1099 = vperm.xlu0 %1098, %v318
        %v1100 = vpop.permute.xlu0 %1099
        %1102 = vset.pattern.permute.xlu0 2
        %1103 = vperm.xlu0 %1102, %v319
        %v1104 = vpop.permute.xlu0 %1103
        %1106 = vset.pattern.permute.xlu0 2
        %1107 = vperm.xlu0 %1106, %v320
        %v1108 = vpop.permute.xlu0 %1107
        %v1110 = vmul.f32 %v1060, %v622
        %v1111 = vmul.f32 %v1064, %v622
        %v1112 = vmul.f32 %v1068, %v622
        %v1113 = vmul.f32 %v1072, %v622
        %v1114 = vmul.f32 %v1076, %v622
        %v1115 = vmul.f32 %v1080, %v622
        %v1116 = vmul.f32 %v1084, %v622
        %v1117 = vmul.f32 %v1088, %v622
        %v1118 = vmul.f32 %v1092, %v622
        %v1119 = vmul.f32 %v1096, %v622
        %v1120 = vmul.f32 %v1100, %v622
        %v1121 = vmul.f32 %v1104, %v622
        %v1122 = vmul.f32 %v1108, %v622
        %v1123 = vadd.f32 %v1045, %v1110
        %v1124 = vadd.f32 %v1046, %v1111
        %v1125 = vadd.f32 %v1047, %v1112
        %v1126 = vadd.f32 %v1048, %v1113
        %v1127 = vadd.f32 %v1049, %v1114
        %v1128 = vadd.f32 %v1050, %v1115
        %v1129 = vadd.f32 %v1051, %v1116
        %v1130 = vadd.f32 %v1052, %v1117
        %v1131 = vadd.f32 %v1053, %v1118
        %v1132 = vadd.f32 %v1054, %v1119
        %v1133 = vadd.f32 %v1055, %v1120
        %v1134 = vadd.f32 %v1056, %v1121
        %v1135 = vadd.f32 %v1057, %v1122
        %v1136 = vmax.f32 %v980, %v1123
        %v1137 = vmax.f32 %v981, %v1124
        %v1138 = vmax.f32 %v982, %v1125
        %v1139 = vmax.f32 %v983, %v1126
        %v1140 = vmax.f32 %v984, %v1127
        %v1141 = vmax.f32 %v985, %v1128
        %v1142 = vmax.f32 %v986, %v1129
        %v1143 = vmax.f32 %v987, %v1130
        %v1144 = vmax.f32 %v988, %v1131
        %v1145 = vmax.f32 %v989, %v1132
        %v1146 = vmax.f32 %v990, %v1133
        %v1147 = vmax.f32 %v991, %v1134
        %v1148 = vmax.f32 %v992, %v1135
        %v1149 = vadd.f32 %v1136, %v822
        %v1150 = vadd.f32 %v1137, %v822
        %v1151 = vadd.f32 %v1138, %v822
        %v1152 = vadd.f32 %v1139, %v822
        %v1153 = vadd.f32 %v1140, %v822
        %v1154 = vadd.f32 %v1141, %v822
        %v1155 = vadd.f32 %v1142, %v822
        %v1156 = vadd.f32 %v1143, %v822
        %v1157 = vadd.f32 %v1144, %v822
        %v1158 = vadd.f32 %v1145, %v822
        %v1159 = vadd.f32 %v1146, %v822
        %v1160 = vadd.f32 %v1147, %v822
        %v1161 = vadd.f32 %v1148, %v822
        %v1162 = vmax.f32 %v1149, 0.0
        %v1163 = vmax.f32 %v1150, 0.0
        %v1164 = vmax.f32 %v1151, 0.0
        %v1165 = vmax.f32 %v1152, 0.0
        %v1166 = vmax.f32 %v1153, 0.0
        %v1167 = vmax.f32 %v1154, 0.0
        %v1168 = vmax.f32 %v1155, 0.0
        %v1169 = vmax.f32 %v1156, 0.0
        %v1170 = vmax.f32 %v1157, 0.0
        %v1171 = vmax.f32 %v1158, 0.0
        %v1172 = vmax.f32 %v1159, 0.0
        %v1173 = vmax.f32 %v1160, 0.0
        %v1174 = vmax.f32 %v1161, 0.0
        %v1175 = vld [vmem:[%s284 + $0x2] sm:$0xff]
        %v1176 = vld [vmem:[%s284 + $0xa] sm:$0xff]
        %v1177 = vld [vmem:[%s284 + $0x12] sm:$0xff]
        %v1178 = vld [vmem:[%s284 + $0x1a] sm:$0xff]
        %v1179 = vld [vmem:[%s284 + $0x22] sm:$0xff]
        %v1180 = vld [vmem:[%s284 + $0x2a] sm:$0xff]
        %v1181 = vld [vmem:[%s284 + $0x32] sm:$0xff]
        %v1182 = vld [vmem:[%s284 + $0x3a] sm:$0xff]
        %v1183 = vld [vmem:[%s284 + $0x42] sm:$0xff]
        %v1184 = vld [vmem:[%s284 + $0x4a] sm:$0xff]
        %v1185 = vld [vmem:[%s284 + $0x52] sm:$0xff]
        %v1186 = vld [vmem:[%s284 + $0x5a] sm:$0xff]
        %v1187 = vld [vmem:[%s284 + $0x62] sm:$0x3f]
        %v1188 = vmul.f32 %v717, %v389
        %v1189 = vmul.f32 %v722, %v389
        %v1190 = vmul.f32 %v727, %v389
        %v1191 = vmul.f32 %v732, %v389
        %v1192 = vmul.f32 %v737, %v389
        %v1193 = vmul.f32 %v742, %v389
        %v1194 = vmul.f32 %v747, %v389
        %v1195 = vmul.f32 %v752, %v389
        %v1196 = vmul.f32 %v757, %v389
        %v1197 = vmul.f32 %v762, %v389
        %v1198 = vmul.f32 %v767, %v389
        %v1199 = vmul.f32 %v772, %v389
        %v1200 = vmul.f32 %v777, %v389
        %v1201 = vmul.f32 %v917, %v458
        %v1202 = vmul.f32 %v921, %v458
        %v1203 = vmul.f32 %v925, %v458
        %v1204 = vmul.f32 %v929, %v458
        %v1205 = vmul.f32 %v933, %v458
        %v1206 = vmul.f32 %v937, %v458
        %v1207 = vmul.f32 %v941, %v458
        %v1208 = vmul.f32 %v945, %v458
        %v1209 = vmul.f32 %v949, %v458
        %v1210 = vmul.f32 %v953, %v458
        %v1211 = vmul.f32 %v957, %v458
        %v1212 = vmul.f32 %v961, %v458
        %v1213 = vmul.f32 %v965, %v458
        %v1214 = vadd.f32 %v1188, %v1201
        %v1215 = vadd.f32 %v1189, %v1202
        %v1216 = vadd.f32 %v1190, %v1203
        %v1217 = vadd.f32 %v1191, %v1204
        %v1218 = vadd.f32 %v1192, %v1205
        %v1219 = vadd.f32 %v1193, %v1206
        %v1220 = vadd.f32 %v1194, %v1207
        %v1221 = vadd.f32 %v1195, %v1208
        %v1222 = vadd.f32 %v1196, %v1209
        %v1223 = vadd.f32 %v1197, %v1210
        %v1224 = vadd.f32 %v1198, %v1211
        %v1225 = vadd.f32 %v1199, %v1212
        %v1226 = vadd.f32 %v1200, %v1213
        %v1227 = vmul.f32 %v1060, %v540
        %v1228 = vmul.f32 %v1064, %v540
        %v1229 = vmul.f32 %v1068, %v540
        %v1230 = vmul.f32 %v1072, %v540
        %v1231 = vmul.f32 %v1076, %v540
        %v1232 = vmul.f32 %v1080, %v540
        %v1233 = vmul.f32 %v1084, %v540
        %v1234 = vmul.f32 %v1088, %v540
        %v1235 = vmul.f32 %v1092, %v540
        %v1236 = vmul.f32 %v1096, %v540
        %v1237 = vmul.f32 %v1100, %v540
        %v1238 = vmul.f32 %v1104, %v540
        %v1239 = vmul.f32 %v1108, %v540
        %v1240 = vadd.f32 %v1214, %v1227
        %v1241 = vadd.f32 %v1215, %v1228
        %v1242 = vadd.f32 %v1216, %v1229
        %v1243 = vadd.f32 %v1217, %v1230
        %v1244 = vadd.f32 %v1218, %v1231
        %v1245 = vadd.f32 %v1219, %v1232
        %v1246 = vadd.f32 %v1220, %v1233
        %v1247 = vadd.f32 %v1221, %v1234
        %v1248 = vadd.f32 %v1222, %v1235
        %v1249 = vadd.f32 %v1223, %v1236
        %v1250 = vadd.f32 %v1224, %v1237
        %v1251 = vadd.f32 %v1225, %v1238
        %v1252 = vadd.f32 %v1226, %v1239
        %1253 = vset.pattern.permute.xlu0 3
        %1254 = vperm.xlu0 %1253, %v308
        %v1255 = vpop.permute.xlu0 %1254
        %1257 = vset.pattern.permute.xlu0 3
        %1258 = vperm.xlu0 %1257, %v309
        %v1259 = vpop.permute.xlu0 %1258
        %1261 = vset.pattern.permute.xlu0 3
        %1262 = vperm.xlu0 %1261, %v310
        %v1263 = vpop.permute.xlu0 %1262
        %1265 = vset.pattern.permute.xlu0 3
        %1266 = vperm.xlu0 %1265, %v311
        %v1267 = vpop.permute.xlu0 %1266
        %1269 = vset.pattern.permute.xlu0 3
        %1270 = vperm.xlu0 %1269, %v312
        %v1271 = vpop.permute.xlu0 %1270
        %1273 = vset.pattern.permute.xlu0 3
        %1274 = vperm.xlu0 %1273, %v313
        %v1275 = vpop.permute.xlu0 %1274
        %1277 = vset.pattern.permute.xlu0 3
        %1278 = vperm.xlu0 %1277, %v314
        %v1279 = vpop.permute.xlu0 %1278
        %1281 = vset.pattern.permute.xlu0 3
        %1282 = vperm.xlu0 %1281, %v315
        %v1283 = vpop.permute.xlu0 %1282
        %1285 = vset.pattern.permute.xlu0 3
        %1286 = vperm.xlu0 %1285, %v316
        %v1287 = vpop.permute.xlu0 %1286
        %1289 = vset.pattern.permute.xlu0 3
        %1290 = vperm.xlu0 %1289, %v317
        %v1291 = vpop.permute.xlu0 %1290
        %1293 = vset.pattern.permute.xlu0 3
        %1294 = vperm.xlu0 %1293, %v318
        %v1295 = vpop.permute.xlu0 %1294
        %1297 = vset.pattern.permute.xlu0 3
        %1298 = vperm.xlu0 %1297, %v319
        %v1299 = vpop.permute.xlu0 %1298
        %1301 = vset.pattern.permute.xlu0 3
        %1302 = vperm.xlu0 %1301, %v320
        %v1303 = vpop.permute.xlu0 %1302
        %v1305 = vmul.f32 %v1255, %v622
        %v1306 = vmul.f32 %v1259, %v622
        %v1307 = vmul.f32 %v1263, %v622
        %v1308 = vmul.f32 %v1267, %v622
        %v1309 = vmul.f32 %v1271, %v622
        %v1310 = vmul.f32 %v1275, %v622
        %v1311 = vmul.f32 %v1279, %v622
        %v1312 = vmul.f32 %v1283, %v622
        %v1313 = vmul.f32 %v1287, %v622
        %v1314 = vmul.f32 %v1291, %v622
        %v1315 = vmul.f32 %v1295, %v622
        %v1316 = vmul.f32 %v1299, %v622
        %v1317 = vmul.f32 %v1303, %v622
        %v1318 = vadd.f32 %v1240, %v1305
        %v1319 = vadd.f32 %v1241, %v1306
        %v1320 = vadd.f32 %v1242, %v1307
        %v1321 = vadd.f32 %v1243, %v1308
        %v1322 = vadd.f32 %v1244, %v1309
        %v1323 = vadd.f32 %v1245, %v1310
        %v1324 = vadd.f32 %v1246, %v1311
        %v1325 = vadd.f32 %v1247, %v1312
        %v1326 = vadd.f32 %v1248, %v1313
        %v1327 = vadd.f32 %v1249, %v1314
        %v1328 = vadd.f32 %v1250, %v1315
        %v1329 = vadd.f32 %v1251, %v1316
        %v1330 = vadd.f32 %v1252, %v1317
        %v1331 = vmul.f32 %v917, %v389
        %v1332 = vmul.f32 %v921, %v389
        %v1333 = vmul.f32 %v925, %v389
        %v1334 = vmul.f32 %v929, %v389
        %v1335 = vmul.f32 %v933, %v389
        %v1336 = vmul.f32 %v937, %v389
        %v1337 = vmul.f32 %v941, %v389
        %v1338 = vmul.f32 %v945, %v389
        %v1339 = vmul.f32 %v949, %v389
        %v1340 = vmul.f32 %v953, %v389
        %v1341 = vmul.f32 %v957, %v389
        %v1342 = vmul.f32 %v961, %v389
        %v1343 = vmul.f32 %v965, %v389
        %v1344 = vmul.f32 %v1060, %v458
        %v1345 = vmul.f32 %v1064, %v458
        %v1346 = vmul.f32 %v1068, %v458
        %v1347 = vmul.f32 %v1072, %v458
        %v1348 = vmul.f32 %v1076, %v458
        %v1349 = vmul.f32 %v1080, %v458
        %v1350 = vmul.f32 %v1084, %v458
        %v1351 = vmul.f32 %v1088, %v458
        %v1352 = vmul.f32 %v1092, %v458
        %v1353 = vmul.f32 %v1096, %v458
        %v1354 = vmul.f32 %v1100, %v458
        %v1355 = vmul.f32 %v1104, %v458
        %v1356 = vmul.f32 %v1108, %v458
        %v1357 = vadd.f32 %v1331, %v1344
        %v1358 = vadd.f32 %v1332, %v1345
        %v1359 = vadd.f32 %v1333, %v1346
        %v1360 = vadd.f32 %v1334, %v1347
        %v1361 = vadd.f32 %v1335, %v1348
        %v1362 = vadd.f32 %v1336, %v1349
        %v1363 = vadd.f32 %v1337, %v1350
        %v1364 = vadd.f32 %v1338, %v1351
        %v1365 = vadd.f32 %v1339, %v1352
        %v1366 = vadd.f32 %v1340, %v1353
        %v1367 = vadd.f32 %v1341, %v1354
        %v1368 = vadd.f32 %v1342, %v1355
        %v1369 = vadd.f32 %v1343, %v1356
        %v1370 = vmul.f32 %v1255, %v540
        %v1371 = vmul.f32 %v1259, %v540
        %v1372 = vmul.f32 %v1263, %v540
        %v1373 = vmul.f32 %v1267, %v540
        %v1374 = vmul.f32 %v1271, %v540
        %v1375 = vmul.f32 %v1275, %v540
        %v1376 = vmul.f32 %v1279, %v540
        %v1377 = vmul.f32 %v1283, %v540
        %v1378 = vmul.f32 %v1287, %v540
        %v1379 = vmul.f32 %v1291, %v540
        %v1380 = vmul.f32 %v1295, %v540
        %v1381 = vmul.f32 %v1299, %v540
        %v1382 = vmul.f32 %v1303, %v540
        %v1383 = vadd.f32 %v1357, %v1370
        %v1384 = vadd.f32 %v1358, %v1371
        %v1385 = vadd.f32 %v1359, %v1372
        %v1386 = vadd.f32 %v1360, %v1373
        %v1387 = vadd.f32 %v1361, %v1374
        %v1388 = vadd.f32 %v1362, %v1375
        %v1389 = vadd.f32 %v1363, %v1376
        %v1390 = vadd.f32 %v1364, %v1377
        %v1391 = vadd.f32 %v1365, %v1378
        %v1392 = vadd.f32 %v1366, %v1379
        %v1393 = vadd.f32 %v1367, %v1380
        %v1394 = vadd.f32 %v1368, %v1381
        %v1395 = vadd.f32 %v1369, %v1382
        %1397 = vset.pattern.permute.xlu0 0
        %1398 = vperm.xlu0 %1397, %v1175
        %v1399 = vpop.permute.xlu0 %1398
        %1402 = vset.pattern.permute.xlu0 0
        %1403 = vperm.xlu0 %1402, %v1176
        %v1404 = vpop.permute.xlu0 %1403
        %1407 = vset.pattern.permute.xlu0 0
        %1408 = vperm.xlu0 %1407, %v1177
        %v1409 = vpop.permute.xlu0 %1408
        %1412 = vset.pattern.permute.xlu0 0
        %1413 = vperm.xlu0 %1412, %v1178
        %v1414 = vpop.permute.xlu0 %1413
        %1417 = vset.pattern.permute.xlu0 0
        %1418 = vperm.xlu0 %1417, %v1179
        %v1419 = vpop.permute.xlu0 %1418
        %1422 = vset.pattern.permute.xlu0 0
        %1423 = vperm.xlu0 %1422, %v1180
        %v1424 = vpop.permute.xlu0 %1423
        %1427 = vset.pattern.permute.xlu0 0
        %1428 = vperm.xlu0 %1427, %v1181
        %v1429 = vpop.permute.xlu0 %1428
        %1432 = vset.pattern.permute.xlu0 0
        %1433 = vperm.xlu0 %1432, %v1182
        %v1434 = vpop.permute.xlu0 %1433
        %1437 = vset.pattern.permute.xlu0 0
        %1438 = vperm.xlu0 %1437, %v1183
        %v1439 = vpop.permute.xlu0 %1438
        %1442 = vset.pattern.permute.xlu0 0
        %1443 = vperm.xlu0 %1442, %v1184
        %v1444 = vpop.permute.xlu0 %1443
        %1447 = vset.pattern.permute.xlu0 0
        %1448 = vperm.xlu0 %1447, %v1185
        %v1449 = vpop.permute.xlu0 %1448
        %1452 = vset.pattern.permute.xlu0 0
        %1453 = vperm.xlu0 %1452, %v1186
        %v1454 = vpop.permute.xlu0 %1453
        %1457 = vset.pattern.permute.xlu0 0
        %1458 = vperm.xlu0 %1457, %v1187
        %v1459 = vpop.permute.xlu0 %1458
        %v1461 = vmul.f32 %v1399, %v622
        %v1462 = vmul.f32 %v1404, %v622
        %v1463 = vmul.f32 %v1409, %v622
        %v1464 = vmul.f32 %v1414, %v622
        %v1465 = vmul.f32 %v1419, %v622
        %v1466 = vmul.f32 %v1424, %v622
        %v1467 = vmul.f32 %v1429, %v622
        %v1468 = vmul.f32 %v1434, %v622
        %v1469 = vmul.f32 %v1439, %v622
        %v1470 = vmul.f32 %v1444, %v622
        %v1471 = vmul.f32 %v1449, %v622
        %v1472 = vmul.f32 %v1454, %v622
        %v1473 = vmul.f32 %v1459, %v622
        %v1474 = vadd.f32 %v1383, %v1461
        %v1475 = vadd.f32 %v1384, %v1462
        %v1476 = vadd.f32 %v1385, %v1463
        %v1477 = vadd.f32 %v1386, %v1464
        %v1478 = vadd.f32 %v1387, %v1465
        %v1479 = vadd.f32 %v1388, %v1466
        %v1480 = vadd.f32 %v1389, %v1467
        %v1481 = vadd.f32 %v1390, %v1468
        %v1482 = vadd.f32 %v1391, %v1469
        %v1483 = vadd.f32 %v1392, %v1470
        %v1484 = vadd.f32 %v1393, %v1471
        %v1485 = vadd.f32 %v1394, %v1472
        %v1486 = vadd.f32 %v1395, %v1473
        %v1487 = vmax.f32 %v1318, %v1474
        %v1488 = vmax.f32 %v1319, %v1475
        %v1489 = vmax.f32 %v1320, %v1476
        %v1490 = vmax.f32 %v1321, %v1477
        %v1491 = vmax.f32 %v1322, %v1478
        %v1492 = vmax.f32 %v1323, %v1479
        %v1493 = vmax.f32 %v1324, %v1480
        %v1494 = vmax.f32 %v1325, %v1481
        %v1495 = vmax.f32 %v1326, %v1482
        %v1496 = vmax.f32 %v1327, %v1483
        %v1497 = vmax.f32 %v1328, %v1484
        %v1498 = vmax.f32 %v1329, %v1485
        %v1499 = vmax.f32 %v1330, %v1486
        %v1500 = vadd.f32 %v1487, %v822
        %v1501 = vadd.f32 %v1488, %v822
        %v1502 = vadd.f32 %v1489, %v822
        %v1503 = vadd.f32 %v1490, %v822
        %v1504 = vadd.f32 %v1491, %v822
        %v1505 = vadd.f32 %v1492, %v822
        %v1506 = vadd.f32 %v1493, %v822
        %v1507 = vadd.f32 %v1494, %v822
        %v1508 = vadd.f32 %v1495, %v822
        %v1509 = vadd.f32 %v1496, %v822
        %v1510 = vadd.f32 %v1497, %v822
        %v1511 = vadd.f32 %v1498, %v822
        %v1512 = vadd.f32 %v1499, %v822
        %v1513 = vmax.f32 %v1500, 0.0
        %v1514 = vmax.f32 %v1501, 0.0
        %v1515 = vmax.f32 %v1502, 0.0
        %v1516 = vmax.f32 %v1503, 0.0
        %v1517 = vmax.f32 %v1504, 0.0
        %v1518 = vmax.f32 %v1505, 0.0
        %v1519 = vmax.f32 %v1506, 0.0
        %v1520 = vmax.f32 %v1507, 0.0
        %v1521 = vmax.f32 %v1508, 0.0
        %v1522 = vmax.f32 %v1509, 0.0
        %v1523 = vmax.f32 %v1510, 0.0
        %v1524 = vmax.f32 %v1511, 0.0
        %v1525 = vmax.f32 %v1512, 0.0
        %v1526 = vld [vmem:[%s3] sm:$0xff]
        %v1527 = vld [vmem:[%s3 + $0x8] sm:$0xff]
        %v1528 = vld [vmem:[%s3 + $0x10] sm:$0xff]
        %v1529 = vld [vmem:[%s3 + $0x18] sm:$0xff]
        %v1530 = vld [vmem:[%s4] sm:$0xff]
        %v1531 = vld [vmem:[%s4 + $0x8] sm:$0xff]
        %v1532 = vld [vmem:[%s4 + $0x10] sm:$0xff]
        %v1533 = vld [vmem:[%s4 + $0x18] sm:$0xff]
        %vm1534 = vcmask 261120
        %v1536 = vsel %vm1534, %v1162, 0
        %v1539 = vsel %vm1534, %v1163, 0
        %v1542 = vsel %vm1534, %v1164, 0
        %v1545 = vsel %vm1534, %v1165, 0
        %v1548 = vsel %vm1534, %v1166, 0
        %v1551 = vsel %vm1534, %v1167, 0
        %v1554 = vsel %vm1534, %v1168, 0
        %v1557 = vsel %vm1534, %v1169, 0
        %v1560 = vsel %vm1534, %v1170, 0
        %v1563 = vsel %vm1534, %v1171, 0
        %v1566 = vsel %vm1534, %v1172, 0
        %v1569 = vsel %vm1534, %v1173, 0
        %v1572 = vsel %vm1534, %v1174, 0
        %1574 = vmatprep.subr.mxu0 0.0
        %1575 = vmatpush1.msra.mxu0 %v1530
        %1576 = vmatprep.subr.mxu0 0.0
        %1577 = vmatpush1.msra.mxu0 %v1531
        %1578 = vmatprep.subr.mxu0 0.0
        %1579 = vmatpush1.msra.mxu0 %v1532
        %1580 = vmatprep.subr.mxu0 0.0
        %1581 = vmatpush1.msra.mxu0 %v1533
        %1582 = vmatprep.subr.mxu0 0.0
        %1583 = vmatpush1.msra.mxu0 0.0
        %1584 = vmatprep.subr.mxu0 0.0
        %1585 = vmatpush1.msra.mxu0 0.0
        %1586 = vmatprep.subr.mxu0 0.0
        %1587 = vmatpush1.msra.mxu0 0.0
        %1588 = vmatprep.subr.mxu0 0.0
        %1589 = vmatpush1.msra.mxu0 0.0
        %1590 = vmatprep.subr.mxu0 0.0
        %1591 = vmatpush1.msra.mxu0 0.0
        %1592 = vmatprep.subr.mxu0 0.0
        %1593 = vmatpush1.msra.mxu0 0.0
        %1594 = vmatprep.subr.mxu0 0.0
        %1595 = vmatpush1.msra.mxu0 0.0
        %1596 = vmatprep.subr.mxu0 0.0
        %1597 = vmatpush1.msra.mxu0 0.0
        %1598 = vmatprep.subr.mxu0 0.0
        %1599 = vmatpush1.msra.mxu0 0.0
        %1600 = vmatprep.subr.mxu0 0.0
        %1601 = vmatpush1.msra.mxu0 0.0
        %1602 = vmatprep.subr.mxu0 0.0
        %1603 = vmatpush1.msra.mxu0 0.0
        %1604 = vmatprep.subr.mxu0 0.0
        %1605 = vmatpush1.msra.mxu0 0.0
        %1606 = vmatprep.subr.mxu0 0.0
        %1607 = vmatpush1.msra.mxu0 0.0
        %1608 = vmatprep.subr.mxu0 0.0
        %1609 = vmatpush1.msra.mxu0 0.0
        %1610 = vmatprep.subr.mxu0 0.0
        %1611 = vmatpush1.msra.mxu0 0.0
        %1612 = vmatprep.subr.mxu0 0.0
        %1613 = vmatpush1.msra.mxu0 0.0
        %1614 = vmatprep.subr.mxu0 0.0
        %1615 = vmatpush1.msra.mxu0 0.0
        %1616 = vmatprep.subr.mxu0 0.0
        %1617 = vmatpush1.msra.mxu0 0.0
        %1618 = vmatprep.subr.mxu0 0.0
        %1619 = vmatpush1.msra.mxu0 0.0
        %1620 = vmatprep.subr.mxu0 0.0
        %1621 = vmatpush1.msra.mxu0 0.0
        %1622 = vmatprep.subr.mxu0 0.0
        %1623 = vmatpush1.msra.mxu0 0.0
        %1624 = vmatprep.subr.mxu0 0.0
        %1625 = vmatpush1.msra.mxu0 0.0
        %1626 = vmatprep.subr.mxu0 0.0
        %1627 = vmatpush1.msra.mxu0 0.0
        %1628 = vmatprep.subr.mxu0 0.0
        %1629 = vmatpush1.msra.mxu0 0.0
        %1630 = vmatprep.subr.mxu0 0.0
        %1631 = vmatpush1.msra.mxu0 0.0
        %1632 = vmatprep.subr.mxu0 0.0
        %1633 = vmatpush1.msra.mxu0 0.0
        %1634 = vmatprep.subr.mxu0 0.0
        %1635 = vmatpush1.msra.mxu0 0.0
        %1636 = vmatprep.subr.mxu0 0.0
        %1637 = vmatpush1.msra.mxu0 0.0
        %1638 = vmatprep.mubr.f32.mxu0 0.0
        %1639 = vmatmul.mubr.f32.gmra.mrb[0].mxu0 %v1536
        %v1640 = vpop.f32.mrb[0].mxu0
        %v1641 = vadd.f32 0.0, %v1640
        %v1642 = vpop.f32.mrb[0].mxu0
        %1643 = vmatprep.mubr.f32.mxu0 0.0
        %1644 = vmatmul.mubr.f32.gmra.mrb[0].mxu0 %v1539
        %v1645 = vpop.f32.mrb[0].mxu0
        %v1646 = vadd.f32 0.0, %v1645
        %v1647 = vpop.f32.mrb[0].mxu0
        %1648 = vmatprep.mubr.f32.mxu0 0.0
        %1649 = vmatmul.mubr.f32.gmra.mrb[0].mxu0 %v1542
        %v1650 = vpop.f32.mrb[0].mxu0
        %v1651 = vadd.f32 0.0, %v1650
        %v1652 = vpop.f32.mrb[0].mxu0
        %1653 = vmatprep.mubr.f32.mxu0 0.0
        %1654 = vmatmul.mubr.f32.gmra.mrb[0].mxu0 %v1545
        %v1655 = vpop.f32.mrb[0].mxu0
        %v1656 = vadd.f32 0.0, %v1655
        %v1657 = vpop.f32.mrb[0].mxu0
        %1658 = vmatprep.mubr.f32.mxu0 0.0
        %1659 = vmatmul.mubr.f32.gmra.mrb[0].mxu0 %v1548
        %v1660 = vpop.f32.mrb[0].mxu0
        %v1661 = vadd.f32 0.0, %v1660
        %v1662 = vpop.f32.mrb[0].mxu0
        %1663 = vmatprep.mubr.f32.mxu0 0.0
        %1664 = vmatmul.mubr.f32.gmra.mrb[0].mxu0 %v1551
        %v1665 = vpop.f32.mrb[0].mxu0
        %v1666 = vadd.f32 0.0, %v1665
        %v1667 = vpop.f32.mrb[0].mxu0
        %1668 = vmatprep.mubr.f32.mxu0 0.0
        %1669 = vmatmul.mubr.f32.gmra.mrb[0].mxu0 %v1554
        %v1670 = vpop.f32.mrb[0].mxu0
        %v1671 = vadd.f32 0.0, %v1670
        %v1672 = vpop.f32.mrb[0].mxu0
        %1673 = vmatprep.mubr.f32.mxu0 0.0
        %1674 = vmatmul.mubr.f32.gmra.mrb[0].mxu0 %v1557
        %v1675 = vpop.f32.mrb[0].mxu0
        %v1676 = vadd.f32 0.0, %v1675
        %v1677 = vpop.f32.mrb[0].mxu0
        %1678 = vmatprep.mubr.f32.mxu0 0.0
        %1679 = vmatmul.mubr.f32.gmra.mrb[0].mxu0 %v1560
        %v1680 = vpop.f32.mrb[0].mxu0
        %v1681 = vadd.f32 0.0, %v1680
        %v1682 = vpop.f32.mrb[0].mxu0
        %1683 = vmatprep.mubr.f32.mxu0 0.0
        %1684 = vmatmul.mubr.f32.gmra.mrb[0].mxu0 %v1563
        %v1685 = vpop.f32.mrb[0].mxu0
        %v1686 = vadd.f32 0.0, %v1685
        %v1687 = vpop.f32.mrb[0].mxu0
        %1688 = vmatprep.mubr.f32.mxu0 0.0
        %1689 = vmatmul.mubr.f32.gmra.mrb[0].mxu0 %v1566
        %v1690 = vpop.f32.mrb[0].mxu0
        %v1691 = vadd.f32 0.0, %v1690
        %v1692 = vpop.f32.mrb[0].mxu0
        %1693 = vmatprep.mubr.f32.mxu0 0.0
        %1694 = vmatmul.mubr.f32.gmra.mrb[0].mxu0 %v1569
        %v1695 = vpop.f32.mrb[0].mxu0
        %v1696 = vadd.f32 0.0, %v1695
        %v1697 = vpop.f32.mrb[0].mxu0
        %1698 = vmatprep.mubr.f32.mxu0 0.0
        %1699 = vmatmul.mubr.f32.gmra.mrb[0].mxu0 %v1572
        %v1700 = vpop.f32.mrb[0].mxu0
        %v1701 = vadd.f32 0.0, %v1700
        %v1702 = vpop.f32.mrb[0].mxu0
        %1703 = vdwg.mxu0
        %v1705 = vsel %vm1534, %v837, 0
        %v1708 = vsel %vm1534, %v838, 0
        %v1711 = vsel %vm1534, %v839, 0
        %v1714 = vsel %vm1534, %v840, 0
        %v1717 = vsel %vm1534, %v841, 0
        %v1720 = vsel %vm1534, %v842, 0
        %v1723 = vsel %vm1534, %v843, 0
        %v1726 = vsel %vm1534, %v844, 0
        %v1729 = vsel %vm1534, %v845, 0
        %v1732 = vsel %vm1534, %v846, 0
        %v1735 = vsel %vm1534, %v847, 0
        %v1738 = vsel %vm1534, %v848, 0
        %v1741 = vsel %vm1534, %v849, 0
        %1743 = vmatprep.subr.mxu0 0.0
        %1744 = vmatpush1.msra.mxu0 %v1526
        %1745 = vmatprep.subr.mxu0 0.0
        %1746 = vmatpush1.msra.mxu0 %v1527
        %1747 = vmatprep.subr.mxu0 0.0
        %1748 = vmatpush1.msra.mxu0 %v1528
        %1749 = vmatprep.subr.mxu0 0.0
        %1750 = vmatpush1.msra.mxu0 %v1529
        %1751 = vmatprep.subr.mxu0 0.0
        %1752 = vmatpush1.msra.mxu0 0.0
        %1753 = vmatprep.subr.mxu0 0.0
        %1754 = vmatpush1.msra.mxu0 0.0
        %1755 = vmatprep.subr.mxu0 0.0
        %1756 = vmatpush1.msra.mxu0 0.0
        %1757 = vmatprep.subr.mxu0 0.0
        %1758 = vmatpush1.msra.mxu0 0.0
        %1759 = vmatprep.subr.mxu0 0.0
        %1760 = vmatpush1.msra.mxu0 0.0
        %1761 = vmatprep.subr.mxu0 0.0
        %1762 = vmatpush1.msra.mxu0 0.0
        %1763 = vmatprep.subr.mxu0 0.0
        %1764 = vmatpush1.msra.mxu0 0.0
        %1765 = vmatprep.subr.mxu0 0.0
        %1766 = vmatpush1.msra.mxu0 0.0
        %1767 = vmatprep.subr.mxu0 0.0
        %1768 = vmatpush1.msra.mxu0 0.0
        %1769 = vmatprep.subr.mxu0 0.0
        %1770 = vmatpush1.msra.mxu0 0.0
        %1771 = vmatprep.subr.mxu0 0.0
        %1772 = vmatpush1.msra.mxu0 0.0
        %1773 = vmatprep.subr.mxu0 0.0
        %1774 = vmatpush1.msra.mxu0 0.0
        %1775 = vmatprep.subr.mxu0 0.0
        %1776 = vmatpush1.msra.mxu0 0.0
        %1777 = vmatprep.subr.mxu0 0.0
        %1778 = vmatpush1.msra.mxu0 0.0
        %1779 = vmatprep.subr.mxu0 0.0
        %1780 = vmatpush1.msra.mxu0 0.0
        %1781 = vmatprep.subr.mxu0 0.0
        %1782 = vmatpush1.msra.mxu0 0.0
        %1783 = vmatprep.subr.mxu0 0.0
        %1784 = vmatpush1.msra.mxu0 0.0
        %1785 = vmatprep.subr.mxu0 0.0
        %1786 = vmatpush1.msra.mxu0 0.0
        %1787 = vmatprep.subr.mxu0 0.0
        %1788 = vmatpush1.msra.mxu0 0.0
        %1789 = vmatprep.subr.mxu0 0.0
        %1790 = vmatpush1.msra.mxu0 0.0
        %1791 = vmatprep.subr.mxu0 0.0
        %1792 = vmatpush1.msra.mxu0 0.0
        %1793 = vmatprep.subr.mxu0 0.0
        %1794 = vmatpush1.msra.mxu0 0.0
        %1795 = vmatprep.subr.mxu0 0.0
        %1796 = vmatpush1.msra.mxu0 0.0
        %1797 = vmatprep.subr.mxu0 0.0
        %1798 = vmatpush1.msra.mxu0 0.0
        %1799 = vmatprep.subr.mxu0 0.0
        %1800 = vmatpush1.msra.mxu0 0.0
        %1801 = vmatprep.subr.mxu0 0.0
        %1802 = vmatpush1.msra.mxu0 0.0
        %1803 = vmatprep.subr.mxu0 0.0
        %1804 = vmatpush1.msra.mxu0 0.0
        %1805 = vmatprep.subr.mxu0 0.0
        %1806 = vmatpush1.msra.mxu0 0.0
        %1807 = vmatprep.mubr.f32.mxu0 0.0
        %1808 = vmatmul.mubr.f32.gmra.mrb[0].mxu0 %v1705
        %v1809 = vpop.f32.mrb[0].mxu0
        %v1810 = vadd.f32 %v1641, %v1809
        %v1811 = vpop.f32.mrb[0].mxu0
        %1812 = vmatprep.mubr.f32.mxu0 0.0
        %1813 = vmatmul.mubr.f32.gmra.mrb[0].mxu0 %v1708
        %v1814 = vpop.f32.mrb[0].mxu0
        %v1815 = vadd.f32 %v1646, %v1814
        %v1816 = vpop.f32.mrb[0].mxu0
        %1817 = vmatprep.mubr.f32.mxu0 0.0
        %1818 = vmatmul.mubr.f32.gmra.mrb[0].mxu0 %v1711
        %v1819 = vpop.f32.mrb[0].mxu0
        %v1820 = vadd.f32 %v1651, %v1819
        %v1821 = vpop.f32.mrb[0].mxu0
        %1822 = vmatprep.mubr.f32.mxu0 0.0
        %1823 = vmatmul.mubr.f32.gmra.mrb[0].mxu0 %v1714
        %v1824 = vpop.f32.mrb[0].mxu0
        %v1825 = vadd.f32 %v1656, %v1824
        %v1826 = vpop.f32.mrb[0].mxu0
        %1827 = vmatprep.mubr.f32.mxu0 0.0
        %1828 = vmatmul.mubr.f32.gmra.mrb[0].mxu0 %v1717
        %v1829 = vpop.f32.mrb[0].mxu0
        %v1830 = vadd.f32 %v1661, %v1829
        %v1831 = vpop.f32.mrb[0].mxu0
        %1832 = vmatprep.mubr.f32.mxu0 0.0
        %1833 = vmatmul.mubr.f32.gmra.mrb[0].mxu0 %v1720
        %v1834 = vpop.f32.mrb[0].mxu0
        %v1835 = vadd.f32 %v1666, %v1834
        %v1836 = vpop.f32.mrb[0].mxu0
        %1837 = vmatprep.mubr.f32.mxu0 0.0
        %1838 = vmatmul.mubr.f32.gmra.mrb[0].mxu0 %v1723
        %v1839 = vpop.f32.mrb[0].mxu0
        %v1840 = vadd.f32 %v1671, %v1839
        %v1841 = vpop.f32.mrb[0].mxu0
        %1842 = vmatprep.mubr.f32.mxu0 0.0
        %1843 = vmatmul.mubr.f32.gmra.mrb[0].mxu0 %v1726
        %v1844 = vpop.f32.mrb[0].mxu0
        %v1845 = vadd.f32 %v1676, %v1844
        %v1846 = vpop.f32.mrb[0].mxu0
        %1847 = vmatprep.mubr.f32.mxu0 0.0
        %1848 = vmatmul.mubr.f32.gmra.mrb[0].mxu0 %v1729
        %v1849 = vpop.f32.mrb[0].mxu0
        %v1850 = vadd.f32 %v1681, %v1849
        %v1851 = vpop.f32.mrb[0].mxu0
        %1852 = vmatprep.mubr.f32.mxu0 0.0
        %1853 = vmatmul.mubr.f32.gmra.mrb[0].mxu0 %v1732
        %v1854 = vpop.f32.mrb[0].mxu0
        %v1855 = vadd.f32 %v1686, %v1854
        %v1856 = vpop.f32.mrb[0].mxu0
        %1857 = vmatprep.mubr.f32.mxu0 0.0
        %1858 = vmatmul.mubr.f32.gmra.mrb[0].mxu0 %v1735
        %v1859 = vpop.f32.mrb[0].mxu0
        %v1860 = vadd.f32 %v1691, %v1859
        %v1861 = vpop.f32.mrb[0].mxu0
        %1862 = vmatprep.mubr.f32.mxu0 0.0
        %1863 = vmatmul.mubr.f32.gmra.mrb[0].mxu0 %v1738
        %v1864 = vpop.f32.mrb[0].mxu0
        %v1865 = vadd.f32 %v1696, %v1864
        %v1866 = vpop.f32.mrb[0].mxu0
        %1867 = vmatprep.mubr.f32.mxu0 0.0
        %1868 = vmatmul.mubr.f32.gmra.mrb[0].mxu0 %v1741
        %v1869 = vpop.f32.mrb[0].mxu0
        %v1870 = vadd.f32 %v1701, %v1869
        %v1871 = vpop.f32.mrb[0].mxu0
        %1872 = vdwg.mxu0
        %v1874 = vsel %vm1534, %v1513, 0
        %v1877 = vsel %vm1534, %v1514, 0
        %v1880 = vsel %vm1534, %v1515, 0
        %v1883 = vsel %vm1534, %v1516, 0
        %v1886 = vsel %vm1534, %v1517, 0
        %v1889 = vsel %vm1534, %v1518, 0
        %v1892 = vsel %vm1534, %v1519, 0
        %v1895 = vsel %vm1534, %v1520, 0
        %v1898 = vsel %vm1534, %v1521, 0
        %v1901 = vsel %vm1534, %v1522, 0
        %v1904 = vsel %vm1534, %v1523, 0
        %v1907 = vsel %vm1534, %v1524, 0
        %v1910 = vsel %vm1534, %v1525, 0
        %1912 = vmatprep.subr.mxu0 0.0
        %1913 = vmatpush1.msra.mxu0 %v1530
        %1914 = vmatprep.subr.mxu0 0.0
        %1915 = vmatpush1.msra.mxu0 %v1531
        %1916 = vmatprep.subr.mxu0 0.0
        %1917 = vmatpush1.msra.mxu0 %v1532
        %1918 = vmatprep.subr.mxu0 0.0
        %1919 = vmatpush1.msra.mxu0 %v1533
        %1920 = vmatprep.subr.mxu0 0.0
        %1921 = vmatpush1.msra.mxu0 0.0
        %1922 = vmatprep.subr.mxu0 0.0
        %1923 = vmatpush1.msra.mxu0 0.0
        %1924 = vmatprep.subr.mxu0 0.0
        %1925 = vmatpush1.msra.mxu0 0.0
        %1926 = vmatprep.subr.mxu0 0.0
        %1927 = vmatpush1.msra.mxu0 0.0
        %1928 = vmatprep.subr.mxu0 0.0
        %1929 = vmatpush1.msra.mxu0 0.0
        %1930 = vmatprep.subr.mxu0 0.0
        %1931 = vmatpush1.msra.mxu0 0.0
        %1932 = vmatprep.subr.mxu0 0.0
        %1933 = vmatpush1.msra.mxu0 0.0
        %1934 = vmatprep.subr.mxu0 0.0
        %1935 = vmatpush1.msra.mxu0 0.0
        %1936 = vmatprep.subr.mxu0 0.0
        %1937 = vmatpush1.msra.mxu0 0.0
        %1938 = vmatprep.subr.mxu0 0.0
        %1939 = vmatpush1.msra.mxu0 0.0
        %1940 = vmatprep.subr.mxu0 0.0
        %1941 = vmatpush1.msra.mxu0 0.0
        %1942 = vmatprep.subr.mxu0 0.0
        %1943 = vmatpush1.msra.mxu0 0.0
        %1944 = vmatprep.subr.mxu0 0.0
        %1945 = vmatpush1.msra.mxu0 0.0
        %1946 = vmatprep.subr.mxu0 0.0
        %1947 = vmatpush1.msra.mxu0 0.0
        %1948 = vmatprep.subr.mxu0 0.0
        %1949 = vmatpush1.msra.mxu0 0.0
        %1950 = vmatprep.subr.mxu0 0.0
        %1951 = vmatpush1.msra.mxu0 0.0
        %1952 = vmatprep.subr.mxu0 0.0
        %1953 = vmatpush1.msra.mxu0 0.0
        %1954 = vmatprep.subr.mxu0 0.0
        %1955 = vmatpush1.msra.mxu0 0.0
        %1956 = vmatprep.subr.mxu0 0.0
        %1957 = vmatpush1.msra.mxu0 0.0
        %1958 = vmatprep.subr.mxu0 0.0
        %1959 = vmatpush1.msra.mxu0 0.0
        %1960 = vmatprep.subr.mxu0 0.0
        %1961 = vmatpush1.msra.mxu0 0.0
        %1962 = vmatprep.subr.mxu0 0.0
        %1963 = vmatpush1.msra.mxu0 0.0
        %1964 = vmatprep.subr.mxu0 0.0
        %1965 = vmatpush1.msra.mxu0 0.0
        %1966 = vmatprep.subr.mxu0 0.0
        %1967 = vmatpush1.msra.mxu0 0.0
        %1968 = vmatprep.subr.mxu0 0.0
        %1969 = vmatpush1.msra.mxu0 0.0
        %1970 = vmatprep.subr.mxu0 0.0
        %1971 = vmatpush1.msra.mxu0 0.0
        %1972 = vmatprep.subr.mxu0 0.0
        %1973 = vmatpush1.msra.mxu0 0.0
        %1974 = vmatprep.subr.mxu0 0.0
        %1975 = vmatpush1.msra.mxu0 0.0
        %1976 = vmatprep.mubr.f32.mxu0 0.0
        %1977 = vmatmul.mubr.f32.gmra.mrb[0].mxu0 %v1874
        %v1978 = vpop.f32.mrb[0].mxu0
        %v1979 = vadd.f32 0.0, %v1978
        %v1980 = vpop.f32.mrb[0].mxu0
        %1981 = vmatprep.mubr.f32.mxu0 0.0
        %1982 = vmatmul.mubr.f32.gmra.mrb[0].mxu0 %v1877
        %v1983 = vpop.f32.mrb[0].mxu0
        %v1984 = vadd.f32 0.0, %v1983
        %v1985 = vpop.f32.mrb[0].mxu0
        %1986 = vmatprep.mubr.f32.mxu0 0.0
        %1987 = vmatmul.mubr.f32.gmra.mrb[0].mxu0 %v1880
        %v1988 = vpop.f32.mrb[0].mxu0
        %v1989 = vadd.f32 0.0, %v1988
        %v1990 = vpop.f32.mrb[0].mxu0
        %1991 = vmatprep.mubr.f32.mxu0 0.0
        %1992 = vmatmul.mubr.f32.gmra.mrb[0].mxu0 %v1883
        %v1993 = vpop.f32.mrb[0].mxu0
        %v1994 = vadd.f32 0.0, %v1993
        %v1995 = vpop.f32.mrb[0].mxu0
        %1996 = vmatprep.mubr.f32.mxu0 0.0
        %1997 = vmatmul.mubr.f32.gmra.mrb[0].mxu0 %v1886
        %v1998 = vpop.f32.mrb[0].mxu0
        %v1999 = vadd.f32 0.0, %v1998
        %v2000 = vpop.f32.mrb[0].mxu0
        %2001 = vmatprep.mubr.f32.mxu0 0.0
        %2002 = vmatmul.mubr.f32.gmra.mrb[0].mxu0 %v1889
        %v2003 = vpop.f32.mrb[0].mxu0
        %v2004 = vadd.f32 0.0, %v2003
        %v2005 = vpop.f32.mrb[0].mxu0
        %2006 = vmatprep.mubr.f32.mxu0 0.0
        %2007 = vmatmul.mubr.f32.gmra.mrb[0].mxu0 %v1892
        %v2008 = vpop.f32.mrb[0].mxu0
        %v2009 = vadd.f32 0.0, %v2008
        %v2010 = vpop.f32.mrb[0].mxu0
        %2011 = vmatprep.mubr.f32.mxu0 0.0
        %2012 = vmatmul.mubr.f32.gmra.mrb[0].mxu0 %v1895
        %v2013 = vpop.f32.mrb[0].mxu0
        %v2014 = vadd.f32 0.0, %v2013
        %v2015 = vpop.f32.mrb[0].mxu0
        %2016 = vmatprep.mubr.f32.mxu0 0.0
        %2017 = vmatmul.mubr.f32.gmra.mrb[0].mxu0 %v1898
        %v2018 = vpop.f32.mrb[0].mxu0
        %v2019 = vadd.f32 0.0, %v2018
        %v2020 = vpop.f32.mrb[0].mxu0
        %2021 = vmatprep.mubr.f32.mxu0 0.0
        %2022 = vmatmul.mubr.f32.gmra.mrb[0].mxu0 %v1901
        %v2023 = vpop.f32.mrb[0].mxu0
        %v2024 = vadd.f32 0.0, %v2023
        %v2025 = vpop.f32.mrb[0].mxu0
        %2026 = vmatprep.mubr.f32.mxu0 0.0
        %2027 = vmatmul.mubr.f32.gmra.mrb[0].mxu0 %v1904
        %v2028 = vpop.f32.mrb[0].mxu0
        %v2029 = vadd.f32 0.0, %v2028
        %v2030 = vpop.f32.mrb[0].mxu0
        %2031 = vmatprep.mubr.f32.mxu0 0.0
        %2032 = vmatmul.mubr.f32.gmra.mrb[0].mxu0 %v1907
        %v2033 = vpop.f32.mrb[0].mxu0
        %v2034 = vadd.f32 0.0, %v2033
        %v2035 = vpop.f32.mrb[0].mxu0
        %2036 = vmatprep.mubr.f32.mxu0 0.0
        %2037 = vmatmul.mubr.f32.gmra.mrb[0].mxu0 %v1910
        %v2038 = vpop.f32.mrb[0].mxu0
        %v2039 = vadd.f32 0.0, %v2038
        %v2040 = vpop.f32.mrb[0].mxu0
        %2041 = vdwg.mxu0
        %2042 = vmatprep.subr.mxu0 0.0
        %2043 = vmatpush1.msra.mxu0 %v1526
        %2044 = vmatprep.subr.mxu0 0.0
        %2045 = vmatpush1.msra.mxu0 %v1527
        %2046 = vmatprep.subr.mxu0 0.0
        %2047 = vmatpush1.msra.mxu0 %v1528
        %2048 = vmatprep.subr.mxu0 0.0
        %2049 = vmatpush1.msra.mxu0 %v1529
        %2050 = vmatprep.subr.mxu0 0.0
        %2051 = vmatpush1.msra.mxu0 0.0
        %2052 = vmatprep.subr.mxu0 0.0
        %2053 = vmatpush1.msra.mxu0 0.0
        %2054 = vmatprep.subr.mxu0 0.0
        %2055 = vmatpush1.msra.mxu0 0.0
        %2056 = vmatprep.subr.mxu0 0.0
        %2057 = vmatpush1.msra.mxu0 0.0
        %2058 = vmatprep.subr.mxu0 0.0
        %2059 = vmatpush1.msra.mxu0 0.0
        %2060 = vmatprep.subr.mxu0 0.0
        %2061 = vmatpush1.msra.mxu0 0.0
        %2062 = vmatprep.subr.mxu0 0.0
        %2063 = vmatpush1.msra.mxu0 0.0
        %2064 = vmatprep.subr.mxu0 0.0
        %2065 = vmatpush1.msra.mxu0 0.0
        %2066 = vmatprep.subr.mxu0 0.0
        %2067 = vmatpush1.msra.mxu0 0.0
        %2068 = vmatprep.subr.mxu0 0.0
        %2069 = vmatpush1.msra.mxu0 0.0
        %2070 = vmatprep.subr.mxu0 0.0
        %2071 = vmatpush1.msra.mxu0 0.0
        %2072 = vmatprep.subr.mxu0 0.0
        %2073 = vmatpush1.msra.mxu0 0.0
        %2074 = vmatprep.subr.mxu0 0.0
        %2075 = vmatpush1.msra.mxu0 0.0
        %2076 = vmatprep.subr.mxu0 0.0
        %2077 = vmatpush1.msra.mxu0 0.0
        %2078 = vmatprep.subr.mxu0 0.0
        %2079 = vmatpush1.msra.mxu0 0.0
        %2080 = vmatprep.subr.mxu0 0.0
        %2081 = vmatpush1.msra.mxu0 0.0
        %2082 = vmatprep.subr.mxu0 0.0
        %2083 = vmatpush1.msra.mxu0 0.0
        %2084 = vmatprep.subr.mxu0 0.0
        %2085 = vmatpush1.msra.mxu0 0.0
        %2086 = vmatprep.subr.mxu0 0.0
        %2087 = vmatpush1.msra.mxu0 0.0
        %2088 = vmatprep.subr.mxu0 0.0
        %2089 = vmatpush1.msra.mxu0 0.0
        %2090 = vmatprep.subr.mxu0 0.0
        %2091 = vmatpush1.msra.mxu0 0.0
        %2092 = vmatprep.subr.mxu0 0.0
        %2093 = vmatpush1.msra.mxu0 0.0
        %2094 = vmatprep.subr.mxu0 0.0
        %2095 = vmatpush1.msra.mxu0 0.0
        %2096 = vmatprep.subr.mxu0 0.0
        %2097 = vmatpush1.msra.mxu0 0.0
        %2098 = vmatprep.subr.mxu0 0.0
        %2099 = vmatpush1.msra.mxu0 0.0
        %2100 = vmatprep.subr.mxu0 0.0
        %2101 = vmatpush1.msra.mxu0 0.0
        %2102 = vmatprep.subr.mxu0 0.0
        %2103 = vmatpush1.msra.mxu0 0.0
        %2104 = vmatprep.subr.mxu0 0.0
        %2105 = vmatpush1.msra.mxu0 0.0
        %2106 = vmatprep.mubr.f32.mxu0 0.0
        %2107 = vmatmul.mubr.f32.gmra.mrb[0].mxu0 %v1536
        %v2108 = vpop.f32.mrb[0].mxu0
        %v2109 = vadd.f32 %v1979, %v2108
        %v2110 = vpop.f32.mrb[0].mxu0
        %2111 = vmatprep.mubr.f32.mxu0 0.0
        %2112 = vmatmul.mubr.f32.gmra.mrb[0].mxu0 %v1539
        %v2113 = vpop.f32.mrb[0].mxu0
        %v2114 = vadd.f32 %v1984, %v2113
        %v2115 = vpop.f32.mrb[0].mxu0
        %2116 = vmatprep.mubr.f32.mxu0 0.0
        %2117 = vmatmul.mubr.f32.gmra.mrb[0].mxu0 %v1542
        %v2118 = vpop.f32.mrb[0].mxu0
        %v2119 = vadd.f32 %v1989, %v2118
        %v2120 = vpop.f32.mrb[0].mxu0
        %2121 = vmatprep.mubr.f32.mxu0 0.0
        %2122 = vmatmul.mubr.f32.gmra.mrb[0].mxu0 %v1545
        %v2123 = vpop.f32.mrb[0].mxu0
        %v2124 = vadd.f32 %v1994, %v2123
        %v2125 = vpop.f32.mrb[0].mxu0
        %2126 = vmatprep.mubr.f32.mxu0 0.0
        %2127 = vmatmul.mubr.f32.gmra.mrb[0].mxu0 %v1548
        %v2128 = vpop.f32.mrb[0].mxu0
        %v2129 = vadd.f32 %v1999, %v2128
        %v2130 = vpop.f32.mrb[0].mxu0
        %2131 = vmatprep.mubr.f32.mxu0 0.0
        %2132 = vmatmul.mubr.f32.gmra.mrb[0].mxu0 %v1551
        %v2133 = vpop.f32.mrb[0].mxu0
        %v2134 = vadd.f32 %v2004, %v2133
        %v2135 = vpop.f32.mrb[0].mxu0
        %2136 = vmatprep.mubr.f32.mxu0 0.0
        %2137 = vmatmul.mubr.f32.gmra.mrb[0].mxu0 %v1554
        %v2138 = vpop.f32.mrb[0].mxu0
        %v2139 = vadd.f32 %v2009, %v2138
        %v2140 = vpop.f32.mrb[0].mxu0
        %2141 = vmatprep.mubr.f32.mxu0 0.0
        %2142 = vmatmul.mubr.f32.gmra.mrb[0].mxu0 %v1557
        %v2143 = vpop.f32.mrb[0].mxu0
        %v2144 = vadd.f32 %v2014, %v2143
        %v2145 = vpop.f32.mrb[0].mxu0
        %2146 = vmatprep.mubr.f32.mxu0 0.0
        %2147 = vmatmul.mubr.f32.gmra.mrb[0].mxu0 %v1560
        %v2148 = vpop.f32.mrb[0].mxu0
        %v2149 = vadd.f32 %v2019, %v2148
        %v2150 = vpop.f32.mrb[0].mxu0
        %2151 = vmatprep.mubr.f32.mxu0 0.0
        %2152 = vmatmul.mubr.f32.gmra.mrb[0].mxu0 %v1563
        %v2153 = vpop.f32.mrb[0].mxu0
        %v2154 = vadd.f32 %v2024, %v2153
        %v2155 = vpop.f32.mrb[0].mxu0
        %2156 = vmatprep.mubr.f32.mxu0 0.0
        %2157 = vmatmul.mubr.f32.gmra.mrb[0].mxu0 %v1566
        %v2158 = vpop.f32.mrb[0].mxu0
        %v2159 = vadd.f32 %v2029, %v2158
        %v2160 = vpop.f32.mrb[0].mxu0
        %2161 = vmatprep.mubr.f32.mxu0 0.0
        %2162 = vmatmul.mubr.f32.gmra.mrb[0].mxu0 %v1569
        %v2163 = vpop.f32.mrb[0].mxu0
        %v2164 = vadd.f32 %v2034, %v2163
        %v2165 = vpop.f32.mrb[0].mxu0
        %2166 = vmatprep.mubr.f32.mxu0 0.0
        %2167 = vmatmul.mubr.f32.gmra.mrb[0].mxu0 %v1572
        %v2168 = vpop.f32.mrb[0].mxu0
        %v2169 = vadd.f32 %v2039, %v2168
        %v2170 = vpop.f32.mrb[0].mxu0
        %2171 = vdwg.mxu0
        %v2172 = vmax.f32 %v1810, %v2109
        %v2173 = vmax.f32 %v1815, %v2114
        %v2174 = vmax.f32 %v1820, %v2119
        %v2175 = vmax.f32 %v1825, %v2124
        %v2176 = vmax.f32 %v1830, %v2129
        %v2177 = vmax.f32 %v1835, %v2134
        %v2178 = vmax.f32 %v1840, %v2139
        %v2179 = vmax.f32 %v1845, %v2144
        %v2180 = vmax.f32 %v1850, %v2149
        %v2181 = vmax.f32 %v1855, %v2154
        %v2182 = vmax.f32 %v1860, %v2159
        %v2183 = vmax.f32 %v1865, %v2164
        %v2184 = vmax.f32 %v1870, %v2169
        %v2185 = vld [vmem:[#allocation6] sm:$0x1]
        %v2187 = vlaneseq
        %v2188 = vshrl.u32 %v2187, 7
        %v2189 = vsub.s32 0, %v2188
        %v2190 = vrot.slane %v2185, %v2189
        %v2192 = vadd.f32 %v2172, %v2190
        %v2193 = vadd.f32 %v2173, %v2190
        %v2194 = vadd.f32 %v2174, %v2190
        %v2195 = vadd.f32 %v2175, %v2190
        %v2196 = vadd.f32 %v2176, %v2190
        %v2197 = vadd.f32 %v2177, %v2190
        %v2198 = vadd.f32 %v2178, %v2190
        %v2199 = vadd.f32 %v2179, %v2190
        %v2200 = vadd.f32 %v2180, %v2190
        %v2201 = vadd.f32 %v2181, %v2190
        %v2202 = vadd.f32 %v2182, %v2190
        %v2203 = vadd.f32 %v2183, %v2190
        %v2204 = vadd.f32 %v2184, %v2190
        %v2205 = vmax.f32 %v2192, 0.0
        %v2206 = vmax.f32 %v2193, 0.0
        %v2207 = vmax.f32 %v2194, 0.0
        %v2208 = vmax.f32 %v2195, 0.0
        %v2209 = vmax.f32 %v2196, 0.0
        %v2210 = vmax.f32 %v2197, 0.0
        %v2211 = vmax.f32 %v2198, 0.0
        %v2212 = vmax.f32 %v2199, 0.0
        %v2213 = vmax.f32 %v2200, 0.0
        %v2214 = vmax.f32 %v2201, 0.0
        %v2215 = vmax.f32 %v2202, 0.0
        %v2216 = vmax.f32 %v2203, 0.0
        %v2217 = vmax.f32 %v2204, 0.0
        %vm2218 = vcmask 523264
        %2219 = vst.msk [vmem:[%s289] sm:$0xff] %vm2218, %v2205
        %2220 = vst.msk [vmem:[%s289 + $0x8] sm:$0xff] %vm2218, %v2206
        %2221 = vst.msk [vmem:[%s289 + $0x10] sm:$0xff] %vm2218, %v2207
        %2222 = vst.msk [vmem:[%s289 + $0x18] sm:$0xff] %vm2218, %v2208
        %2223 = vst.msk [vmem:[%s289 + $0x20] sm:$0xff] %vm2218, %v2209
        %2224 = vst.msk [vmem:[%s289 + $0x28] sm:$0xff] %vm2218, %v2210
        %2225 = vst.msk [vmem:[%s289 + $0x30] sm:$0xff] %vm2218, %v2211
        %2226 = vst.msk [vmem:[%s289 + $0x38] sm:$0xff] %vm2218, %v2212
        %2227 = vst.msk [vmem:[%s289 + $0x40] sm:$0xff] %vm2218, %v2213
        %2228 = vst.msk [vmem:[%s289 + $0x48] sm:$0xff] %vm2218, %v2214
        %2229 = vst.msk [vmem:[%s289 + $0x50] sm:$0xff] %vm2218, %v2215
        %2230 = vst.msk [vmem:[%s289 + $0x58] sm:$0xff] %vm2218, %v2216
        %vm2231 = vcmask 521216
        %2232 = vst.msk [vmem:[%s289 + $0x60] sm:$0x3f] %vm2231, %v2217
        %p2233 = scmp.lt.s32.totalorder %s19, 1
        %s2234 = scalar_select %p2233, %s19, 1
        %s2235 = smul.addr %s2234, 13
        %s2236 = smul.addr %s2235, 8
        %s2237 = scalar_lea.vmem %s6, %s2236
        // Predicated region
        $region57: #{csi1dcnn_forward.2} parent=43 // pred_check
          %p2238 = pneg %p168
        $region58: #{csi1dcnn_forward.2} parent=43 // pred_check_branch
          %2240 = sbr.rel (%p2238) target = $region60
        $region59: #{csi1dcnn_forward.2} parent=43 // pred_region
          _
        $region60: #{csi1dcnn_forward.2} parent=43 // pred_fallthru
          _
      $region44: #{csi1dcnn_forward.2} parent=5 // pred_fallthru
        _
      %p2241 = scmp.le.s32.totalorder 2, %s14
      // Predicated region
      $region61: #{csi1dcnn_forward.2} parent=5 // pred_check
        %p2242 = pneg %p2241
      $region62: #{csi1dcnn_forward.2} parent=5 // pred_check_branch
        %2244 = sbr.rel (%p2242) target = $region64
      $region63: #{csi1dcnn_forward.2} parent=5 // pred_region
        %s2245 = ssub.s32 %s14, 2
        // Predicated region
        $region65: #{csi1dcnn_forward.2} parent=63 // pred_check
          %p2246 = pneg %p174
        $region66: #{csi1dcnn_forward.2} parent=63 // pred_check_branch
          %2248 = sbr.rel (%p2246) target = $region68
        $region67: #{csi1dcnn_forward.2} parent=63 // pred_region
          %p2249 = scmp.lt.s32.totalorder %s20, 1
          %s2250 = scalar_select %p2249, %s20, 1
          %s2251 = smul.addr %s2250, 13
          %s2252 = smul.addr %s2251, 8
          %s2253 = scalar_lea.vmem %s6, %s2252
        $region68: #{csi1dcnn_forward.2} parent=63 // pred_fallthru
          _
      $region64: #{csi1dcnn_forward.2} parent=5 // pred_fallthru
        _
    $region6: #{csi1dcnn_forward.2} parent=1 // loop_footer
      %s18 = sadd.s32 1, %s14
    $region7: #{csi1dcnn_forward.2} parent=1 // loop_footer_branch
      %13 = sbr.rel target = $region3
    $region8: #{csi1dcnn_forward.2} parent=1 // loop_exit
      _
    %2254 = vsyncpa [#allocation3], 1
    %s2255 = scalar_lea.sflag [#allocation3], 1
    %2256 = vsyncpa %s2255, 1
    %2257 = vsyncpa [#allocation5], 1

// kernel: csi1dcnn_forward.3
$region0: #{csi1dcnn_forward.3}
  #allocation0 [shape = 'u32[]', space=smem, size = 0x4, offset = 0x4, fixed_abs, tag = 'smem constant byte address 0x4 - core index']
  #allocation1 [shape = 'u32[144,128]{1,0:T(1,128)}', space=vmem, size = 0x12000, scoped, tag = 'internal scratch']
  %s0 = inlined_call_operand.vmem [shape: f32[8,6528], index: 0, kind: input, shape index: {}]
  %s1 = inlined_call_operand.vmem [shape: f32[6528,64], index: 1, kind: input, shape index: {}]
  %s2 = inlined_call_operand.vmem [shape: f32[1,64], index: 2, kind: input, shape index: {}]
  %s3 = inlined_call_operand.vmem [shape: f32[64,128], index: 3, kind: input, shape index: {}]
  %s4 = inlined_call_operand.vmem [shape: f32[1,128], index: 4, kind: input, shape index: {}]
  %s5 = inlined_call_operand.vmem [shape: f32[8,128], index: 5, kind: output, shape index: {}]
  %s6 = sld [smem:[#allocation0]]
  $region30: #{csi1dcnn_forward.3} parent=0
    _
  %s8 = ssub.s32 1, %s6
  %s9 = scalar_select 0, %s8, %s6
  // Predicated region
  $region2: #{csi1dcnn_forward.3} parent=0 // pred_check
    _
  $region3: #{csi1dcnn_forward.3} parent=0 // pred_check_branch
    %11 = sbr.rel (0) target = $region5
  $region4: #{csi1dcnn_forward.3} parent=0 // pred_region
    _
  $region5: #{csi1dcnn_forward.3} parent=0 // pred_fallthru
    _
  // Predicated region
  $region6: #{csi1dcnn_forward.3} parent=0 // pred_check
    _
  $region7: #{csi1dcnn_forward.3} parent=0 // pred_check_branch
    %13 = sbr.rel (0) target = $region9
  $region8: #{csi1dcnn_forward.3} parent=0 // pred_region
    _
  $region9: #{csi1dcnn_forward.3} parent=0 // pred_fallthru
    _
  // Predicated region
  $region10: #{csi1dcnn_forward.3} parent=0 // pred_check
    _
  $region11: #{csi1dcnn_forward.3} parent=0 // pred_check_branch
    %15 = sbr.rel (0) target = $region13
  $region12: #{csi1dcnn_forward.3} parent=0 // pred_region
    _
  $region13: #{csi1dcnn_forward.3} parent=0 // pred_fallthru
    _
  // Predicated region
  $region14: #{csi1dcnn_forward.3} parent=0 // pred_check
    _
  $region15: #{csi1dcnn_forward.3} parent=0 // pred_check_branch
    %17 = sbr.rel (0) target = $region17
  $region16: #{csi1dcnn_forward.3} parent=0 // pred_region
    _
  $region17: #{csi1dcnn_forward.3} parent=0 // pred_fallthru
    _
  // Predicated region
  $region18: #{csi1dcnn_forward.3} parent=0 // pred_check
    _
  $region19: #{csi1dcnn_forward.3} parent=0 // pred_check_branch
    %19 = sbr.rel (0) target = $region21
  $region20: #{csi1dcnn_forward.3} parent=0 // pred_region
    _
  $region21: #{csi1dcnn_forward.3} parent=0 // pred_fallthru
    _
  %v20 = vld [vmem:[%s0] sm:$0xff]
  %v21 = vld [vmem:[%s0 + $0x8] sm:$0xff]
  %v22 = vld [vmem:[%s0 + $0x10] sm:$0xff]
  %v23 = vld [vmem:[%s0 + $0x18] sm:$0xff]
  %v24 = vld [vmem:[%s0 + $0x20] sm:$0xff]
  %v25 = vld [vmem:[%s0 + $0x28] sm:$0xff]
  %v26 = vld [vmem:[%s0 + $0x30] sm:$0xff]
  %v27 = vld [vmem:[%s0 + $0x38] sm:$0xff]
  %v28 = vld [vmem:[%s0 + $0x40] sm:$0xff]
  %v29 = vld [vmem:[%s0 + $0x48] sm:$0xff]
  %v30 = vld [vmem:[%s0 + $0x50] sm:$0xff]
  %v31 = vld [vmem:[%s0 + $0x58] sm:$0xff]
  %v32 = vld [vmem:[%s0 + $0x60] sm:$0xff]
  %v33 = vld [vmem:[%s0 + $0x68] sm:$0xff]
  %v34 = vld [vmem:[%s0 + $0x70] sm:$0xff]
  %v35 = vld [vmem:[%s0 + $0x78] sm:$0xff]
  %v36 = vld [vmem:[%s0 + $0x80] sm:$0xff]
  %v37 = vld [vmem:[%s0 + $0x88] sm:$0xff]
  %v38 = vld [vmem:[%s0 + $0x90] sm:$0xff]
  %v39 = vld [vmem:[%s0 + $0x98] sm:$0xff]
  %v40 = vld [vmem:[%s0 + $0xa0] sm:$0xff]
  %v41 = vld [vmem:[%s0 + $0xa8] sm:$0xff]
  %v42 = vld [vmem:[%s0 + $0xb0] sm:$0xff]
  %v43 = vld [vmem:[%s0 + $0xb8] sm:$0xff]
  %v44 = vld [vmem:[%s0 + $0xc0] sm:$0xff]
  %v45 = vld [vmem:[%s0 + $0xc8] sm:$0xff]
  %v46 = vld [vmem:[%s0 + $0xd0] sm:$0xff]
  %v47 = vld [vmem:[%s0 + $0xd8] sm:$0xff]
  %v48 = vld [vmem:[%s0 + $0xe0] sm:$0xff]
  %v49 = vld [vmem:[%s0 + $0xe8] sm:$0xff]
  %v50 = vld [vmem:[%s0 + $0xf0] sm:$0xff]
  %v51 = vld [vmem:[%s0 + $0xf8] sm:$0xff]
  %v52 = vld [vmem:[%s0 + $0x100] sm:$0xff]
  %v53 = vld [vmem:[%s0 + $0x108] sm:$0xff]
  %v54 = vld [vmem:[%s0 + $0x110] sm:$0xff]
  %v55 = vld [vmem:[%s0 + $0x118] sm:$0xff]
  %v56 = vld [vmem:[%s0 + $0x120] sm:$0xff]
  %v57 = vld [vmem:[%s0 + $0x128] sm:$0xff]
  %v58 = vld [vmem:[%s0 + $0x130] sm:$0xff]
  %v59 = vld [vmem:[%s0 + $0x138] sm:$0xff]
  %v60 = vld [vmem:[%s0 + $0x140] sm:$0xff]
  %v61 = vld [vmem:[%s0 + $0x148] sm:$0xff]
  %v62 = vld [vmem:[%s0 + $0x150] sm:$0xff]
  %v63 = vld [vmem:[%s0 + $0x158] sm:$0xff]
  %v64 = vld [vmem:[%s0 + $0x160] sm:$0xff]
  %v65 = vld [vmem:[%s0 + $0x168] sm:$0xff]
  %v66 = vld [vmem:[%s0 + $0x170] sm:$0xff]
  %v67 = vld [vmem:[%s0 + $0x178] sm:$0xff]
  %v68 = vld [vmem:[%s0 + $0x180] sm:$0xff]
  %v69 = vld [vmem:[%s0 + $0x188] sm:$0xff]
  %v70 = vld [vmem:[%s0 + $0x190] sm:$0xff]
  %v71 = vld [vmem:[%s1] sm:$0xff]
  %v72 = vld [vmem:[%s1 + $0x8] sm:$0xff]
  %v73 = vld [vmem:[%s1 + $0x10] sm:$0xff]
  %v74 = vld [vmem:[%s1 + $0x18] sm:$0xff]
  %v75 = vld [vmem:[%s1 + $0x20] sm:$0xff]
  %v76 = vld [vmem:[%s1 + $0x28] sm:$0xff]
  %v77 = vld [vmem:[%s1 + $0x30] sm:$0xff]
  %v78 = vld [vmem:[%s1 + $0x38] sm:$0xff]
  %v79 = vld [vmem:[%s1 + $0x40] sm:$0xff]
  %v80 = vld [vmem:[%s1 + $0x48] sm:$0xff]
  %v81 = vld [vmem:[%s1 + $0x50] sm:$0xff]
  %v82 = vld [vmem:[%s1 + $0x58] sm:$0xff]
  %v83 = vld [vmem:[%s1 + $0x60] sm:$0xff]
  %v84 = vld [vmem:[%s1 + $0x68] sm:$0xff]
  %v85 = vld [vmem:[%s1 + $0x70] sm:$0xff]
  %v86 = vld [vmem:[%s1 + $0x78] sm:$0xff]
  %v87 = vld [vmem:[%s1 + $0x80] sm:$0xff]
  %v88 = vld [vmem:[%s1 + $0x88] sm:$0xff]
  %v89 = vld [vmem:[%s1 + $0x90] sm:$0xff]
  %v90 = vld [vmem:[%s1 + $0x98] sm:$0xff]
  %v91 = vld [vmem:[%s1 + $0xa0] sm:$0xff]
  %v92 = vld [vmem:[%s1 + $0xa8] sm:$0xff]
  %v93 = vld [vmem:[%s1 + $0xb0] sm:$0xff]
  %v94 = vld [vmem:[%s1 + $0xb8] sm:$0xff]
  %v95 = vld [vmem:[%s1 + $0xc0] sm:$0xff]
  %v96 = vld [vmem:[%s1 + $0xc8] sm:$0xff]
  %v97 = vld [vmem:[%s1 + $0xd0] sm:$0xff]
  %v98 = vld [vmem:[%s1 + $0xd8] sm:$0xff]
  %v99 = vld [vmem:[%s1 + $0xe0] sm:$0xff]
  %v100 = vld [vmem:[%s1 + $0xe8] sm:$0xff]
  %v101 = vld [vmem:[%s1 + $0xf0] sm:$0xff]
  %v102 = vld [vmem:[%s1 + $0xf8] sm:$0xff]
  %v103 = vld [vmem:[%s1 + $0x100] sm:$0xff]
  %v104 = vld [vmem:[%s1 + $0x108] sm:$0xff]
  %v105 = vld [vmem:[%s1 + $0x110] sm:$0xff]
  %v106 = vld [vmem:[%s1 + $0x118] sm:$0xff]
  %v107 = vld [vmem:[%s1 + $0x120] sm:$0xff]
  %v108 = vld [vmem:[%s1 + $0x128] sm:$0xff]
  %v109 = vld [vmem:[%s1 + $0x130] sm:$0xff]
  %v110 = vld [vmem:[%s1 + $0x138] sm:$0xff]
  %v111 = vld [vmem:[%s1 + $0x140] sm:$0xff]
  %v112 = vld [vmem:[%s1 + $0x148] sm:$0xff]
  %v113 = vld [vmem:[%s1 + $0x150] sm:$0xff]
  %v114 = vld [vmem:[%s1 + $0x158] sm:$0xff]
  %v115 = vld [vmem:[%s1 + $0x160] sm:$0xff]
  %v116 = vld [vmem:[%s1 + $0x168] sm:$0xff]
  %v117 = vld [vmem:[%s1 + $0x170] sm:$0xff]
  %v118 = vld [vmem:[%s1 + $0x178] sm:$0xff]
  %v119 = vld [vmem:[%s1 + $0x180] sm:$0xff]
  %v120 = vld [vmem:[%s1 + $0x188] sm:$0xff]
  %v121 = vld [vmem:[%s1 + $0x190] sm:$0xff]
  %v122 = vld [vmem:[%s1 + $0x198] sm:$0xff]
  %v123 = vld [vmem:[%s1 + $0x1a0] sm:$0xff]
  %v124 = vld [vmem:[%s1 + $0x1a8] sm:$0xff]
  %v125 = vld [vmem:[%s1 + $0x1b0] sm:$0xff]
  %v126 = vld [vmem:[%s1 + $0x1b8] sm:$0xff]
  %v127 = vld [vmem:[%s1 + $0x1c0] sm:$0xff]
  %v128 = vld [vmem:[%s1 + $0x1c8] sm:$0xff]
  %v129 = vld [vmem:[%s1 + $0x1d0] sm:$0xff]
  %v130 = vld [vmem:[%s1 + $0x1d8] sm:$0xff]
  %v131 = vld [vmem:[%s1 + $0x1e0] sm:$0xff]
  %v132 = vld [vmem:[%s1 + $0x1e8] sm:$0xff]
  %v133 = vld [vmem:[%s1 + $0x1f0] sm:$0xff]
  %v134 = vld [vmem:[%s1 + $0x1f8] sm:$0xff]
  %v135 = vld [vmem:[%s1 + $0x200] sm:$0xff]
  %v136 = vld [vmem:[%s1 + $0x208] sm:$0xff]
  %v137 = vld [vmem:[%s1 + $0x210] sm:$0xff]
  %v138 = vld [vmem:[%s1 + $0x218] sm:$0xff]
  %v139 = vld [vmem:[%s1 + $0x220] sm:$0xff]
  %v140 = vld [vmem:[%s1 + $0x228] sm:$0xff]
  %v141 = vld [vmem:[%s1 + $0x230] sm:$0xff]
  %v142 = vld [vmem:[%s1 + $0x238] sm:$0xff]
  %v143 = vld [vmem:[%s1 + $0x240] sm:$0xff]
  %v144 = vld [vmem:[%s1 + $0x248] sm:$0xff]
  %v145 = vld [vmem:[%s1 + $0x250] sm:$0xff]
  %v146 = vld [vmem:[%s1 + $0x258] sm:$0xff]
  %v147 = vld [vmem:[%s1 + $0x260] sm:$0xff]
  %v148 = vld [vmem:[%s1 + $0x268] sm:$0xff]
  %v149 = vld [vmem:[%s1 + $0x270] sm:$0xff]
  %v150 = vld [vmem:[%s1 + $0x278] sm:$0xff]
  %v151 = vld [vmem:[%s1 + $0x280] sm:$0xff]
  %v152 = vld [vmem:[%s1 + $0x288] sm:$0xff]
  %v153 = vld [vmem:[%s1 + $0x290] sm:$0xff]
  %v154 = vld [vmem:[%s1 + $0x298] sm:$0xff]
  %v155 = vld [vmem:[%s1 + $0x2a0] sm:$0xff]
  %v156 = vld [vmem:[%s1 + $0x2a8] sm:$0xff]
  %v157 = vld [vmem:[%s1 + $0x2b0] sm:$0xff]
  %v158 = vld [vmem:[%s1 + $0x2b8] sm:$0xff]
  %v159 = vld [vmem:[%s1 + $0x2c0] sm:$0xff]
  %v160 = vld [vmem:[%s1 + $0x2c8] sm:$0xff]
  %v161 = vld [vmem:[%s1 + $0x2d0] sm:$0xff]
  %v162 = vld [vmem:[%s1 + $0x2d8] sm:$0xff]
  %v163 = vld [vmem:[%s1 + $0x2e0] sm:$0xff]
  %v164 = vld [vmem:[%s1 + $0x2e8] sm:$0xff]
  %v165 = vld [vmem:[%s1 + $0x2f0] sm:$0xff]
  %v166 = vld [vmem:[%s1 + $0x2f8] sm:$0xff]
  %v167 = vld [vmem:[%s1 + $0x300] sm:$0xff]
  %v168 = vld [vmem:[%s1 + $0x308] sm:$0xff]
  %v169 = vld [vmem:[%s1 + $0x310] sm:$0xff]
  %v170 = vld [vmem:[%s1 + $0x318] sm:$0xff]
  %v171 = vld [vmem:[%s1 + $0x320] sm:$0xff]
  %v172 = vld [vmem:[%s1 + $0x328] sm:$0xff]
  %v173 = vld [vmem:[%s1 + $0x330] sm:$0xff]
  %v174 = vld [vmem:[%s1 + $0x338] sm:$0xff]
  %v175 = vld [vmem:[%s1 + $0x340] sm:$0xff]
  %v176 = vld [vmem:[%s1 + $0x348] sm:$0xff]
  %v177 = vld [vmem:[%s1 + $0x350] sm:$0xff]
  %v178 = vld [vmem:[%s1 + $0x358] sm:$0xff]
  %v179 = vld [vmem:[%s1 + $0x360] sm:$0xff]
  %v180 = vld [vmem:[%s1 + $0x368] sm:$0xff]
  %v181 = vld [vmem:[%s1 + $0x370] sm:$0xff]
  %v182 = vld [vmem:[%s1 + $0x378] sm:$0xff]
  %v183 = vld [vmem:[%s1 + $0x380] sm:$0xff]
  %v184 = vld [vmem:[%s1 + $0x388] sm:$0xff]
  %v185 = vld [vmem:[%s1 + $0x390] sm:$0xff]
  %v186 = vld [vmem:[%s1 + $0x398] sm:$0xff]
  %v187 = vld [vmem:[%s1 + $0x3a0] sm:$0xff]
  %v188 = vld [vmem:[%s1 + $0x3a8] sm:$0xff]
  %v189 = vld [vmem:[%s1 + $0x3b0] sm:$0xff]
  %v190 = vld [vmem:[%s1 + $0x3b8] sm:$0xff]
  %v191 = vld [vmem:[%s1 + $0x3c0] sm:$0xff]
  %v192 = vld [vmem:[%s1 + $0x3c8] sm:$0xff]
  %v193 = vld [vmem:[%s1 + $0x3d0] sm:$0xff]
  %v194 = vld [vmem:[%s1 + $0x3d8] sm:$0xff]
  %v195 = vld [vmem:[%s1 + $0x3e0] sm:$0xff]
  %v196 = vld [vmem:[%s1 + $0x3e8] sm:$0xff]
  %v197 = vld [vmem:[%s1 + $0x3f0] sm:$0xff]
  %v198 = vld [vmem:[%s1 + $0x3f8] sm:$0xff]
  %v199 = vld [vmem:[%s1 + $0x400] sm:$0xff]
  %v200 = vld [vmem:[%s1 + $0x408] sm:$0xff]
  %v201 = vld [vmem:[%s1 + $0x410] sm:$0xff]
  %v202 = vld [vmem:[%s1 + $0x418] sm:$0xff]
  %v203 = vld [vmem:[%s1 + $0x420] sm:$0xff]
  %v204 = vld [vmem:[%s1 + $0x428] sm:$0xff]
  %v205 = vld [vmem:[%s1 + $0x430] sm:$0xff]
  %v206 = vld [vmem:[%s1 + $0x438] sm:$0xff]
  %v207 = vld [vmem:[%s1 + $0x440] sm:$0xff]
  %v208 = vld [vmem:[%s1 + $0x448] sm:$0xff]
  %v209 = vld [vmem:[%s1 + $0x450] sm:$0xff]
  %v210 = vld [vmem:[%s1 + $0x458] sm:$0xff]
  %v211 = vld [vmem:[%s1 + $0x460] sm:$0xff]
  %v212 = vld [vmem:[%s1 + $0x468] sm:$0xff]
  %v213 = vld [vmem:[%s1 + $0x470] sm:$0xff]
  %v214 = vld [vmem:[%s1 + $0x478] sm:$0xff]
  %v215 = vld [vmem:[%s1 + $0x480] sm:$0xff]
  %v216 = vld [vmem:[%s1 + $0x488] sm:$0xff]
  %v217 = vld [vmem:[%s1 + $0x490] sm:$0xff]
  %v218 = vld [vmem:[%s1 + $0x498] sm:$0xff]
  %v219 = vld [vmem:[%s1 + $0x4a0] sm:$0xff]
  %v220 = vld [vmem:[%s1 + $0x4a8] sm:$0xff]
  %v221 = vld [vmem:[%s1 + $0x4b0] sm:$0xff]
  %v222 = vld [vmem:[%s1 + $0x4b8] sm:$0xff]
  %v223 = vld [vmem:[%s1 + $0x4c0] sm:$0xff]
  %v224 = vld [vmem:[%s1 + $0x4c8] sm:$0xff]
  %v225 = vld [vmem:[%s1 + $0x4d0] sm:$0xff]
  %v226 = vld [vmem:[%s1 + $0x4d8] sm:$0xff]
  %v227 = vld [vmem:[%s1 + $0x4e0] sm:$0xff]
  %v228 = vld [vmem:[%s1 + $0x4e8] sm:$0xff]
  %v229 = vld [vmem:[%s1 + $0x4f0] sm:$0xff]
  %v230 = vld [vmem:[%s1 + $0x4f8] sm:$0xff]
  %v231 = vld [vmem:[%s1 + $0x500] sm:$0xff]
  %v232 = vld [vmem:[%s1 + $0x508] sm:$0xff]
  %v233 = vld [vmem:[%s1 + $0x510] sm:$0xff]
  %v234 = vld [vmem:[%s1 + $0x518] sm:$0xff]
  %v235 = vld [vmem:[%s1 + $0x520] sm:$0xff]
  %v236 = vld [vmem:[%s1 + $0x528] sm:$0xff]
  %v237 = vld [vmem:[%s1 + $0x530] sm:$0xff]
  %v238 = vld [vmem:[%s1 + $0x538] sm:$0xff]
  %v239 = vld [vmem:[%s1 + $0x540] sm:$0xff]
  %v240 = vld [vmem:[%s1 + $0x548] sm:$0xff]
  %v241 = vld [vmem:[%s1 + $0x550] sm:$0xff]
  %v242 = vld [vmem:[%s1 + $0x558] sm:$0xff]
  %v243 = vld [vmem:[%s1 + $0x560] sm:$0xff]
  %v244 = vld [vmem:[%s1 + $0x568] sm:$0xff]
  %v245 = vld [vmem:[%s1 + $0x570] sm:$0xff]
  %v246 = vld [vmem:[%s1 + $0x578] sm:$0xff]
  %v247 = vld [vmem:[%s1 + $0x580] sm:$0xff]
  %v248 = vld [vmem:[%s1 + $0x588] sm:$0xff]
  %v249 = vld [vmem:[%s1 + $0x590] sm:$0xff]
  %v250 = vld [vmem:[%s1 + $0x598] sm:$0xff]
  %v251 = vld [vmem:[%s1 + $0x5a0] sm:$0xff]
  %v252 = vld [vmem:[%s1 + $0x5a8] sm:$0xff]
  %v253 = vld [vmem:[%s1 + $0x5b0] sm:$0xff]
  %v254 = vld [vmem:[%s1 + $0x5b8] sm:$0xff]
  %v255 = vld [vmem:[%s1 + $0x5c0] sm:$0xff]
  %v256 = vld [vmem:[%s1 + $0x5c8] sm:$0xff]
  %v257 = vld [vmem:[%s1 + $0x5d0] sm:$0xff]
  %v258 = vld [vmem:[%s1 + $0x5d8] sm:$0xff]
  %v259 = vld [vmem:[%s1 + $0x5e0] sm:$0xff]
  %v260 = vld [vmem:[%s1 + $0x5e8] sm:$0xff]
  %v261 = vld [vmem:[%s1 + $0x5f0] sm:$0xff]
  %v262 = vld [vmem:[%s1 + $0x5f8] sm:$0xff]
  %v263 = vld [vmem:[%s1 + $0x600] sm:$0xff]
  %v264 = vld [vmem:[%s1 + $0x608] sm:$0xff]
  %v265 = vld [vmem:[%s1 + $0x610] sm:$0xff]
  %v266 = vld [vmem:[%s1 + $0x618] sm:$0xff]
  %v267 = vld [vmem:[%s1 + $0x620] sm:$0xff]
  %v268 = vld [vmem:[%s1 + $0x628] sm:$0xff]
  %v269 = vld [vmem:[%s1 + $0x630] sm:$0xff]
  %v270 = vld [vmem:[%s1 + $0x638] sm:$0xff]
  %v271 = vld [vmem:[%s1 + $0x640] sm:$0xff]
  %v272 = vld [vmem:[%s1 + $0x648] sm:$0xff]
  %v273 = vld [vmem:[%s1 + $0x650] sm:$0xff]
  %v274 = vld [vmem:[%s1 + $0x658] sm:$0xff]
  %v275 = vld [vmem:[%s1 + $0x660] sm:$0xff]
  %v276 = vld [vmem:[%s1 + $0x668] sm:$0xff]
  %v277 = vld [vmem:[%s1 + $0x670] sm:$0xff]
  %v278 = vld [vmem:[%s1 + $0x678] sm:$0xff]
  %v279 = vld [vmem:[%s1 + $0x680] sm:$0xff]
  %v280 = vld [vmem:[%s1 + $0x688] sm:$0xff]
  %v281 = vld [vmem:[%s1 + $0x690] sm:$0xff]
  %v282 = vld [vmem:[%s1 + $0x698] sm:$0xff]
  %v283 = vld [vmem:[%s1 + $0x6a0] sm:$0xff]
  %v284 = vld [vmem:[%s1 + $0x6a8] sm:$0xff]
  %v285 = vld [vmem:[%s1 + $0x6b0] sm:$0xff]
  %v286 = vld [vmem:[%s1 + $0x6b8] sm:$0xff]
  %v287 = vld [vmem:[%s1 + $0x6c0] sm:$0xff]
  %v288 = vld [vmem:[%s1 + $0x6c8] sm:$0xff]
  %v289 = vld [vmem:[%s1 + $0x6d0] sm:$0xff]
  %v290 = vld [vmem:[%s1 + $0x6d8] sm:$0xff]
  %v291 = vld [vmem:[%s1 + $0x6e0] sm:$0xff]
  %v292 = vld [vmem:[%s1 + $0x6e8] sm:$0xff]
  %v293 = vld [vmem:[%s1 + $0x6f0] sm:$0xff]
  %v294 = vld [vmem:[%s1 + $0x6f8] sm:$0xff]
  %v295 = vld [vmem:[%s1 + $0x700] sm:$0xff]
  %v296 = vld [vmem:[%s1 + $0x708] sm:$0xff]
  %v297 = vld [vmem:[%s1 + $0x710] sm:$0xff]
  %v298 = vld [vmem:[%s1 + $0x718] sm:$0xff]
  %v299 = vld [vmem:[%s1 + $0x720] sm:$0xff]
  %v300 = vld [vmem:[%s1 + $0x728] sm:$0xff]
  %v301 = vld [vmem:[%s1 + $0x730] sm:$0xff]
  %v302 = vld [vmem:[%s1 + $0x738] sm:$0xff]
  %v303 = vld [vmem:[%s1 + $0x740] sm:$0xff]
  %v304 = vld [vmem:[%s1 + $0x748] sm:$0xff]
  %v305 = vld [vmem:[%s1 + $0x750] sm:$0xff]
  %v306 = vld [vmem:[%s1 + $0x758] sm:$0xff]
  %v307 = vld [vmem:[%s1 + $0x760] sm:$0xff]
  %v308 = vld [vmem:[%s1 + $0x768] sm:$0xff]
  %v309 = vld [vmem:[%s1 + $0x770] sm:$0xff]
  %v310 = vld [vmem:[%s1 + $0x778] sm:$0xff]
  %v311 = vld [vmem:[%s1 + $0x780] sm:$0xff]
  %v312 = vld [vmem:[%s1 + $0x788] sm:$0xff]
  %v313 = vld [vmem:[%s1 + $0x790] sm:$0xff]
  %v314 = vld [vmem:[%s1 + $0x798] sm:$0xff]
  %v315 = vld [vmem:[%s1 + $0x7a0] sm:$0xff]
  %v316 = vld [vmem:[%s1 + $0x7a8] sm:$0xff]
  %v317 = vld [vmem:[%s1 + $0x7b0] sm:$0xff]
  %v318 = vld [vmem:[%s1 + $0x7b8] sm:$0xff]
  %v319 = vld [vmem:[%s1 + $0x7c0] sm:$0xff]
  %v320 = vld [vmem:[%s1 + $0x7c8] sm:$0xff]
  %v321 = vld [vmem:[%s1 + $0x7d0] sm:$0xff]
  %v322 = vld [vmem:[%s1 + $0x7d8] sm:$0xff]
  %v323 = vld [vmem:[%s1 + $0x7e0] sm:$0xff]
  %v324 = vld [vmem:[%s1 + $0x7e8] sm:$0xff]
  %v325 = vld [vmem:[%s1 + $0x7f0] sm:$0xff]
  %v326 = vld [vmem:[%s1 + $0x7f8] sm:$0xff]
  %v327 = vld [vmem:[%s1 + $0x800] sm:$0xff]
  %v328 = vld [vmem:[%s1 + $0x808] sm:$0xff]
  %v329 = vld [vmem:[%s1 + $0x810] sm:$0xff]
  %v330 = vld [vmem:[%s1 + $0x818] sm:$0xff]
  %v331 = vld [vmem:[%s1 + $0x820] sm:$0xff]
  %v332 = vld [vmem:[%s1 + $0x828] sm:$0xff]
  %v333 = vld [vmem:[%s1 + $0x830] sm:$0xff]
  %v334 = vld [vmem:[%s1 + $0x838] sm:$0xff]
  %v335 = vld [vmem:[%s1 + $0x840] sm:$0xff]
  %v336 = vld [vmem:[%s1 + $0x848] sm:$0xff]
  %v337 = vld [vmem:[%s1 + $0x850] sm:$0xff]
  %v338 = vld [vmem:[%s1 + $0x858] sm:$0xff]
  %v339 = vld [vmem:[%s1 + $0x860] sm:$0xff]
  %v340 = vld [vmem:[%s1 + $0x868] sm:$0xff]
  %v341 = vld [vmem:[%s1 + $0x870] sm:$0xff]
  %v342 = vld [vmem:[%s1 + $0x878] sm:$0xff]
  %v343 = vld [vmem:[%s1 + $0x880] sm:$0xff]
  %v344 = vld [vmem:[%s1 + $0x888] sm:$0xff]
  %v345 = vld [vmem:[%s1 + $0x890] sm:$0xff]
  %v346 = vld [vmem:[%s1 + $0x898] sm:$0xff]
  %v347 = vld [vmem:[%s1 + $0x8a0] sm:$0xff]
  %v348 = vld [vmem:[%s1 + $0x8a8] sm:$0xff]
  %v349 = vld [vmem:[%s1 + $0x8b0] sm:$0xff]
  %v350 = vld [vmem:[%s1 + $0x8b8] sm:$0xff]
  %v351 = vld [vmem:[%s1 + $0x8c0] sm:$0xff]
  %v352 = vld [vmem:[%s1 + $0x8c8] sm:$0xff]
  %v353 = vld [vmem:[%s1 + $0x8d0] sm:$0xff]
  %v354 = vld [vmem:[%s1 + $0x8d8] sm:$0xff]
  %v355 = vld [vmem:[%s1 + $0x8e0] sm:$0xff]
  %v356 = vld [vmem:[%s1 + $0x8e8] sm:$0xff]
  %v357 = vld [vmem:[%s1 + $0x8f0] sm:$0xff]
  %v358 = vld [vmem:[%s1 + $0x8f8] sm:$0xff]
  %v359 = vld [vmem:[%s1 + $0x900] sm:$0xff]
  %v360 = vld [vmem:[%s1 + $0x908] sm:$0xff]
  %v361 = vld [vmem:[%s1 + $0x910] sm:$0xff]
  %v362 = vld [vmem:[%s1 + $0x918] sm:$0xff]
  %v363 = vld [vmem:[%s1 + $0x920] sm:$0xff]
  %v364 = vld [vmem:[%s1 + $0x928] sm:$0xff]
  %v365 = vld [vmem:[%s1 + $0x930] sm:$0xff]
  %v366 = vld [vmem:[%s1 + $0x938] sm:$0xff]
  %v367 = vld [vmem:[%s1 + $0x940] sm:$0xff]
  %v368 = vld [vmem:[%s1 + $0x948] sm:$0xff]
  %v369 = vld [vmem:[%s1 + $0x950] sm:$0xff]
  %v370 = vld [vmem:[%s1 + $0x958] sm:$0xff]
  %v371 = vld [vmem:[%s1 + $0x960] sm:$0xff]
  %v372 = vld [vmem:[%s1 + $0x968] sm:$0xff]
  %v373 = vld [vmem:[%s1 + $0x970] sm:$0xff]
  %v374 = vld [vmem:[%s1 + $0x978] sm:$0xff]
  %v375 = vld [vmem:[%s1 + $0x980] sm:$0xff]
  %v376 = vld [vmem:[%s1 + $0x988] sm:$0xff]
  %v377 = vld [vmem:[%s1 + $0x990] sm:$0xff]
  %v378 = vld [vmem:[%s1 + $0x998] sm:$0xff]
  %v379 = vld [vmem:[%s1 + $0x9a0] sm:$0xff]
  %v380 = vld [vmem:[%s1 + $0x9a8] sm:$0xff]
  %v381 = vld [vmem:[%s1 + $0x9b0] sm:$0xff]
  %v382 = vld [vmem:[%s1 + $0x9b8] sm:$0xff]
  %v383 = vld [vmem:[%s1 + $0x9c0] sm:$0xff]
  %v384 = vld [vmem:[%s1 + $0x9c8] sm:$0xff]
  %v385 = vld [vmem:[%s1 + $0x9d0] sm:$0xff]
  %v386 = vld [vmem:[%s1 + $0x9d8] sm:$0xff]
  %v387 = vld [vmem:[%s1 + $0x9e0] sm:$0xff]
  %v388 = vld [vmem:[%s1 + $0x9e8] sm:$0xff]
  %v389 = vld [vmem:[%s1 + $0x9f0] sm:$0xff]
  %v390 = vld [vmem:[%s1 + $0x9f8] sm:$0xff]
  %v391 = vld [vmem:[%s1 + $0xa00] sm:$0xff]
  %v392 = vld [vmem:[%s1 + $0xa08] sm:$0xff]
  %v393 = vld [vmem:[%s1 + $0xa10] sm:$0xff]
  %v394 = vld [vmem:[%s1 + $0xa18] sm:$0xff]
  %v395 = vld [vmem:[%s1 + $0xa20] sm:$0xff]
  %v396 = vld [vmem:[%s1 + $0xa28] sm:$0xff]
  %v397 = vld [vmem:[%s1 + $0xa30] sm:$0xff]
  %v398 = vld [vmem:[%s1 + $0xa38] sm:$0xff]
  %v399 = vld [vmem:[%s1 + $0xa40] sm:$0xff]
  %v400 = vld [vmem:[%s1 + $0xa48] sm:$0xff]
  %v401 = vld [vmem:[%s1 + $0xa50] sm:$0xff]
  %v402 = vld [vmem:[%s1 + $0xa58] sm:$0xff]
  %v403 = vld [vmem:[%s1 + $0xa60] sm:$0xff]
  %v404 = vld [vmem:[%s1 + $0xa68] sm:$0xff]
  %v405 = vld [vmem:[%s1 + $0xa70] sm:$0xff]
  %v406 = vld [vmem:[%s1 + $0xa78] sm:$0xff]
  %v407 = vld [vmem:[%s1 + $0xa80] sm:$0xff]
  %v408 = vld [vmem:[%s1 + $0xa88] sm:$0xff]
  %v409 = vld [vmem:[%s1 + $0xa90] sm:$0xff]
  %v410 = vld [vmem:[%s1 + $0xa98] sm:$0xff]
  %v411 = vld [vmem:[%s1 + $0xaa0] sm:$0xff]
  %v412 = vld [vmem:[%s1 + $0xaa8] sm:$0xff]
  %v413 = vld [vmem:[%s1 + $0xab0] sm:$0xff]
  %v414 = vld [vmem:[%s1 + $0xab8] sm:$0xff]
  %v415 = vld [vmem:[%s1 + $0xac0] sm:$0xff]
  %v416 = vld [vmem:[%s1 + $0xac8] sm:$0xff]
  %v417 = vld [vmem:[%s1 + $0xad0] sm:$0xff]
  %v418 = vld [vmem:[%s1 + $0xad8] sm:$0xff]
  %v419 = vld [vmem:[%s1 + $0xae0] sm:$0xff]
  %v420 = vld [vmem:[%s1 + $0xae8] sm:$0xff]
  %v421 = vld [vmem:[%s1 + $0xaf0] sm:$0xff]
  %v422 = vld [vmem:[%s1 + $0xaf8] sm:$0xff]
  %v423 = vld [vmem:[%s1 + $0xb00] sm:$0xff]
  %v424 = vld [vmem:[%s1 + $0xb08] sm:$0xff]
  %v425 = vld [vmem:[%s1 + $0xb10] sm:$0xff]
  %v426 = vld [vmem:[%s1 + $0xb18] sm:$0xff]
  %v427 = vld [vmem:[%s1 + $0xb20] sm:$0xff]
  %v428 = vld [vmem:[%s1 + $0xb28] sm:$0xff]
  %v429 = vld [vmem:[%s1 + $0xb30] sm:$0xff]
  %v430 = vld [vmem:[%s1 + $0xb38] sm:$0xff]
  %v431 = vld [vmem:[%s1 + $0xb40] sm:$0xff]
  %v432 = vld [vmem:[%s1 + $0xb48] sm:$0xff]
  %v433 = vld [vmem:[%s1 + $0xb50] sm:$0xff]
  %v434 = vld [vmem:[%s1 + $0xb58] sm:$0xff]
  %v435 = vld [vmem:[%s1 + $0xb60] sm:$0xff]
  %v436 = vld [vmem:[%s1 + $0xb68] sm:$0xff]
  %v437 = vld [vmem:[%s1 + $0xb70] sm:$0xff]
  %v438 = vld [vmem:[%s1 + $0xb78] sm:$0xff]
  %v439 = vld [vmem:[%s1 + $0xb80] sm:$0xff]
  %v440 = vld [vmem:[%s1 + $0xb88] sm:$0xff]
  %v441 = vld [vmem:[%s1 + $0xb90] sm:$0xff]
  %v442 = vld [vmem:[%s1 + $0xb98] sm:$0xff]
  %v443 = vld [vmem:[%s1 + $0xba0] sm:$0xff]
  %v444 = vld [vmem:[%s1 + $0xba8] sm:$0xff]
  %v445 = vld [vmem:[%s1 + $0xbb0] sm:$0xff]
  %v446 = vld [vmem:[%s1 + $0xbb8] sm:$0xff]
  %v447 = vld [vmem:[%s1 + $0xbc0] sm:$0xff]
  %v448 = vld [vmem:[%s1 + $0xbc8] sm:$0xff]
  %v449 = vld [vmem:[%s1 + $0xbd0] sm:$0xff]
  %v450 = vld [vmem:[%s1 + $0xbd8] sm:$0xff]
  %v451 = vld [vmem:[%s1 + $0xbe0] sm:$0xff]
  %v452 = vld [vmem:[%s1 + $0xbe8] sm:$0xff]
  %v453 = vld [vmem:[%s1 + $0xbf0] sm:$0xff]
  %v454 = vld [vmem:[%s1 + $0xbf8] sm:$0xff]
  %v455 = vld [vmem:[%s1 + $0xc00] sm:$0xff]
  %v456 = vld [vmem:[%s1 + $0xc08] sm:$0xff]
  %v457 = vld [vmem:[%s1 + $0xc10] sm:$0xff]
  %v458 = vld [vmem:[%s1 + $0xc18] sm:$0xff]
  %v459 = vld [vmem:[%s1 + $0xc20] sm:$0xff]
  %v460 = vld [vmem:[%s1 + $0xc28] sm:$0xff]
  %v461 = vld [vmem:[%s1 + $0xc30] sm:$0xff]
  %v462 = vld [vmem:[%s1 + $0xc38] sm:$0xff]
  %v463 = vld [vmem:[%s1 + $0xc40] sm:$0xff]
  %v464 = vld [vmem:[%s1 + $0xc48] sm:$0xff]
  %v465 = vld [vmem:[%s1 + $0xc50] sm:$0xff]
  %v466 = vld [vmem:[%s1 + $0xc58] sm:$0xff]
  %v467 = vld [vmem:[%s1 + $0xc60] sm:$0xff]
  %v468 = vld [vmem:[%s1 + $0xc68] sm:$0xff]
  %v469 = vld [vmem:[%s1 + $0xc70] sm:$0xff]
  %v470 = vld [vmem:[%s1 + $0xc78] sm:$0xff]
  %v471 = vld [vmem:[%s1 + $0xc80] sm:$0xff]
  %v472 = vld [vmem:[%s1 + $0xc88] sm:$0xff]
  %v473 = vld [vmem:[%s1 + $0xc90] sm:$0xff]
  %v474 = vld [vmem:[%s1 + $0xc98] sm:$0xff]
  %v475 = vld [vmem:[%s1 + $0xca0] sm:$0xff]
  %v476 = vld [vmem:[%s1 + $0xca8] sm:$0xff]
  %v477 = vld [vmem:[%s1 + $0xcb0] sm:$0xff]
  %v478 = vld [vmem:[%s1 + $0xcb8] sm:$0xff]
  %v479 = vld [vmem:[%s1 + $0xcc0] sm:$0xff]
  %v480 = vld [vmem:[%s1 + $0xcc8] sm:$0xff]
  %v481 = vld [vmem:[%s1 + $0xcd0] sm:$0xff]
  %v482 = vld [vmem:[%s1 + $0xcd8] sm:$0xff]
  %v483 = vld [vmem:[%s1 + $0xce0] sm:$0xff]
  %v484 = vld [vmem:[%s1 + $0xce8] sm:$0xff]
  %v485 = vld [vmem:[%s1 + $0xcf0] sm:$0xff]
  %v486 = vld [vmem:[%s1 + $0xcf8] sm:$0xff]
  %v487 = vld [vmem:[%s1 + $0xd00] sm:$0xff]
  %v488 = vld [vmem:[%s1 + $0xd08] sm:$0xff]
  %v489 = vld [vmem:[%s1 + $0xd10] sm:$0xff]
  %v490 = vld [vmem:[%s1 + $0xd18] sm:$0xff]
  %v491 = vld [vmem:[%s1 + $0xd20] sm:$0xff]
  %v492 = vld [vmem:[%s1 + $0xd28] sm:$0xff]
  %v493 = vld [vmem:[%s1 + $0xd30] sm:$0xff]
  %v494 = vld [vmem:[%s1 + $0xd38] sm:$0xff]
  %v495 = vld [vmem:[%s1 + $0xd40] sm:$0xff]
  %v496 = vld [vmem:[%s1 + $0xd48] sm:$0xff]
  %v497 = vld [vmem:[%s1 + $0xd50] sm:$0xff]
  %v498 = vld [vmem:[%s1 + $0xd58] sm:$0xff]
  %v499 = vld [vmem:[%s1 + $0xd60] sm:$0xff]
  %v500 = vld [vmem:[%s1 + $0xd68] sm:$0xff]
  %v501 = vld [vmem:[%s1 + $0xd70] sm:$0xff]
  %v502 = vld [vmem:[%s1 + $0xd78] sm:$0xff]
  %v503 = vld [vmem:[%s1 + $0xd80] sm:$0xff]
  %v504 = vld [vmem:[%s1 + $0xd88] sm:$0xff]
  %v505 = vld [vmem:[%s1 + $0xd90] sm:$0xff]
  %v506 = vld [vmem:[%s1 + $0xd98] sm:$0xff]
  %v507 = vld [vmem:[%s1 + $0xda0] sm:$0xff]
  %v508 = vld [vmem:[%s1 + $0xda8] sm:$0xff]
  %v509 = vld [vmem:[%s1 + $0xdb0] sm:$0xff]
  %v510 = vld [vmem:[%s1 + $0xdb8] sm:$0xff]
  %v511 = vld [vmem:[%s1 + $0xdc0] sm:$0xff]
  %v512 = vld [vmem:[%s1 + $0xdc8] sm:$0xff]
  %v513 = vld [vmem:[%s1 + $0xdd0] sm:$0xff]
  %v514 = vld [vmem:[%s1 + $0xdd8] sm:$0xff]
  %v515 = vld [vmem:[%s1 + $0xde0] sm:$0xff]
  %v516 = vld [vmem:[%s1 + $0xde8] sm:$0xff]
  %v517 = vld [vmem:[%s1 + $0xdf0] sm:$0xff]
  %v518 = vld [vmem:[%s1 + $0xdf8] sm:$0xff]
  %v519 = vld [vmem:[%s1 + $0xe00] sm:$0xff]
  %v520 = vld [vmem:[%s1 + $0xe08] sm:$0xff]
  %v521 = vld [vmem:[%s1 + $0xe10] sm:$0xff]
  %v522 = vld [vmem:[%s1 + $0xe18] sm:$0xff]
  %v523 = vld [vmem:[%s1 + $0xe20] sm:$0xff]
  %v524 = vld [vmem:[%s1 + $0xe28] sm:$0xff]
  %v525 = vld [vmem:[%s1 + $0xe30] sm:$0xff]
  %v526 = vld [vmem:[%s1 + $0xe38] sm:$0xff]
  %v527 = vld [vmem:[%s1 + $0xe40] sm:$0xff]
  %v528 = vld [vmem:[%s1 + $0xe48] sm:$0xff]
  %v529 = vld [vmem:[%s1 + $0xe50] sm:$0xff]
  %v530 = vld [vmem:[%s1 + $0xe58] sm:$0xff]
  %v531 = vld [vmem:[%s1 + $0xe60] sm:$0xff]
  %v532 = vld [vmem:[%s1 + $0xe68] sm:$0xff]
  %v533 = vld [vmem:[%s1 + $0xe70] sm:$0xff]
  %v534 = vld [vmem:[%s1 + $0xe78] sm:$0xff]
  %v535 = vld [vmem:[%s1 + $0xe80] sm:$0xff]
  %v536 = vld [vmem:[%s1 + $0xe88] sm:$0xff]
  %v537 = vld [vmem:[%s1 + $0xe90] sm:$0xff]
  %v538 = vld [vmem:[%s1 + $0xe98] sm:$0xff]
  %v539 = vld [vmem:[%s1 + $0xea0] sm:$0xff]
  %v540 = vld [vmem:[%s1 + $0xea8] sm:$0xff]
  %v541 = vld [vmem:[%s1 + $0xeb0] sm:$0xff]
  %v542 = vld [vmem:[%s1 + $0xeb8] sm:$0xff]
  %v543 = vld [vmem:[%s1 + $0xec0] sm:$0xff]
  %v544 = vld [vmem:[%s1 + $0xec8] sm:$0xff]
  %v545 = vld [vmem:[%s1 + $0xed0] sm:$0xff]
  %v546 = vld [vmem:[%s1 + $0xed8] sm:$0xff]
  %v547 = vld [vmem:[%s1 + $0xee0] sm:$0xff]
  %v548 = vld [vmem:[%s1 + $0xee8] sm:$0xff]
  %v549 = vld [vmem:[%s1 + $0xef0] sm:$0xff]
  %v550 = vld [vmem:[%s1 + $0xef8] sm:$0xff]
  %v551 = vld [vmem:[%s1 + $0xf00] sm:$0xff]
  %v552 = vld [vmem:[%s1 + $0xf08] sm:$0xff]
  %v553 = vld [vmem:[%s1 + $0xf10] sm:$0xff]
  %v554 = vld [vmem:[%s1 + $0xf18] sm:$0xff]
  %v555 = vld [vmem:[%s1 + $0xf20] sm:$0xff]
  %v556 = vld [vmem:[%s1 + $0xf28] sm:$0xff]
  %v557 = vld [vmem:[%s1 + $0xf30] sm:$0xff]
  %v558 = vld [vmem:[%s1 + $0xf38] sm:$0xff]
  %v559 = vld [vmem:[%s1 + $0xf40] sm:$0xff]
  %v560 = vld [vmem:[%s1 + $0xf48] sm:$0xff]
  %v561 = vld [vmem:[%s1 + $0xf50] sm:$0xff]
  %v562 = vld [vmem:[%s1 + $0xf58] sm:$0xff]
  %v563 = vld [vmem:[%s1 + $0xf60] sm:$0xff]
  %v564 = vld [vmem:[%s1 + $0xf68] sm:$0xff]
  %v565 = vld [vmem:[%s1 + $0xf70] sm:$0xff]
  %v566 = vld [vmem:[%s1 + $0xf78] sm:$0xff]
  %v567 = vld [vmem:[%s1 + $0xf80] sm:$0xff]
  %v568 = vld [vmem:[%s1 + $0xf88] sm:$0xff]
  %v569 = vld [vmem:[%s1 + $0xf90] sm:$0xff]
  %v570 = vld [vmem:[%s1 + $0xf98] sm:$0xff]
  %v571 = vld [vmem:[%s1 + $0xfa0] sm:$0xff]
  %v572 = vld [vmem:[%s1 + $0xfa8] sm:$0xff]
  %v573 = vld [vmem:[%s1 + $0xfb0] sm:$0xff]
  %v574 = vld [vmem:[%s1 + $0xfb8] sm:$0xff]
  %v575 = vld [vmem:[%s1 + $0xfc0] sm:$0xff]
  %v576 = vld [vmem:[%s1 + $0xfc8] sm:$0xff]
  %v577 = vld [vmem:[%s1 + $0xfd0] sm:$0xff]
  %v578 = vld [vmem:[%s1 + $0xfd8] sm:$0xff]
  %v579 = vld [vmem:[%s1 + $0xfe0] sm:$0xff]
  %v580 = vld [vmem:[%s1 + $0xfe8] sm:$0xff]
  %v581 = vld [vmem:[%s1 + $0xff0] sm:$0xff]
  %v582 = vld [vmem:[%s1 + $0xff8] sm:$0xff]
  %v583 = vld [vmem:[%s1 + $0x1000] sm:$0xff]
  %v584 = vld [vmem:[%s1 + $0x1008] sm:$0xff]
  %v585 = vld [vmem:[%s1 + $0x1010] sm:$0xff]
  %v586 = vld [vmem:[%s1 + $0x1018] sm:$0xff]
  %v587 = vld [vmem:[%s1 + $0x1020] sm:$0xff]
  %v588 = vld [vmem:[%s1 + $0x1028] sm:$0xff]
  %v589 = vld [vmem:[%s1 + $0x1030] sm:$0xff]
  %v590 = vld [vmem:[%s1 + $0x1038] sm:$0xff]
  %v591 = vld [vmem:[%s1 + $0x1040] sm:$0xff]
  %v592 = vld [vmem:[%s1 + $0x1048] sm:$0xff]
  %v593 = vld [vmem:[%s1 + $0x1050] sm:$0xff]
  %v594 = vld [vmem:[%s1 + $0x1058] sm:$0xff]
  %v595 = vld [vmem:[%s1 + $0x1060] sm:$0xff]
  %v596 = vld [vmem:[%s1 + $0x1068] sm:$0xff]
  %v597 = vld [vmem:[%s1 + $0x1070] sm:$0xff]
  %v598 = vld [vmem:[%s1 + $0x1078] sm:$0xff]
  %v599 = vld [vmem:[%s1 + $0x1080] sm:$0xff]
  %v600 = vld [vmem:[%s1 + $0x1088] sm:$0xff]
  %v601 = vld [vmem:[%s1 + $0x1090] sm:$0xff]
  %v602 = vld [vmem:[%s1 + $0x1098] sm:$0xff]
  %v603 = vld [vmem:[%s1 + $0x10a0] sm:$0xff]
  %v604 = vld [vmem:[%s1 + $0x10a8] sm:$0xff]
  %v605 = vld [vmem:[%s1 + $0x10b0] sm:$0xff]
  %v606 = vld [vmem:[%s1 + $0x10b8] sm:$0xff]
  %v607 = vld [vmem:[%s1 + $0x10c0] sm:$0xff]
  %v608 = vld [vmem:[%s1 + $0x10c8] sm:$0xff]
  %v609 = vld [vmem:[%s1 + $0x10d0] sm:$0xff]
  %v610 = vld [vmem:[%s1 + $0x10d8] sm:$0xff]
  %v611 = vld [vmem:[%s1 + $0x10e0] sm:$0xff]
  %v612 = vld [vmem:[%s1 + $0x10e8] sm:$0xff]
  %v613 = vld [vmem:[%s1 + $0x10f0] sm:$0xff]
  %v614 = vld [vmem:[%s1 + $0x10f8] sm:$0xff]
  %v615 = vld [vmem:[%s1 + $0x1100] sm:$0xff]
  %v616 = vld [vmem:[%s1 + $0x1108] sm:$0xff]
  %v617 = vld [vmem:[%s1 + $0x1110] sm:$0xff]
  %v618 = vld [vmem:[%s1 + $0x1118] sm:$0xff]
  %v619 = vld [vmem:[%s1 + $0x1120] sm:$0xff]
  %v620 = vld [vmem:[%s1 + $0x1128] sm:$0xff]
  %v621 = vld [vmem:[%s1 + $0x1130] sm:$0xff]
  %v622 = vld [vmem:[%s1 + $0x1138] sm:$0xff]
  %v623 = vld [vmem:[%s1 + $0x1140] sm:$0xff]
  %v624 = vld [vmem:[%s1 + $0x1148] sm:$0xff]
  %v625 = vld [vmem:[%s1 + $0x1150] sm:$0xff]
  %v626 = vld [vmem:[%s1 + $0x1158] sm:$0xff]
  %v627 = vld [vmem:[%s1 + $0x1160] sm:$0xff]
  %v628 = vld [vmem:[%s1 + $0x1168] sm:$0xff]
  %v629 = vld [vmem:[%s1 + $0x1170] sm:$0xff]
  %v630 = vld [vmem:[%s1 + $0x1178] sm:$0xff]
  %v631 = vld [vmem:[%s1 + $0x1180] sm:$0xff]
  %v632 = vld [vmem:[%s1 + $0x1188] sm:$0xff]
  %v633 = vld [vmem:[%s1 + $0x1190] sm:$0xff]
  %v634 = vld [vmem:[%s1 + $0x1198] sm:$0xff]
  %v635 = vld [vmem:[%s1 + $0x11a0] sm:$0xff]
  %v636 = vld [vmem:[%s1 + $0x11a8] sm:$0xff]
  %v637 = vld [vmem:[%s1 + $0x11b0] sm:$0xff]
  %v638 = vld [vmem:[%s1 + $0x11b8] sm:$0xff]
  %v639 = vld [vmem:[%s1 + $0x11c0] sm:$0xff]
  %v640 = vld [vmem:[%s1 + $0x11c8] sm:$0xff]
  %v641 = vld [vmem:[%s1 + $0x11d0] sm:$0xff]
  %v642 = vld [vmem:[%s1 + $0x11d8] sm:$0xff]
  %v643 = vld [vmem:[%s1 + $0x11e0] sm:$0xff]
  %v644 = vld [vmem:[%s1 + $0x11e8] sm:$0xff]
  %v645 = vld [vmem:[%s1 + $0x11f0] sm:$0xff]
  %v646 = vld [vmem:[%s1 + $0x11f8] sm:$0xff]
  %v647 = vld [vmem:[%s1 + $0x1200] sm:$0xff]
  %v648 = vld [vmem:[%s1 + $0x1208] sm:$0xff]
  %v649 = vld [vmem:[%s1 + $0x1210] sm:$0xff]
  %v650 = vld [vmem:[%s1 + $0x1218] sm:$0xff]
  %v651 = vld [vmem:[%s1 + $0x1220] sm:$0xff]
  %v652 = vld [vmem:[%s1 + $0x1228] sm:$0xff]
  %v653 = vld [vmem:[%s1 + $0x1230] sm:$0xff]
  %v654 = vld [vmem:[%s1 + $0x1238] sm:$0xff]
  %v655 = vld [vmem:[%s1 + $0x1240] sm:$0xff]
  %v656 = vld [vmem:[%s1 + $0x1248] sm:$0xff]
  %v657 = vld [vmem:[%s1 + $0x1250] sm:$0xff]
  %v658 = vld [vmem:[%s1 + $0x1258] sm:$0xff]
  %v659 = vld [vmem:[%s1 + $0x1260] sm:$0xff]
  %v660 = vld [vmem:[%s1 + $0x1268] sm:$0xff]
  %v661 = vld [vmem:[%s1 + $0x1270] sm:$0xff]
  %v662 = vld [vmem:[%s1 + $0x1278] sm:$0xff]
  %v663 = vld [vmem:[%s1 + $0x1280] sm:$0xff]
  %v664 = vld [vmem:[%s1 + $0x1288] sm:$0xff]
  %v665 = vld [vmem:[%s1 + $0x1290] sm:$0xff]
  %v666 = vld [vmem:[%s1 + $0x1298] sm:$0xff]
  %v667 = vld [vmem:[%s1 + $0x12a0] sm:$0xff]
  %v668 = vld [vmem:[%s1 + $0x12a8] sm:$0xff]
  %v669 = vld [vmem:[%s1 + $0x12b0] sm:$0xff]
  %v670 = vld [vmem:[%s1 + $0x12b8] sm:$0xff]
  %v671 = vld [vmem:[%s1 + $0x12c0] sm:$0xff]
  %v672 = vld [vmem:[%s1 + $0x12c8] sm:$0xff]
  %v673 = vld [vmem:[%s1 + $0x12d0] sm:$0xff]
  %v674 = vld [vmem:[%s1 + $0x12d8] sm:$0xff]
  %v675 = vld [vmem:[%s1 + $0x12e0] sm:$0xff]
  %v676 = vld [vmem:[%s1 + $0x12e8] sm:$0xff]
  %v677 = vld [vmem:[%s1 + $0x12f0] sm:$0xff]
  %v678 = vld [vmem:[%s1 + $0x12f8] sm:$0xff]
  %v679 = vld [vmem:[%s1 + $0x1300] sm:$0xff]
  %v680 = vld [vmem:[%s1 + $0x1308] sm:$0xff]
  %v681 = vld [vmem:[%s1 + $0x1310] sm:$0xff]
  %v682 = vld [vmem:[%s1 + $0x1318] sm:$0xff]
  %v683 = vld [vmem:[%s1 + $0x1320] sm:$0xff]
  %v684 = vld [vmem:[%s1 + $0x1328] sm:$0xff]
  %v685 = vld [vmem:[%s1 + $0x1330] sm:$0xff]
  %v686 = vld [vmem:[%s1 + $0x1338] sm:$0xff]
  %v687 = vld [vmem:[%s1 + $0x1340] sm:$0xff]
  %v688 = vld [vmem:[%s1 + $0x1348] sm:$0xff]
  %v689 = vld [vmem:[%s1 + $0x1350] sm:$0xff]
  %v690 = vld [vmem:[%s1 + $0x1358] sm:$0xff]
  %v691 = vld [vmem:[%s1 + $0x1360] sm:$0xff]
  %v692 = vld [vmem:[%s1 + $0x1368] sm:$0xff]
  %v693 = vld [vmem:[%s1 + $0x1370] sm:$0xff]
  %v694 = vld [vmem:[%s1 + $0x1378] sm:$0xff]
  %v695 = vld [vmem:[%s1 + $0x1380] sm:$0xff]
  %v696 = vld [vmem:[%s1 + $0x1388] sm:$0xff]
  %v697 = vld [vmem:[%s1 + $0x1390] sm:$0xff]
  %v698 = vld [vmem:[%s1 + $0x1398] sm:$0xff]
  %v699 = vld [vmem:[%s1 + $0x13a0] sm:$0xff]
  %v700 = vld [vmem:[%s1 + $0x13a8] sm:$0xff]
  %v701 = vld [vmem:[%s1 + $0x13b0] sm:$0xff]
  %v702 = vld [vmem:[%s1 + $0x13b8] sm:$0xff]
  %v703 = vld [vmem:[%s1 + $0x13c0] sm:$0xff]
  %v704 = vld [vmem:[%s1 + $0x13c8] sm:$0xff]
  %v705 = vld [vmem:[%s1 + $0x13d0] sm:$0xff]
  %v706 = vld [vmem:[%s1 + $0x13d8] sm:$0xff]
  %v707 = vld [vmem:[%s1 + $0x13e0] sm:$0xff]
  %v708 = vld [vmem:[%s1 + $0x13e8] sm:$0xff]
  %v709 = vld [vmem:[%s1 + $0x13f0] sm:$0xff]
  %v710 = vld [vmem:[%s1 + $0x13f8] sm:$0xff]
  %v711 = vld [vmem:[%s1 + $0x1400] sm:$0xff]
  %v712 = vld [vmem:[%s1 + $0x1408] sm:$0xff]
  %v713 = vld [vmem:[%s1 + $0x1410] sm:$0xff]
  %v714 = vld [vmem:[%s1 + $0x1418] sm:$0xff]
  %v715 = vld [vmem:[%s1 + $0x1420] sm:$0xff]
  %v716 = vld [vmem:[%s1 + $0x1428] sm:$0xff]
  %v717 = vld [vmem:[%s1 + $0x1430] sm:$0xff]
  %v718 = vld [vmem:[%s1 + $0x1438] sm:$0xff]
  %v719 = vld [vmem:[%s1 + $0x1440] sm:$0xff]
  %v720 = vld [vmem:[%s1 + $0x1448] sm:$0xff]
  %v721 = vld [vmem:[%s1 + $0x1450] sm:$0xff]
  %v722 = vld [vmem:[%s1 + $0x1458] sm:$0xff]
  %v723 = vld [vmem:[%s1 + $0x1460] sm:$0xff]
  %v724 = vld [vmem:[%s1 + $0x1468] sm:$0xff]
  %v725 = vld [vmem:[%s1 + $0x1470] sm:$0xff]
  %v726 = vld [vmem:[%s1 + $0x1478] sm:$0xff]
  %v727 = vld [vmem:[%s1 + $0x1480] sm:$0xff]
  %v728 = vld [vmem:[%s1 + $0x1488] sm:$0xff]
  %v729 = vld [vmem:[%s1 + $0x1490] sm:$0xff]
  %v730 = vld [vmem:[%s1 + $0x1498] sm:$0xff]
  %v731 = vld [vmem:[%s1 + $0x14a0] sm:$0xff]
  %v732 = vld [vmem:[%s1 + $0x14a8] sm:$0xff]
  %v733 = vld [vmem:[%s1 + $0x14b0] sm:$0xff]
  %v734 = vld [vmem:[%s1 + $0x14b8] sm:$0xff]
  %v735 = vld [vmem:[%s1 + $0x14c0] sm:$0xff]
  %v736 = vld [vmem:[%s1 + $0x14c8] sm:$0xff]
  %v737 = vld [vmem:[%s1 + $0x14d0] sm:$0xff]
  %v738 = vld [vmem:[%s1 + $0x14d8] sm:$0xff]
  %v739 = vld [vmem:[%s1 + $0x14e0] sm:$0xff]
  %v740 = vld [vmem:[%s1 + $0x14e8] sm:$0xff]
  %v741 = vld [vmem:[%s1 + $0x14f0] sm:$0xff]
  %v742 = vld [vmem:[%s1 + $0x14f8] sm:$0xff]
  %v743 = vld [vmem:[%s1 + $0x1500] sm:$0xff]
  %v744 = vld [vmem:[%s1 + $0x1508] sm:$0xff]
  %v745 = vld [vmem:[%s1 + $0x1510] sm:$0xff]
  %v746 = vld [vmem:[%s1 + $0x1518] sm:$0xff]
  %v747 = vld [vmem:[%s1 + $0x1520] sm:$0xff]
  %v748 = vld [vmem:[%s1 + $0x1528] sm:$0xff]
  %v749 = vld [vmem:[%s1 + $0x1530] sm:$0xff]
  %v750 = vld [vmem:[%s1 + $0x1538] sm:$0xff]
  %v751 = vld [vmem:[%s1 + $0x1540] sm:$0xff]
  %v752 = vld [vmem:[%s1 + $0x1548] sm:$0xff]
  %v753 = vld [vmem:[%s1 + $0x1550] sm:$0xff]
  %v754 = vld [vmem:[%s1 + $0x1558] sm:$0xff]
  %v755 = vld [vmem:[%s1 + $0x1560] sm:$0xff]
  %v756 = vld [vmem:[%s1 + $0x1568] sm:$0xff]
  %v757 = vld [vmem:[%s1 + $0x1570] sm:$0xff]
  %v758 = vld [vmem:[%s1 + $0x1578] sm:$0xff]
  %v759 = vld [vmem:[%s1 + $0x1580] sm:$0xff]
  %v760 = vld [vmem:[%s1 + $0x1588] sm:$0xff]
  %v761 = vld [vmem:[%s1 + $0x1590] sm:$0xff]
  %v762 = vld [vmem:[%s1 + $0x1598] sm:$0xff]
  %v763 = vld [vmem:[%s1 + $0x15a0] sm:$0xff]
  %v764 = vld [vmem:[%s1 + $0x15a8] sm:$0xff]
  %v765 = vld [vmem:[%s1 + $0x15b0] sm:$0xff]
  %v766 = vld [vmem:[%s1 + $0x15b8] sm:$0xff]
  %v767 = vld [vmem:[%s1 + $0x15c0] sm:$0xff]
  %v768 = vld [vmem:[%s1 + $0x15c8] sm:$0xff]
  %v769 = vld [vmem:[%s1 + $0x15d0] sm:$0xff]
  %v770 = vld [vmem:[%s1 + $0x15d8] sm:$0xff]
  %v771 = vld [vmem:[%s1 + $0x15e0] sm:$0xff]
  %v772 = vld [vmem:[%s1 + $0x15e8] sm:$0xff]
  %v773 = vld [vmem:[%s1 + $0x15f0] sm:$0xff]
  %v774 = vld [vmem:[%s1 + $0x15f8] sm:$0xff]
  %v775 = vld [vmem:[%s1 + $0x1600] sm:$0xff]
  %v776 = vld [vmem:[%s1 + $0x1608] sm:$0xff]
  %v777 = vld [vmem:[%s1 + $0x1610] sm:$0xff]
  %v778 = vld [vmem:[%s1 + $0x1618] sm:$0xff]
  %v779 = vld [vmem:[%s1 + $0x1620] sm:$0xff]
  %v780 = vld [vmem:[%s1 + $0x1628] sm:$0xff]
  %v781 = vld [vmem:[%s1 + $0x1630] sm:$0xff]
  %v782 = vld [vmem:[%s1 + $0x1638] sm:$0xff]
  %v783 = vld [vmem:[%s1 + $0x1640] sm:$0xff]
  %v784 = vld [vmem:[%s1 + $0x1648] sm:$0xff]
  %v785 = vld [vmem:[%s1 + $0x1650] sm:$0xff]
  %v786 = vld [vmem:[%s1 + $0x1658] sm:$0xff]
  %v787 = vld [vmem:[%s1 + $0x1660] sm:$0xff]
  %v788 = vld [vmem:[%s1 + $0x1668] sm:$0xff]
  %v789 = vld [vmem:[%s1 + $0x1670] sm:$0xff]
  %v790 = vld [vmem:[%s1 + $0x1678] sm:$0xff]
  %v791 = vld [vmem:[%s1 + $0x1680] sm:$0xff]
  %v792 = vld [vmem:[%s1 + $0x1688] sm:$0xff]
  %v793 = vld [vmem:[%s1 + $0x1690] sm:$0xff]
  %v794 = vld [vmem:[%s1 + $0x1698] sm:$0xff]
  %v795 = vld [vmem:[%s1 + $0x16a0] sm:$0xff]
  %v796 = vld [vmem:[%s1 + $0x16a8] sm:$0xff]
  %v797 = vld [vmem:[%s1 + $0x16b0] sm:$0xff]
  %v798 = vld [vmem:[%s1 + $0x16b8] sm:$0xff]
  %v799 = vld [vmem:[%s1 + $0x16c0] sm:$0xff]
  %v800 = vld [vmem:[%s1 + $0x16c8] sm:$0xff]
  %v801 = vld [vmem:[%s1 + $0x16d0] sm:$0xff]
  %v802 = vld [vmem:[%s1 + $0x16d8] sm:$0xff]
  %v803 = vld [vmem:[%s1 + $0x16e0] sm:$0xff]
  %v804 = vld [vmem:[%s1 + $0x16e8] sm:$0xff]
  %v805 = vld [vmem:[%s1 + $0x16f0] sm:$0xff]
  %v806 = vld [vmem:[%s1 + $0x16f8] sm:$0xff]
  %v807 = vld [vmem:[%s1 + $0x1700] sm:$0xff]
  %v808 = vld [vmem:[%s1 + $0x1708] sm:$0xff]
  %v809 = vld [vmem:[%s1 + $0x1710] sm:$0xff]
  %v810 = vld [vmem:[%s1 + $0x1718] sm:$0xff]
  %v811 = vld [vmem:[%s1 + $0x1720] sm:$0xff]
  %v812 = vld [vmem:[%s1 + $0x1728] sm:$0xff]
  %v813 = vld [vmem:[%s1 + $0x1730] sm:$0xff]
  %v814 = vld [vmem:[%s1 + $0x1738] sm:$0xff]
  %v815 = vld [vmem:[%s1 + $0x1740] sm:$0xff]
  %v816 = vld [vmem:[%s1 + $0x1748] sm:$0xff]
  %v817 = vld [vmem:[%s1 + $0x1750] sm:$0xff]
  %v818 = vld [vmem:[%s1 + $0x1758] sm:$0xff]
  %v819 = vld [vmem:[%s1 + $0x1760] sm:$0xff]
  %v820 = vld [vmem:[%s1 + $0x1768] sm:$0xff]
  %v821 = vld [vmem:[%s1 + $0x1770] sm:$0xff]
  %v822 = vld [vmem:[%s1 + $0x1778] sm:$0xff]
  %v823 = vld [vmem:[%s1 + $0x1780] sm:$0xff]
  %v824 = vld [vmem:[%s1 + $0x1788] sm:$0xff]
  %v825 = vld [vmem:[%s1 + $0x1790] sm:$0xff]
  %v826 = vld [vmem:[%s1 + $0x1798] sm:$0xff]
  %v827 = vld [vmem:[%s1 + $0x17a0] sm:$0xff]
  %v828 = vld [vmem:[%s1 + $0x17a8] sm:$0xff]
  %v829 = vld [vmem:[%s1 + $0x17b0] sm:$0xff]
  %v830 = vld [vmem:[%s1 + $0x17b8] sm:$0xff]
  %v831 = vld [vmem:[%s1 + $0x17c0] sm:$0xff]
  %v832 = vld [vmem:[%s1 + $0x17c8] sm:$0xff]
  %v833 = vld [vmem:[%s1 + $0x17d0] sm:$0xff]
  %v834 = vld [vmem:[%s1 + $0x17d8] sm:$0xff]
  %v835 = vld [vmem:[%s1 + $0x17e0] sm:$0xff]
  %v836 = vld [vmem:[%s1 + $0x17e8] sm:$0xff]
  %v837 = vld [vmem:[%s1 + $0x17f0] sm:$0xff]
  %v838 = vld [vmem:[%s1 + $0x17f8] sm:$0xff]
  %v839 = vld [vmem:[%s1 + $0x1800] sm:$0xff]
  %v840 = vld [vmem:[%s1 + $0x1808] sm:$0xff]
  %v841 = vld [vmem:[%s1 + $0x1810] sm:$0xff]
  %v842 = vld [vmem:[%s1 + $0x1818] sm:$0xff]
  %v843 = vld [vmem:[%s1 + $0x1820] sm:$0xff]
  %v844 = vld [vmem:[%s1 + $0x1828] sm:$0xff]
  %v845 = vld [vmem:[%s1 + $0x1830] sm:$0xff]
  %v846 = vld [vmem:[%s1 + $0x1838] sm:$0xff]
  %v847 = vld [vmem:[%s1 + $0x1840] sm:$0xff]
  %v848 = vld [vmem:[%s1 + $0x1848] sm:$0xff]
  %v849 = vld [vmem:[%s1 + $0x1850] sm:$0xff]
  %v850 = vld [vmem:[%s1 + $0x1858] sm:$0xff]
  %v851 = vld [vmem:[%s1 + $0x1860] sm:$0xff]
  %v852 = vld [vmem:[%s1 + $0x1868] sm:$0xff]
  %v853 = vld [vmem:[%s1 + $0x1870] sm:$0xff]
  %v854 = vld [vmem:[%s1 + $0x1878] sm:$0xff]
  %v855 = vld [vmem:[%s1 + $0x1880] sm:$0xff]
  %v856 = vld [vmem:[%s1 + $0x1888] sm:$0xff]
  %v857 = vld [vmem:[%s1 + $0x1890] sm:$0xff]
  %v858 = vld [vmem:[%s1 + $0x1898] sm:$0xff]
  %v859 = vld [vmem:[%s1 + $0x18a0] sm:$0xff]
  %v860 = vld [vmem:[%s1 + $0x18a8] sm:$0xff]
  %v861 = vld [vmem:[%s1 + $0x18b0] sm:$0xff]
  %v862 = vld [vmem:[%s1 + $0x18b8] sm:$0xff]
  %v863 = vld [vmem:[%s1 + $0x18c0] sm:$0xff]
  %v864 = vld [vmem:[%s1 + $0x18c8] sm:$0xff]
  %v865 = vld [vmem:[%s1 + $0x18d0] sm:$0xff]
  %v866 = vld [vmem:[%s1 + $0x18d8] sm:$0xff]
  %v867 = vld [vmem:[%s1 + $0x18e0] sm:$0xff]
  %v868 = vld [vmem:[%s1 + $0x18e8] sm:$0xff]
  %v869 = vld [vmem:[%s1 + $0x18f0] sm:$0xff]
  %v870 = vld [vmem:[%s1 + $0x18f8] sm:$0xff]
  %v871 = vld [vmem:[%s1 + $0x1900] sm:$0xff]
  %v872 = vld [vmem:[%s1 + $0x1908] sm:$0xff]
  %v873 = vld [vmem:[%s1 + $0x1910] sm:$0xff]
  %v874 = vld [vmem:[%s1 + $0x1918] sm:$0xff]
  %v875 = vld [vmem:[%s1 + $0x1920] sm:$0xff]
  %v876 = vld [vmem:[%s1 + $0x1928] sm:$0xff]
  %v877 = vld [vmem:[%s1 + $0x1930] sm:$0xff]
  %v878 = vld [vmem:[%s1 + $0x1938] sm:$0xff]
  %v879 = vld [vmem:[%s1 + $0x1940] sm:$0xff]
  %v880 = vld [vmem:[%s1 + $0x1948] sm:$0xff]
  %v881 = vld [vmem:[%s1 + $0x1950] sm:$0xff]
  %v882 = vld [vmem:[%s1 + $0x1958] sm:$0xff]
  %v883 = vld [vmem:[%s1 + $0x1960] sm:$0xff]
  %v884 = vld [vmem:[%s1 + $0x1968] sm:$0xff]
  %v885 = vld [vmem:[%s1 + $0x1970] sm:$0xff]
  %v886 = vld [vmem:[%s1 + $0x1978] sm:$0xff]
  %v887 = vld [vmem:[%s2] sm:$0x1]
  %v889 = vlaneseq
  %v890 = vshrl.u32 %v889, 7
  %v891 = vsub.s32 0, %v890
  %v892 = vrot.slane %v887, %v891
  %894 = vmatprep.subr.mxu0 0.0
  %895 = vmatpush1.msra.mxu0 %v71
  %896 = vmatprep.subr.mxu0 0.0
  %897 = vmatpush1.msra.mxu0 %v72
  %898 = vmatprep.subr.mxu0 0.0
  %899 = vmatpush1.msra.mxu0 %v73
  %900 = vmatprep.subr.mxu0 0.0
  %901 = vmatpush1.msra.mxu0 %v74
  %902 = vmatprep.subr.mxu0 0.0
  %903 = vmatpush1.msra.mxu0 %v75
  %904 = vmatprep.subr.mxu0 0.0
  %905 = vmatpush1.msra.mxu0 %v76
  %906 = vmatprep.subr.mxu0 0.0
  %907 = vmatpush1.msra.mxu0 %v77
  %908 = vmatprep.subr.mxu0 0.0
  %909 = vmatpush1.msra.mxu0 %v78
  %910 = vmatprep.subr.mxu0 0.0
  %911 = vmatpush1.msra.mxu0 %v79
  %912 = vmatprep.subr.mxu0 0.0
  %913 = vmatpush1.msra.mxu0 %v80
  %914 = vmatprep.subr.mxu0 0.0
  %915 = vmatpush1.msra.mxu0 %v81
  %916 = vmatprep.subr.mxu0 0.0
  %917 = vmatpush1.msra.mxu0 %v82
  %918 = vmatprep.subr.mxu0 0.0
  %919 = vmatpush1.msra.mxu0 %v83
  %920 = vmatprep.subr.mxu0 0.0
  %921 = vmatpush1.msra.mxu0 %v84
  %922 = vmatprep.subr.mxu0 0.0
  %923 = vmatpush1.msra.mxu0 %v85
  %924 = vmatprep.subr.mxu0 0.0
  %925 = vmatpush1.msra.mxu0 %v86
  %926 = vmatprep.subr.mxu0 0.0
  %927 = vmatpush1.msra.mxu0 %v87
  %928 = vmatprep.subr.mxu0 0.0
  %929 = vmatpush1.msra.mxu0 %v88
  %930 = vmatprep.subr.mxu0 0.0
  %931 = vmatpush1.msra.mxu0 %v89
  %932 = vmatprep.subr.mxu0 0.0
  %933 = vmatpush1.msra.mxu0 %v90
  %934 = vmatprep.subr.mxu0 0.0
  %935 = vmatpush1.msra.mxu0 %v91
  %936 = vmatprep.subr.mxu0 0.0
  %937 = vmatpush1.msra.mxu0 %v92
  %938 = vmatprep.subr.mxu0 0.0
  %939 = vmatpush1.msra.mxu0 %v93
  %940 = vmatprep.subr.mxu0 0.0
  %941 = vmatpush1.msra.mxu0 %v94
  %942 = vmatprep.subr.mxu0 0.0
  %943 = vmatpush1.msra.mxu0 %v95
  %944 = vmatprep.subr.mxu0 0.0
  %945 = vmatpush1.msra.mxu0 %v96
  %946 = vmatprep.subr.mxu0 0.0
  %947 = vmatpush1.msra.mxu0 %v97
  %948 = vmatprep.subr.mxu0 0.0
  %949 = vmatpush1.msra.mxu0 %v98
  %950 = vmatprep.subr.mxu0 0.0
  %951 = vmatpush1.msra.mxu0 %v99
  %952 = vmatprep.subr.mxu0 0.0
  %953 = vmatpush1.msra.mxu0 %v100
  %954 = vmatprep.subr.mxu0 0.0
  %955 = vmatpush1.msra.mxu0 %v101
  %956 = vmatprep.subr.mxu0 0.0
  %957 = vmatpush1.msra.mxu0 %v102
  %958 = vmatprep.mubr.f32.mxu0 %v21
  %959 = vmatmul.mubr.f32.gmra.mrb[0].mxu0 %v20
  %v960 = vpop.f32.mrb[0].mxu0
  %v961 = vadd.f32 %v892, %v960
  %v962 = vpop.f32.mrb[0].mxu0
  %963 = vdwg.mxu0
  %964 = vmatprep.subr.mxu0 0.0
  %965 = vmatpush1.msra.mxu0 %v103
  %966 = vmatprep.subr.mxu0 0.0
  %967 = vmatpush1.msra.mxu0 %v104
  %968 = vmatprep.subr.mxu0 0.0
  %969 = vmatpush1.msra.mxu0 %v105
  %970 = vmatprep.subr.mxu0 0.0
  %971 = vmatpush1.msra.mxu0 %v106
  %972 = vmatprep.subr.mxu0 0.0
  %973 = vmatpush1.msra.mxu0 %v107
  %974 = vmatprep.subr.mxu0 0.0
  %975 = vmatpush1.msra.mxu0 %v108
  %976 = vmatprep.subr.mxu0 0.0
  %977 = vmatpush1.msra.mxu0 %v109
  %978 = vmatprep.subr.mxu0 0.0
  %979 = vmatpush1.msra.mxu0 %v110
  %980 = vmatprep.subr.mxu0 0.0
  %981 = vmatpush1.msra.mxu0 %v111
  %982 = vmatprep.subr.mxu0 0.0
  %983 = vmatpush1.msra.mxu0 %v112
  %984 = vmatprep.subr.mxu0 0.0
  %985 = vmatpush1.msra.mxu0 %v113
  %986 = vmatprep.subr.mxu0 0.0
  %987 = vmatpush1.msra.mxu0 %v114
  %988 = vmatprep.subr.mxu0 0.0
  %989 = vmatpush1.msra.mxu0 %v115
  %990 = vmatprep.subr.mxu0 0.0
  %991 = vmatpush1.msra.mxu0 %v116
  %992 = vmatprep.subr.mxu0 0.0
  %993 = vmatpush1.msra.mxu0 %v117
  %994 = vmatprep.subr.mxu0 0.0
  %995 = vmatpush1.msra.mxu0 %v118
  %996 = vmatprep.subr.mxu0 0.0
  %997 = vmatpush1.msra.mxu0 %v119
  %998 = vmatprep.subr.mxu0 0.0
  %999 = vmatpush1.msra.mxu0 %v120
  %1000 = vmatprep.subr.mxu0 0.0
  %1001 = vmatpush1.msra.mxu0 %v121
  %1002 = vmatprep.subr.mxu0 0.0
  %1003 = vmatpush1.msra.mxu0 %v122
  %1004 = vmatprep.subr.mxu0 0.0
  %1005 = vmatpush1.msra.mxu0 %v123
  %1006 = vmatprep.subr.mxu0 0.0
  %1007 = vmatpush1.msra.mxu0 %v124
  %1008 = vmatprep.subr.mxu0 0.0
  %1009 = vmatpush1.msra.mxu0 %v125
  %1010 = vmatprep.subr.mxu0 0.0
  %1011 = vmatpush1.msra.mxu0 %v126
  %1012 = vmatprep.subr.mxu0 0.0
  %1013 = vmatpush1.msra.mxu0 %v127
  %1014 = vmatprep.subr.mxu0 0.0
  %1015 = vmatpush1.msra.mxu0 %v128
  %1016 = vmatprep.subr.mxu0 0.0
  %1017 = vmatpush1.msra.mxu0 %v129
  %1018 = vmatprep.subr.mxu0 0.0
  %1019 = vmatpush1.msra.mxu0 %v130
  %1020 = vmatprep.subr.mxu0 0.0
  %1021 = vmatpush1.msra.mxu0 %v131
  %1022 = vmatprep.subr.mxu0 0.0
  %1023 = vmatpush1.msra.mxu0 %v132
  %1024 = vmatprep.subr.mxu0 0.0
  %1025 = vmatpush1.msra.mxu0 %v133
  %1026 = vmatprep.subr.mxu0 0.0
  %1027 = vmatpush1.msra.mxu0 %v134
  %1028 = vmatprep.mubr.f32.mxu0 %v23
  %1029 = vmatmul.mubr.f32.gmra.mrb[0].mxu0 %v22
  %v1030 = vpop.f32.mrb[0].mxu0
  %v1031 = vadd.f32 %v961, %v1030
  %v1032 = vpop.f32.mrb[0].mxu0
  %1033 = vdwg.mxu0
  %1034 = vmatprep.subr.mxu0 0.0
  %1035 = vmatpush1.msra.mxu0 %v135
  %1036 = vmatprep.subr.mxu0 0.0
  %1037 = vmatpush1.msra.mxu0 %v136
  %1038 = vmatprep.subr.mxu0 0.0
  %1039 = vmatpush1.msra.mxu0 %v137
  %1040 = vmatprep.subr.mxu0 0.0
  %1041 = vmatpush1.msra.mxu0 %v138
  %1042 = vmatprep.subr.mxu0 0.0
  %1043 = vmatpush1.msra.mxu0 %v139
  %1044 = vmatprep.subr.mxu0 0.0
  %1045 = vmatpush1.msra.mxu0 %v140
  %1046 = vmatprep.subr.mxu0 0.0
  %1047 = vmatpush1.msra.mxu0 %v141
  %1048 = vmatprep.subr.mxu0 0.0
  %1049 = vmatpush1.msra.mxu0 %v142
  %1050 = vmatprep.subr.mxu0 0.0
  %1051 = vmatpush1.msra.mxu0 %v143
  %1052 = vmatprep.subr.mxu0 0.0
  %1053 = vmatpush1.msra.mxu0 %v144
  %1054 = vmatprep.subr.mxu0 0.0
  %1055 = vmatpush1.msra.mxu0 %v145
  %1056 = vmatprep.subr.mxu0 0.0
  %1057 = vmatpush1.msra.mxu0 %v146
  %1058 = vmatprep.subr.mxu0 0.0
  %1059 = vmatpush1.msra.mxu0 %v147
  %1060 = vmatprep.subr.mxu0 0.0
  %1061 = vmatpush1.msra.mxu0 %v148
  %1062 = vmatprep.subr.mxu0 0.0
  %1063 = vmatpush1.msra.mxu0 %v149
  %1064 = vmatprep.subr.mxu0 0.0
  %1065 = vmatpush1.msra.mxu0 %v150
  %1066 = vmatprep.subr.mxu0 0.0
  %1067 = vmatpush1.msra.mxu0 %v151
  %1068 = vmatprep.subr.mxu0 0.0
  %1069 = vmatpush1.msra.mxu0 %v152
  %1070 = vmatprep.subr.mxu0 0.0
  %1071 = vmatpush1.msra.mxu0 %v153
  %1072 = vmatprep.subr.mxu0 0.0
  %1073 = vmatpush1.msra.mxu0 %v154
  %1074 = vmatprep.subr.mxu0 0.0
  %1075 = vmatpush1.msra.mxu0 %v155
  %1076 = vmatprep.subr.mxu0 0.0
  %1077 = vmatpush1.msra.mxu0 %v156
  %1078 = vmatprep.subr.mxu0 0.0
  %1079 = vmatpush1.msra.mxu0 %v157
  %1080 = vmatprep.subr.mxu0 0.0
  %1081 = vmatpush1.msra.mxu0 %v158
  %1082 = vmatprep.subr.mxu0 0.0
  %1083 = vmatpush1.msra.mxu0 %v159
  %1084 = vmatprep.subr.mxu0 0.0
  %1085 = vmatpush1.msra.mxu0 %v160
  %1086 = vmatprep.subr.mxu0 0.0
  %1087 = vmatpush1.msra.mxu0 %v161
  %1088 = vmatprep.subr.mxu0 0.0
  %1089 = vmatpush1.msra.mxu0 %v162
  %1090 = vmatprep.subr.mxu0 0.0
  %1091 = vmatpush1.msra.mxu0 %v163
  %1092 = vmatprep.subr.mxu0 0.0
  %1093 = vmatpush1.msra.mxu0 %v164
  %1094 = vmatprep.subr.mxu0 0.0
  %1095 = vmatpush1.msra.mxu0 %v165
  %1096 = vmatprep.subr.mxu0 0.0
  %1097 = vmatpush1.msra.mxu0 %v166
  %1098 = vmatprep.mubr.f32.mxu0 %v25
  %1099 = vmatmul.mubr.f32.gmra.mrb[0].mxu0 %v24
  %v1100 = vpop.f32.mrb[0].mxu0
  %v1101 = vadd.f32 %v1031, %v1100
  %v1102 = vpop.f32.mrb[0].mxu0
  %1103 = vdwg.mxu0
  %1104 = vmatprep.subr.mxu0 0.0
  %1105 = vmatpush1.msra.mxu0 %v167
  %1106 = vmatprep.subr.mxu0 0.0
  %1107 = vmatpush1.msra.mxu0 %v168
  %1108 = vmatprep.subr.mxu0 0.0
  %1109 = vmatpush1.msra.mxu0 %v169
  %1110 = vmatprep.subr.mxu0 0.0
  %1111 = vmatpush1.msra.mxu0 %v170
  %1112 = vmatprep.subr.mxu0 0.0
  %1113 = vmatpush1.msra.mxu0 %v171
  %1114 = vmatprep.subr.mxu0 0.0
  %1115 = vmatpush1.msra.mxu0 %v172
  %1116 = vmatprep.subr.mxu0 0.0
  %1117 = vmatpush1.msra.mxu0 %v173
  %1118 = vmatprep.subr.mxu0 0.0
  %1119 = vmatpush1.msra.mxu0 %v174
  %1120 = vmatprep.subr.mxu0 0.0
  %1121 = vmatpush1.msra.mxu0 %v175
  %1122 = vmatprep.subr.mxu0 0.0
  %1123 = vmatpush1.msra.mxu0 %v176
  %1124 = vmatprep.subr.mxu0 0.0
  %1125 = vmatpush1.msra.mxu0 %v177
  %1126 = vmatprep.subr.mxu0 0.0
  %1127 = vmatpush1.msra.mxu0 %v178
  %1128 = vmatprep.subr.mxu0 0.0
  %1129 = vmatpush1.msra.mxu0 %v179
  %1130 = vmatprep.subr.mxu0 0.0
  %1131 = vmatpush1.msra.mxu0 %v180
  %1132 = vmatprep.subr.mxu0 0.0
  %1133 = vmatpush1.msra.mxu0 %v181
  %1134 = vmatprep.subr.mxu0 0.0
  %1135 = vmatpush1.msra.mxu0 %v182
  %1136 = vmatprep.subr.mxu0 0.0
  %1137 = vmatpush1.msra.mxu0 %v183
  %1138 = vmatprep.subr.mxu0 0.0
  %1139 = vmatpush1.msra.mxu0 %v184
  %1140 = vmatprep.subr.mxu0 0.0
  %1141 = vmatpush1.msra.mxu0 %v185
  %1142 = vmatprep.subr.mxu0 0.0
  %1143 = vmatpush1.msra.mxu0 %v186
  %1144 = vmatprep.subr.mxu0 0.0
  %1145 = vmatpush1.msra.mxu0 %v187
  %1146 = vmatprep.subr.mxu0 0.0
  %1147 = vmatpush1.msra.mxu0 %v188
  %1148 = vmatprep.subr.mxu0 0.0
  %1149 = vmatpush1.msra.mxu0 %v189
  %1150 = vmatprep.subr.mxu0 0.0
  %1151 = vmatpush1.msra.mxu0 %v190
  %1152 = vmatprep.subr.mxu0 0.0
  %1153 = vmatpush1.msra.mxu0 %v191
  %1154 = vmatprep.subr.mxu0 0.0
  %1155 = vmatpush1.msra.mxu0 %v192
  %1156 = vmatprep.subr.mxu0 0.0
  %1157 = vmatpush1.msra.mxu0 %v193
  %1158 = vmatprep.subr.mxu0 0.0
  %1159 = vmatpush1.msra.mxu0 %v194
  %1160 = vmatprep.subr.mxu0 0.0
  %1161 = vmatpush1.msra.mxu0 %v195
  %1162 = vmatprep.subr.mxu0 0.0
  %1163 = vmatpush1.msra.mxu0 %v196
  %1164 = vmatprep.subr.mxu0 0.0
  %1165 = vmatpush1.msra.mxu0 %v197
  %1166 = vmatprep.subr.mxu0 0.0
  %1167 = vmatpush1.msra.mxu0 %v198
  %1168 = vmatprep.mubr.f32.mxu0 %v27
  %1169 = vmatmul.mubr.f32.gmra.mrb[0].mxu0 %v26
  %v1170 = vpop.f32.mrb[0].mxu0
  %v1171 = vadd.f32 %v1101, %v1170
  %v1172 = vpop.f32.mrb[0].mxu0
  %1173 = vdwg.mxu0
  %1174 = vmatprep.subr.mxu0 0.0
  %1175 = vmatpush1.msra.mxu0 %v199
  %1176 = vmatprep.subr.mxu0 0.0
  %1177 = vmatpush1.msra.mxu0 %v200
  %1178 = vmatprep.subr.mxu0 0.0
  %1179 = vmatpush1.msra.mxu0 %v201
  %1180 = vmatprep.subr.mxu0 0.0
  %1181 = vmatpush1.msra.mxu0 %v202
  %1182 = vmatprep.subr.mxu0 0.0
  %1183 = vmatpush1.msra.mxu0 %v203
  %1184 = vmatprep.subr.mxu0 0.0
  %1185 = vmatpush1.msra.mxu0 %v204
  %1186 = vmatprep.subr.mxu0 0.0
  %1187 = vmatpush1.msra.mxu0 %v205
  %1188 = vmatprep.subr.mxu0 0.0
  %1189 = vmatpush1.msra.mxu0 %v206
  %1190 = vmatprep.subr.mxu0 0.0
  %1191 = vmatpush1.msra.mxu0 %v207
  %1192 = vmatprep.subr.mxu0 0.0
  %1193 = vmatpush1.msra.mxu0 %v208
  %1194 = vmatprep.subr.mxu0 0.0
  %1195 = vmatpush1.msra.mxu0 %v209
  %1196 = vmatprep.subr.mxu0 0.0
  %1197 = vmatpush1.msra.mxu0 %v210
  %1198 = vmatprep.subr.mxu0 0.0
  %1199 = vmatpush1.msra.mxu0 %v211
  %1200 = vmatprep.subr.mxu0 0.0
  %1201 = vmatpush1.msra.mxu0 %v212
  %1202 = vmatprep.subr.mxu0 0.0
  %1203 = vmatpush1.msra.mxu0 %v213
  %1204 = vmatprep.subr.mxu0 0.0
  %1205 = vmatpush1.msra.mxu0 %v214
  %1206 = vmatprep.subr.mxu0 0.0
  %1207 = vmatpush1.msra.mxu0 %v215
  %1208 = vmatprep.subr.mxu0 0.0
  %1209 = vmatpush1.msra.mxu0 %v216
  %1210 = vmatprep.subr.mxu0 0.0
  %1211 = vmatpush1.msra.mxu0 %v217
  %1212 = vmatprep.subr.mxu0 0.0
  %1213 = vmatpush1.msra.mxu0 %v218
  %1214 = vmatprep.subr.mxu0 0.0
  %1215 = vmatpush1.msra.mxu0 %v219
  %1216 = vmatprep.subr.mxu0 0.0
  %1217 = vmatpush1.msra.mxu0 %v220
  %1218 = vmatprep.subr.mxu0 0.0
  %1219 = vmatpush1.msra.mxu0 %v221
  %1220 = vmatprep.subr.mxu0 0.0
  %1221 = vmatpush1.msra.mxu0 %v222
  %1222 = vmatprep.subr.mxu0 0.0
  %1223 = vmatpush1.msra.mxu0 %v223
  %1224 = vmatprep.subr.mxu0 0.0
  %1225 = vmatpush1.msra.mxu0 %v224
  %1226 = vmatprep.subr.mxu0 0.0
  %1227 = vmatpush1.msra.mxu0 %v225
  %1228 = vmatprep.subr.mxu0 0.0
  %1229 = vmatpush1.msra.mxu0 %v226
  %1230 = vmatprep.subr.mxu0 0.0
  %1231 = vmatpush1.msra.mxu0 %v227
  %1232 = vmatprep.subr.mxu0 0.0
  %1233 = vmatpush1.msra.mxu0 %v228
  %1234 = vmatprep.subr.mxu0 0.0
  %1235 = vmatpush1.msra.mxu0 %v229
  %1236 = vmatprep.subr.mxu0 0.0
  %1237 = vmatpush1.msra.mxu0 %v230
  %1238 = vmatprep.mubr.f32.mxu0 %v29
  %1239 = vmatmul.mubr.f32.gmra.mrb[0].mxu0 %v28
  %v1240 = vpop.f32.mrb[0].mxu0
  %v1241 = vadd.f32 %v1171, %v1240
  %v1242 = vpop.f32.mrb[0].mxu0
  %1243 = vdwg.mxu0
  %1244 = vmatprep.subr.mxu0 0.0
  %1245 = vmatpush1.msra.mxu0 %v231
  %1246 = vmatprep.subr.mxu0 0.0
  %1247 = vmatpush1.msra.mxu0 %v232
  %1248 = vmatprep.subr.mxu0 0.0
  %1249 = vmatpush1.msra.mxu0 %v233
  %1250 = vmatprep.subr.mxu0 0.0
  %1251 = vmatpush1.msra.mxu0 %v234
  %1252 = vmatprep.subr.mxu0 0.0
  %1253 = vmatpush1.msra.mxu0 %v235
  %1254 = vmatprep.subr.mxu0 0.0
  %1255 = vmatpush1.msra.mxu0 %v236
  %1256 = vmatprep.subr.mxu0 0.0
  %1257 = vmatpush1.msra.mxu0 %v237
  %1258 = vmatprep.subr.mxu0 0.0
  %1259 = vmatpush1.msra.mxu0 %v238
  %1260 = vmatprep.subr.mxu0 0.0
  %1261 = vmatpush1.msra.mxu0 %v239
  %1262 = vmatprep.subr.mxu0 0.0
  %1263 = vmatpush1.msra.mxu0 %v240
  %1264 = vmatprep.subr.mxu0 0.0
  %1265 = vmatpush1.msra.mxu0 %v241
  %1266 = vmatprep.subr.mxu0 0.0
  %1267 = vmatpush1.msra.mxu0 %v242
  %1268 = vmatprep.subr.mxu0 0.0
  %1269 = vmatpush1.msra.mxu0 %v243
  %1270 = vmatprep.subr.mxu0 0.0
  %1271 = vmatpush1.msra.mxu0 %v244
  %1272 = vmatprep.subr.mxu0 0.0
  %1273 = vmatpush1.msra.mxu0 %v245
  %1274 = vmatprep.subr.mxu0 0.0
  %1275 = vmatpush1.msra.mxu0 %v246
  %1276 = vmatprep.subr.mxu0 0.0
  %1277 = vmatpush1.msra.mxu0 %v247
  %1278 = vmatprep.subr.mxu0 0.0
  %1279 = vmatpush1.msra.mxu0 %v248
  %1280 = vmatprep.subr.mxu0 0.0
  %1281 = vmatpush1.msra.mxu0 %v249
  %1282 = vmatprep.subr.mxu0 0.0
  %1283 = vmatpush1.msra.mxu0 %v250
  %1284 = vmatprep.subr.mxu0 0.0
  %1285 = vmatpush1.msra.mxu0 %v251
  %1286 = vmatprep.subr.mxu0 0.0
  %1287 = vmatpush1.msra.mxu0 %v252
  %1288 = vmatprep.subr.mxu0 0.0
  %1289 = vmatpush1.msra.mxu0 %v253
  %1290 = vmatprep.subr.mxu0 0.0
  %1291 = vmatpush1.msra.mxu0 %v254
  %1292 = vmatprep.subr.mxu0 0.0
  %1293 = vmatpush1.msra.mxu0 %v255
  %1294 = vmatprep.subr.mxu0 0.0
  %1295 = vmatpush1.msra.mxu0 %v256
  %1296 = vmatprep.subr.mxu0 0.0
  %1297 = vmatpush1.msra.mxu0 %v257
  %1298 = vmatprep.subr.mxu0 0.0
  %1299 = vmatpush1.msra.mxu0 %v258
  %1300 = vmatprep.subr.mxu0 0.0
  %1301 = vmatpush1.msra.mxu0 %v259
  %1302 = vmatprep.subr.mxu0 0.0
  %1303 = vmatpush1.msra.mxu0 %v260
  %1304 = vmatprep.subr.mxu0 0.0
  %1305 = vmatpush1.msra.mxu0 %v261
  %1306 = vmatprep.subr.mxu0 0.0
  %1307 = vmatpush1.msra.mxu0 %v262
  %1308 = vmatprep.mubr.f32.mxu0 %v31
  %1309 = vmatmul.mubr.f32.gmra.mrb[0].mxu0 %v30
  %v1310 = vpop.f32.mrb[0].mxu0
  %v1311 = vadd.f32 %v1241, %v1310
  %v1312 = vpop.f32.mrb[0].mxu0
  %1313 = vdwg.mxu0
  %1314 = vmatprep.subr.mxu0 0.0
  %1315 = vmatpush1.msra.mxu0 %v263
  %1316 = vmatprep.subr.mxu0 0.0
  %1317 = vmatpush1.msra.mxu0 %v264
  %1318 = vmatprep.subr.mxu0 0.0
  %1319 = vmatpush1.msra.mxu0 %v265
  %1320 = vmatprep.subr.mxu0 0.0
  %1321 = vmatpush1.msra.mxu0 %v266
  %1322 = vmatprep.subr.mxu0 0.0
  %1323 = vmatpush1.msra.mxu0 %v267
  %1324 = vmatprep.subr.mxu0 0.0
  %1325 = vmatpush1.msra.mxu0 %v268
  %1326 = vmatprep.subr.mxu0 0.0
  %1327 = vmatpush1.msra.mxu0 %v269
  %1328 = vmatprep.subr.mxu0 0.0
  %1329 = vmatpush1.msra.mxu0 %v270
  %1330 = vmatprep.subr.mxu0 0.0
  %1331 = vmatpush1.msra.mxu0 %v271
  %1332 = vmatprep.subr.mxu0 0.0
  %1333 = vmatpush1.msra.mxu0 %v272
  %1334 = vmatprep.subr.mxu0 0.0
  %1335 = vmatpush1.msra.mxu0 %v273
  %1336 = vmatprep.subr.mxu0 0.0
  %1337 = vmatpush1.msra.mxu0 %v274
  %1338 = vmatprep.subr.mxu0 0.0
  %1339 = vmatpush1.msra.mxu0 %v275
  %1340 = vmatprep.subr.mxu0 0.0
  %1341 = vmatpush1.msra.mxu0 %v276
  %1342 = vmatprep.subr.mxu0 0.0
  %1343 = vmatpush1.msra.mxu0 %v277
  %1344 = vmatprep.subr.mxu0 0.0
  %1345 = vmatpush1.msra.mxu0 %v278
  %1346 = vmatprep.subr.mxu0 0.0
  %1347 = vmatpush1.msra.mxu0 %v279
  %1348 = vmatprep.subr.mxu0 0.0
  %1349 = vmatpush1.msra.mxu0 %v280
  %1350 = vmatprep.subr.mxu0 0.0
  %1351 = vmatpush1.msra.mxu0 %v281
  %1352 = vmatprep.subr.mxu0 0.0
  %1353 = vmatpush1.msra.mxu0 %v282
  %1354 = vmatprep.subr.mxu0 0.0
  %1355 = vmatpush1.msra.mxu0 %v283
  %1356 = vmatprep.subr.mxu0 0.0
  %1357 = vmatpush1.msra.mxu0 %v284
  %1358 = vmatprep.subr.mxu0 0.0
  %1359 = vmatpush1.msra.mxu0 %v285
  %1360 = vmatprep.subr.mxu0 0.0
  %1361 = vmatpush1.msra.mxu0 %v286
  %1362 = vmatprep.subr.mxu0 0.0
  %1363 = vmatpush1.msra.mxu0 %v287
  %1364 = vmatprep.subr.mxu0 0.0
  %1365 = vmatpush1.msra.mxu0 %v288
  %1366 = vmatprep.subr.mxu0 0.0
  %1367 = vmatpush1.msra.mxu0 %v289
  %1368 = vmatprep.subr.mxu0 0.0
  %1369 = vmatpush1.msra.mxu0 %v290
  %1370 = vmatprep.subr.mxu0 0.0
  %1371 = vmatpush1.msra.mxu0 %v291
  %1372 = vmatprep.subr.mxu0 0.0
  %1373 = vmatpush1.msra.mxu0 %v292
  %1374 = vmatprep.subr.mxu0 0.0
  %1375 = vmatpush1.msra.mxu0 %v293
  %1376 = vmatprep.subr.mxu0 0.0
  %1377 = vmatpush1.msra.mxu0 %v294
  %1378 = vmatprep.mubr.f32.mxu0 %v33
  %1379 = vmatmul.mubr.f32.gmra.mrb[0].mxu0 %v32
  %v1380 = vpop.f32.mrb[0].mxu0
  %v1381 = vadd.f32 %v1311, %v1380
  %v1382 = vpop.f32.mrb[0].mxu0
  %1383 = vdwg.mxu0
  %1384 = vmatprep.subr.mxu0 0.0
  %1385 = vmatpush1.msra.mxu0 %v295
  %1386 = vmatprep.subr.mxu0 0.0
  %1387 = vmatpush1.msra.mxu0 %v296
  %1388 = vmatprep.subr.mxu0 0.0
  %1389 = vmatpush1.msra.mxu0 %v297
  %1390 = vmatprep.subr.mxu0 0.0
  %1391 = vmatpush1.msra.mxu0 %v298
  %1392 = vmatprep.subr.mxu0 0.0
  %1393 = vmatpush1.msra.mxu0 %v299
  %1394 = vmatprep.subr.mxu0 0.0
  %1395 = vmatpush1.msra.mxu0 %v300
  %1396 = vmatprep.subr.mxu0 0.0
  %1397 = vmatpush1.msra.mxu0 %v301
  %1398 = vmatprep.subr.mxu0 0.0
  %1399 = vmatpush1.msra.mxu0 %v302
  %1400 = vmatprep.subr.mxu0 0.0
  %1401 = vmatpush1.msra.mxu0 %v303
  %1402 = vmatprep.subr.mxu0 0.0
  %1403 = vmatpush1.msra.mxu0 %v304
  %1404 = vmatprep.subr.mxu0 0.0
  %1405 = vmatpush1.msra.mxu0 %v305
  %1406 = vmatprep.subr.mxu0 0.0
  %1407 = vmatpush1.msra.mxu0 %v306
  %1408 = vmatprep.subr.mxu0 0.0
  %1409 = vmatpush1.msra.mxu0 %v307
  %1410 = vmatprep.subr.mxu0 0.0
  %1411 = vmatpush1.msra.mxu0 %v308
  %1412 = vmatprep.subr.mxu0 0.0
  %1413 = vmatpush1.msra.mxu0 %v309
  %1414 = vmatprep.subr.mxu0 0.0
  %1415 = vmatpush1.msra.mxu0 %v310
  %1416 = vmatprep.subr.mxu0 0.0
  %1417 = vmatpush1.msra.mxu0 %v311
  %1418 = vmatprep.subr.mxu0 0.0
  %1419 = vmatpush1.msra.mxu0 %v312
  %1420 = vmatprep.subr.mxu0 0.0
  %1421 = vmatpush1.msra.mxu0 %v313
  %1422 = vmatprep.subr.mxu0 0.0
  %1423 = vmatpush1.msra.mxu0 %v314
  %1424 = vmatprep.subr.mxu0 0.0
  %1425 = vmatpush1.msra.mxu0 %v315
  %1426 = vmatprep.subr.mxu0 0.0
  %1427 = vmatpush1.msra.mxu0 %v316
  %1428 = vmatprep.subr.mxu0 0.0
  %1429 = vmatpush1.msra.mxu0 %v317
  %1430 = vmatprep.subr.mxu0 0.0
  %1431 = vmatpush1.msra.mxu0 %v318
  %1432 = vmatprep.subr.mxu0 0.0
  %1433 = vmatpush1.msra.mxu0 %v319
  %1434 = vmatprep.subr.mxu0 0.0
  %1435 = vmatpush1.msra.mxu0 %v320
  %1436 = vmatprep.subr.mxu0 0.0
  %1437 = vmatpush1.msra.mxu0 %v321
  %1438 = vmatprep.subr.mxu0 0.0
  %1439 = vmatpush1.msra.mxu0 %v322
  %1440 = vmatprep.subr.mxu0 0.0
  %1441 = vmatpush1.msra.mxu0 %v323
  %1442 = vmatprep.subr.mxu0 0.0
  %1443 = vmatpush1.msra.mxu0 %v324
  %1444 = vmatprep.subr.mxu0 0.0
  %1445 = vmatpush1.msra.mxu0 %v325
  %1446 = vmatprep.subr.mxu0 0.0
  %1447 = vmatpush1.msra.mxu0 %v326
  %1448 = vmatprep.mubr.f32.mxu0 %v35
  %1449 = vmatmul.mubr.f32.gmra.mrb[0].mxu0 %v34
  %v1450 = vpop.f32.mrb[0].mxu0
  %v1451 = vadd.f32 %v1381, %v1450
  %v1452 = vpop.f32.mrb[0].mxu0
  %1453 = vdwg.mxu0
  %1454 = vmatprep.subr.mxu0 0.0
  %1455 = vmatpush1.msra.mxu0 %v327
  %1456 = vmatprep.subr.mxu0 0.0
  %1457 = vmatpush1.msra.mxu0 %v328
  %1458 = vmatprep.subr.mxu0 0.0
  %1459 = vmatpush1.msra.mxu0 %v329
  %1460 = vmatprep.subr.mxu0 0.0
  %1461 = vmatpush1.msra.mxu0 %v330
  %1462 = vmatprep.subr.mxu0 0.0
  %1463 = vmatpush1.msra.mxu0 %v331
  %1464 = vmatprep.subr.mxu0 0.0
  %1465 = vmatpush1.msra.mxu0 %v332
  %1466 = vmatprep.subr.mxu0 0.0
  %1467 = vmatpush1.msra.mxu0 %v333
  %1468 = vmatprep.subr.mxu0 0.0
  %1469 = vmatpush1.msra.mxu0 %v334
  %1470 = vmatprep.subr.mxu0 0.0
  %1471 = vmatpush1.msra.mxu0 %v335
  %1472 = vmatprep.subr.mxu0 0.0
  %1473 = vmatpush1.msra.mxu0 %v336
  %1474 = vmatprep.subr.mxu0 0.0
  %1475 = vmatpush1.msra.mxu0 %v337
  %1476 = vmatprep.subr.mxu0 0.0
  %1477 = vmatpush1.msra.mxu0 %v338
  %1478 = vmatprep.subr.mxu0 0.0
  %1479 = vmatpush1.msra.mxu0 %v339
  %1480 = vmatprep.subr.mxu0 0.0
  %1481 = vmatpush1.msra.mxu0 %v340
  %1482 = vmatprep.subr.mxu0 0.0
  %1483 = vmatpush1.msra.mxu0 %v341
  %1484 = vmatprep.subr.mxu0 0.0
  %1485 = vmatpush1.msra.mxu0 %v342
  %1486 = vmatprep.subr.mxu0 0.0
  %1487 = vmatpush1.msra.mxu0 %v343
  %1488 = vmatprep.subr.mxu0 0.0
  %1489 = vmatpush1.msra.mxu0 %v344
  %1490 = vmatprep.subr.mxu0 0.0
  %1491 = vmatpush1.msra.mxu0 %v345
  %1492 = vmatprep.subr.mxu0 0.0
  %1493 = vmatpush1.msra.mxu0 %v346
  %1494 = vmatprep.subr.mxu0 0.0
  %1495 = vmatpush1.msra.mxu0 %v347
  %1496 = vmatprep.subr.mxu0 0.0
  %1497 = vmatpush1.msra.mxu0 %v348
  %1498 = vmatprep.subr.mxu0 0.0
  %1499 = vmatpush1.msra.mxu0 %v349
  %1500 = vmatprep.subr.mxu0 0.0
  %1501 = vmatpush1.msra.mxu0 %v350
  %1502 = vmatprep.subr.mxu0 0.0
  %1503 = vmatpush1.msra.mxu0 %v351
  %1504 = vmatprep.subr.mxu0 0.0
  %1505 = vmatpush1.msra.mxu0 %v352
  %1506 = vmatprep.subr.mxu0 0.0
  %1507 = vmatpush1.msra.mxu0 %v353
  %1508 = vmatprep.subr.mxu0 0.0
  %1509 = vmatpush1.msra.mxu0 %v354
  %1510 = vmatprep.subr.mxu0 0.0
  %1511 = vmatpush1.msra.mxu0 %v355
  %1512 = vmatprep.subr.mxu0 0.0
  %1513 = vmatpush1.msra.mxu0 %v356
  %1514 = vmatprep.subr.mxu0 0.0
  %1515 = vmatpush1.msra.mxu0 %v357
  %1516 = vmatprep.subr.mxu0 0.0
  %1517 = vmatpush1.msra.mxu0 %v358
  %1518 = vmatprep.mubr.f32.mxu0 %v37
  %1519 = vmatmul.mubr.f32.gmra.mrb[0].mxu0 %v36
  %v1520 = vpop.f32.mrb[0].mxu0
  %v1521 = vadd.f32 %v1451, %v1520
  %v1522 = vpop.f32.mrb[0].mxu0
  %1523 = vdwg.mxu0
  %1524 = vmatprep.subr.mxu0 0.0
  %1525 = vmatpush1.msra.mxu0 %v359
  %1526 = vmatprep.subr.mxu0 0.0
  %1527 = vmatpush1.msra.mxu0 %v360
  %1528 = vmatprep.subr.mxu0 0.0
  %1529 = vmatpush1.msra.mxu0 %v361
  %1530 = vmatprep.subr.mxu0 0.0
  %1531 = vmatpush1.msra.mxu0 %v362
  %1532 = vmatprep.subr.mxu0 0.0
  %1533 = vmatpush1.msra.mxu0 %v363
  %1534 = vmatprep.subr.mxu0 0.0
  %1535 = vmatpush1.msra.mxu0 %v364
  %1536 = vmatprep.subr.mxu0 0.0
  %1537 = vmatpush1.msra.mxu0 %v365
  %1538 = vmatprep.subr.mxu0 0.0
  %1539 = vmatpush1.msra.mxu0 %v366
  %1540 = vmatprep.subr.mxu0 0.0
  %1541 = vmatpush1.msra.mxu0 %v367
  %1542 = vmatprep.subr.mxu0 0.0
  %1543 = vmatpush1.msra.mxu0 %v368
  %1544 = vmatprep.subr.mxu0 0.0
  %1545 = vmatpush1.msra.mxu0 %v369
  %1546 = vmatprep.subr.mxu0 0.0
  %1547 = vmatpush1.msra.mxu0 %v370
  %1548 = vmatprep.subr.mxu0 0.0
  %1549 = vmatpush1.msra.mxu0 %v371
  %1550 = vmatprep.subr.mxu0 0.0
  %1551 = vmatpush1.msra.mxu0 %v372
  %1552 = vmatprep.subr.mxu0 0.0
  %1553 = vmatpush1.msra.mxu0 %v373
  %1554 = vmatprep.subr.mxu0 0.0
  %1555 = vmatpush1.msra.mxu0 %v374
  %1556 = vmatprep.subr.mxu0 0.0
  %1557 = vmatpush1.msra.mxu0 %v375
  %1558 = vmatprep.subr.mxu0 0.0
  %1559 = vmatpush1.msra.mxu0 %v376
  %1560 = vmatprep.subr.mxu0 0.0
  %1561 = vmatpush1.msra.mxu0 %v377
  %1562 = vmatprep.subr.mxu0 0.0
  %1563 = vmatpush1.msra.mxu0 %v378
  %1564 = vmatprep.subr.mxu0 0.0
  %1565 = vmatpush1.msra.mxu0 %v379
  %1566 = vmatprep.subr.mxu0 0.0
  %1567 = vmatpush1.msra.mxu0 %v380
  %1568 = vmatprep.subr.mxu0 0.0
  %1569 = vmatpush1.msra.mxu0 %v381
  %1570 = vmatprep.subr.mxu0 0.0
  %1571 = vmatpush1.msra.mxu0 %v382
  %1572 = vmatprep.subr.mxu0 0.0
  %1573 = vmatpush1.msra.mxu0 %v383
  %1574 = vmatprep.subr.mxu0 0.0
  %1575 = vmatpush1.msra.mxu0 %v384
  %1576 = vmatprep.subr.mxu0 0.0
  %1577 = vmatpush1.msra.mxu0 %v385
  %1578 = vmatprep.subr.mxu0 0.0
  %1579 = vmatpush1.msra.mxu0 %v386
  %1580 = vmatprep.subr.mxu0 0.0
  %1581 = vmatpush1.msra.mxu0 %v387
  %1582 = vmatprep.subr.mxu0 0.0
  %1583 = vmatpush1.msra.mxu0 %v388
  %1584 = vmatprep.subr.mxu0 0.0
  %1585 = vmatpush1.msra.mxu0 %v389
  %1586 = vmatprep.subr.mxu0 0.0
  %1587 = vmatpush1.msra.mxu0 %v390
  %1588 = vmatprep.mubr.f32.mxu0 %v39
  %1589 = vmatmul.mubr.f32.gmra.mrb[0].mxu0 %v38
  %v1590 = vpop.f32.mrb[0].mxu0
  %v1591 = vadd.f32 %v1521, %v1590
  %v1592 = vpop.f32.mrb[0].mxu0
  %1593 = vdwg.mxu0
  %1594 = vmatprep.subr.mxu0 0.0
  %1595 = vmatpush1.msra.mxu0 %v391
  %1596 = vmatprep.subr.mxu0 0.0
  %1597 = vmatpush1.msra.mxu0 %v392
  %1598 = vmatprep.subr.mxu0 0.0
  %1599 = vmatpush1.msra.mxu0 %v393
  %1600 = vmatprep.subr.mxu0 0.0
  %1601 = vmatpush1.msra.mxu0 %v394
  %1602 = vmatprep.subr.mxu0 0.0
  %1603 = vmatpush1.msra.mxu0 %v395
  %1604 = vmatprep.subr.mxu0 0.0
  %1605 = vmatpush1.msra.mxu0 %v396
  %1606 = vmatprep.subr.mxu0 0.0
  %1607 = vmatpush1.msra.mxu0 %v397
  %1608 = vmatprep.subr.mxu0 0.0
  %1609 = vmatpush1.msra.mxu0 %v398
  %1610 = vmatprep.subr.mxu0 0.0
  %1611 = vmatpush1.msra.mxu0 %v399
  %1612 = vmatprep.subr.mxu0 0.0
  %1613 = vmatpush1.msra.mxu0 %v400
  %1614 = vmatprep.subr.mxu0 0.0
  %1615 = vmatpush1.msra.mxu0 %v401
  %1616 = vmatprep.subr.mxu0 0.0
  %1617 = vmatpush1.msra.mxu0 %v402
  %1618 = vmatprep.subr.mxu0 0.0
  %1619 = vmatpush1.msra.mxu0 %v403
  %1620 = vmatprep.subr.mxu0 0.0
  %1621 = vmatpush1.msra.mxu0 %v404
  %1622 = vmatprep.subr.mxu0 0.0
  %1623 = vmatpush1.msra.mxu0 %v405
  %1624 = vmatprep.subr.mxu0 0.0
  %1625 = vmatpush1.msra.mxu0 %v406
  %1626 = vmatprep.subr.mxu0 0.0
  %1627 = vmatpush1.msra.mxu0 %v407
  %1628 = vmatprep.subr.mxu0 0.0
  %1629 = vmatpush1.msra.mxu0 %v408
  %1630 = vmatprep.subr.mxu0 0.0
  %1631 = vmatpush1.msra.mxu0 %v409
  %1632 = vmatprep.subr.mxu0 0.0
  %1633 = vmatpush1.msra.mxu0 %v410
  %1634 = vmatprep.subr.mxu0 0.0
  %1635 = vmatpush1.msra.mxu0 %v411
  %1636 = vmatprep.subr.mxu0 0.0
  %1637 = vmatpush1.msra.mxu0 %v412
  %1638 = vmatprep.subr.mxu0 0.0
  %1639 = vmatpush1.msra.mxu0 %v413
  %1640 = vmatprep.subr.mxu0 0.0
  %1641 = vmatpush1.msra.mxu0 %v414
  %1642 = vmatprep.subr.mxu0 0.0
  %1643 = vmatpush1.msra.mxu0 %v415
  %1644 = vmatprep.subr.mxu0 0.0
  %1645 = vmatpush1.msra.mxu0 %v416
  %1646 = vmatprep.subr.mxu0 0.0
  %1647 = vmatpush1.msra.mxu0 %v417
  %1648 = vmatprep.subr.mxu0 0.0
  %1649 = vmatpush1.msra.mxu0 %v418
  %1650 = vmatprep.subr.mxu0 0.0
  %1651 = vmatpush1.msra.mxu0 %v419
  %1652 = vmatprep.subr.mxu0 0.0
  %1653 = vmatpush1.msra.mxu0 %v420
  %1654 = vmatprep.subr.mxu0 0.0
  %1655 = vmatpush1.msra.mxu0 %v421
  %1656 = vmatprep.subr.mxu0 0.0
  %1657 = vmatpush1.msra.mxu0 %v422
  %1658 = vmatprep.mubr.f32.mxu0 %v41
  %1659 = vmatmul.mubr.f32.gmra.mrb[0].mxu0 %v40
  %v1660 = vpop.f32.mrb[0].mxu0
  %v1661 = vadd.f32 %v1591, %v1660
  %v1662 = vpop.f32.mrb[0].mxu0
  %1663 = vdwg.mxu0
  %1664 = vmatprep.subr.mxu0 0.0
  %1665 = vmatpush1.msra.mxu0 %v423
  %1666 = vmatprep.subr.mxu0 0.0
  %1667 = vmatpush1.msra.mxu0 %v424
  %1668 = vmatprep.subr.mxu0 0.0
  %1669 = vmatpush1.msra.mxu0 %v425
  %1670 = vmatprep.subr.mxu0 0.0
  %1671 = vmatpush1.msra.mxu0 %v426
  %1672 = vmatprep.subr.mxu0 0.0
  %1673 = vmatpush1.msra.mxu0 %v427
  %1674 = vmatprep.subr.mxu0 0.0
  %1675 = vmatpush1.msra.mxu0 %v428
  %1676 = vmatprep.subr.mxu0 0.0
  %1677 = vmatpush1.msra.mxu0 %v429
  %1678 = vmatprep.subr.mxu0 0.0
  %1679 = vmatpush1.msra.mxu0 %v430
  %1680 = vmatprep.subr.mxu0 0.0
  %1681 = vmatpush1.msra.mxu0 %v431
  %1682 = vmatprep.subr.mxu0 0.0
  %1683 = vmatpush1.msra.mxu0 %v432
  %1684 = vmatprep.subr.mxu0 0.0
  %1685 = vmatpush1.msra.mxu0 %v433
  %1686 = vmatprep.subr.mxu0 0.0
  %1687 = vmatpush1.msra.mxu0 %v434
  %1688 = vmatprep.subr.mxu0 0.0
  %1689 = vmatpush1.msra.mxu0 %v435
  %1690 = vmatprep.subr.mxu0 0.0
  %1691 = vmatpush1.msra.mxu0 %v436
  %1692 = vmatprep.subr.mxu0 0.0
  %1693 = vmatpush1.msra.mxu0 %v437
  %1694 = vmatprep.subr.mxu0 0.0
  %1695 = vmatpush1.msra.mxu0 %v438
  %1696 = vmatprep.subr.mxu0 0.0
  %1697 = vmatpush1.msra.mxu0 %v439
  %1698 = vmatprep.subr.mxu0 0.0
  %1699 = vmatpush1.msra.mxu0 %v440
  %1700 = vmatprep.subr.mxu0 0.0
  %1701 = vmatpush1.msra.mxu0 %v441
  %1702 = vmatprep.subr.mxu0 0.0
  %1703 = vmatpush1.msra.mxu0 %v442
  %1704 = vmatprep.subr.mxu0 0.0
  %1705 = vmatpush1.msra.mxu0 %v443
  %1706 = vmatprep.subr.mxu0 0.0
  %1707 = vmatpush1.msra.mxu0 %v444
  %1708 = vmatprep.subr.mxu0 0.0
  %1709 = vmatpush1.msra.mxu0 %v445
  %1710 = vmatprep.subr.mxu0 0.0
  %1711 = vmatpush1.msra.mxu0 %v446
  %1712 = vmatprep.subr.mxu0 0.0
  %1713 = vmatpush1.msra.mxu0 %v447
  %1714 = vmatprep.subr.mxu0 0.0
  %1715 = vmatpush1.msra.mxu0 %v448
  %1716 = vmatprep.subr.mxu0 0.0
  %1717 = vmatpush1.msra.mxu0 %v449
  %1718 = vmatprep.subr.mxu0 0.0
  %1719 = vmatpush1.msra.mxu0 %v450
  %1720 = vmatprep.subr.mxu0 0.0
  %1721 = vmatpush1.msra.mxu0 %v451
  %1722 = vmatprep.subr.mxu0 0.0
  %1723 = vmatpush1.msra.mxu0 %v452
  %1724 = vmatprep.subr.mxu0 0.0
  %1725 = vmatpush1.msra.mxu0 %v453
  %1726 = vmatprep.subr.mxu0 0.0
  %1727 = vmatpush1.msra.mxu0 %v454
  %1728 = vmatprep.mubr.f32.mxu0 %v43
  %1729 = vmatmul.mubr.f32.gmra.mrb[0].mxu0 %v42
  %v1730 = vpop.f32.mrb[0].mxu0
  %v1731 = vadd.f32 %v1661, %v1730
  %v1732 = vpop.f32.mrb[0].mxu0
  %1733 = vdwg.mxu0
  %1734 = vmatprep.subr.mxu0 0.0
  %1735 = vmatpush1.msra.mxu0 %v455
  %1736 = vmatprep.subr.mxu0 0.0
  %1737 = vmatpush1.msra.mxu0 %v456
  %1738 = vmatprep.subr.mxu0 0.0
  %1739 = vmatpush1.msra.mxu0 %v457
  %1740 = vmatprep.subr.mxu0 0.0
  %1741 = vmatpush1.msra.mxu0 %v458
  %1742 = vmatprep.subr.mxu0 0.0
  %1743 = vmatpush1.msra.mxu0 %v459
  %1744 = vmatprep.subr.mxu0 0.0
  %1745 = vmatpush1.msra.mxu0 %v460
  %1746 = vmatprep.subr.mxu0 0.0
  %1747 = vmatpush1.msra.mxu0 %v461
  %1748 = vmatprep.subr.mxu0 0.0
  %1749 = vmatpush1.msra.mxu0 %v462
  %1750 = vmatprep.subr.mxu0 0.0
  %1751 = vmatpush1.msra.mxu0 %v463
  %1752 = vmatprep.subr.mxu0 0.0
  %1753 = vmatpush1.msra.mxu0 %v464
  %1754 = vmatprep.subr.mxu0 0.0
  %1755 = vmatpush1.msra.mxu0 %v465
  %1756 = vmatprep.subr.mxu0 0.0
  %1757 = vmatpush1.msra.mxu0 %v466
  %1758 = vmatprep.subr.mxu0 0.0
  %1759 = vmatpush1.msra.mxu0 %v467
  %1760 = vmatprep.subr.mxu0 0.0
  %1761 = vmatpush1.msra.mxu0 %v468
  %1762 = vmatprep.subr.mxu0 0.0
  %1763 = vmatpush1.msra.mxu0 %v469
  %1764 = vmatprep.subr.mxu0 0.0
  %1765 = vmatpush1.msra.mxu0 %v470
  %1766 = vmatprep.subr.mxu0 0.0
  %1767 = vmatpush1.msra.mxu0 %v471
  %1768 = vmatprep.subr.mxu0 0.0
  %1769 = vmatpush1.msra.mxu0 %v472
  %1770 = vmatprep.subr.mxu0 0.0
  %1771 = vmatpush1.msra.mxu0 %v473
  %1772 = vmatprep.subr.mxu0 0.0
  %1773 = vmatpush1.msra.mxu0 %v474
  %1774 = vmatprep.subr.mxu0 0.0
  %1775 = vmatpush1.msra.mxu0 %v475
  %1776 = vmatprep.subr.mxu0 0.0
  %1777 = vmatpush1.msra.mxu0 %v476
  %1778 = vmatprep.subr.mxu0 0.0
  %1779 = vmatpush1.msra.mxu0 %v477
  %1780 = vmatprep.subr.mxu0 0.0
  %1781 = vmatpush1.msra.mxu0 %v478
  %1782 = vmatprep.subr.mxu0 0.0
  %1783 = vmatpush1.msra.mxu0 %v479
  %1784 = vmatprep.subr.mxu0 0.0
  %1785 = vmatpush1.msra.mxu0 %v480
  %1786 = vmatprep.subr.mxu0 0.0
  %1787 = vmatpush1.msra.mxu0 %v481
  %1788 = vmatprep.subr.mxu0 0.0
  %1789 = vmatpush1.msra.mxu0 %v482
  %1790 = vmatprep.subr.mxu0 0.0
  %1791 = vmatpush1.msra.mxu0 %v483
  %1792 = vmatprep.subr.mxu0 0.0
  %1793 = vmatpush1.msra.mxu0 %v484
  %1794 = vmatprep.subr.mxu0 0.0
  %1795 = vmatpush1.msra.mxu0 %v485
  %1796 = vmatprep.subr.mxu0 0.0
  %1797 = vmatpush1.msra.mxu0 %v486
  %1798 = vmatprep.mubr.f32.mxu0 %v45
  %1799 = vmatmul.mubr.f32.gmra.mrb[0].mxu0 %v44
  %v1800 = vpop.f32.mrb[0].mxu0
  %v1801 = vadd.f32 %v1731, %v1800
  %v1802 = vpop.f32.mrb[0].mxu0
  %1803 = vdwg.mxu0
  %1804 = vmatprep.subr.mxu0 0.0
  %1805 = vmatpush1.msra.mxu0 %v487
  %1806 = vmatprep.subr.mxu0 0.0
  %1807 = vmatpush1.msra.mxu0 %v488
  %1808 = vmatprep.subr.mxu0 0.0
  %1809 = vmatpush1.msra.mxu0 %v489
  %1810 = vmatprep.subr.mxu0 0.0
  %1811 = vmatpush1.msra.mxu0 %v490
  %1812 = vmatprep.subr.mxu0 0.0
  %1813 = vmatpush1.msra.mxu0 %v491
  %1814 = vmatprep.subr.mxu0 0.0
  %1815 = vmatpush1.msra.mxu0 %v492
  %1816 = vmatprep.subr.mxu0 0.0
  %1817 = vmatpush1.msra.mxu0 %v493
  %1818 = vmatprep.subr.mxu0 0.0
  %1819 = vmatpush1.msra.mxu0 %v494
  %1820 = vmatprep.subr.mxu0 0.0
  %1821 = vmatpush1.msra.mxu0 %v495
  %1822 = vmatprep.subr.mxu0 0.0
  %1823 = vmatpush1.msra.mxu0 %v496
  %1824 = vmatprep.subr.mxu0 0.0
  %1825 = vmatpush1.msra.mxu0 %v497
  %1826 = vmatprep.subr.mxu0 0.0
  %1827 = vmatpush1.msra.mxu0 %v498
  %1828 = vmatprep.subr.mxu0 0.0
  %1829 = vmatpush1.msra.mxu0 %v499
  %1830 = vmatprep.subr.mxu0 0.0
  %1831 = vmatpush1.msra.mxu0 %v500
  %1832 = vmatprep.subr.mxu0 0.0
  %1833 = vmatpush1.msra.mxu0 %v501
  %1834 = vmatprep.subr.mxu0 0.0
  %1835 = vmatpush1.msra.mxu0 %v502
  %1836 = vmatprep.subr.mxu0 0.0
  %1837 = vmatpush1.msra.mxu0 %v503
  %1838 = vmatprep.subr.mxu0 0.0
  %1839 = vmatpush1.msra.mxu0 %v504
  %1840 = vmatprep.subr.mxu0 0.0
  %1841 = vmatpush1.msra.mxu0 %v505
  %1842 = vmatprep.subr.mxu0 0.0
  %1843 = vmatpush1.msra.mxu0 %v506
  %1844 = vmatprep.subr.mxu0 0.0
  %1845 = vmatpush1.msra.mxu0 %v507
  %1846 = vmatprep.subr.mxu0 0.0
  %1847 = vmatpush1.msra.mxu0 %v508
  %1848 = vmatprep.subr.mxu0 0.0
  %1849 = vmatpush1.msra.mxu0 %v509
  %1850 = vmatprep.subr.mxu0 0.0
  %1851 = vmatpush1.msra.mxu0 %v510
  %1852 = vmatprep.subr.mxu0 0.0
  %1853 = vmatpush1.msra.mxu0 %v511
  %1854 = vmatprep.subr.mxu0 0.0
  %1855 = vmatpush1.msra.mxu0 %v512
  %1856 = vmatprep.subr.mxu0 0.0
  %1857 = vmatpush1.msra.mxu0 %v513
  %1858 = vmatprep.subr.mxu0 0.0
  %1859 = vmatpush1.msra.mxu0 %v514
  %1860 = vmatprep.subr.mxu0 0.0
  %1861 = vmatpush1.msra.mxu0 %v515
  %1862 = vmatprep.subr.mxu0 0.0
  %1863 = vmatpush1.msra.mxu0 %v516
  %1864 = vmatprep.subr.mxu0 0.0
  %1865 = vmatpush1.msra.mxu0 %v517
  %1866 = vmatprep.subr.mxu0 0.0
  %1867 = vmatpush1.msra.mxu0 %v518
  %1868 = vmatprep.mubr.f32.mxu0 %v47
  %1869 = vmatmul.mubr.f32.gmra.mrb[0].mxu0 %v46
  %v1870 = vpop.f32.mrb[0].mxu0
  %v1871 = vadd.f32 %v1801, %v1870
  %v1872 = vpop.f32.mrb[0].mxu0
  %1873 = vdwg.mxu0
  %1874 = vmatprep.subr.mxu0 0.0
  %1875 = vmatpush1.msra.mxu0 %v519
  %1876 = vmatprep.subr.mxu0 0.0
  %1877 = vmatpush1.msra.mxu0 %v520
  %1878 = vmatprep.subr.mxu0 0.0
  %1879 = vmatpush1.msra.mxu0 %v521
  %1880 = vmatprep.subr.mxu0 0.0
  %1881 = vmatpush1.msra.mxu0 %v522
  %1882 = vmatprep.subr.mxu0 0.0
  %1883 = vmatpush1.msra.mxu0 %v523
  %1884 = vmatprep.subr.mxu0 0.0
  %1885 = vmatpush1.msra.mxu0 %v524
  %1886 = vmatprep.subr.mxu0 0.0
  %1887 = vmatpush1.msra.mxu0 %v525
  %1888 = vmatprep.subr.mxu0 0.0
  %1889 = vmatpush1.msra.mxu0 %v526
  %1890 = vmatprep.subr.mxu0 0.0
  %1891 = vmatpush1.msra.mxu0 %v527
  %1892 = vmatprep.subr.mxu0 0.0
  %1893 = vmatpush1.msra.mxu0 %v528
  %1894 = vmatprep.subr.mxu0 0.0
  %1895 = vmatpush1.msra.mxu0 %v529
  %1896 = vmatprep.subr.mxu0 0.0
  %1897 = vmatpush1.msra.mxu0 %v530
  %1898 = vmatprep.subr.mxu0 0.0
  %1899 = vmatpush1.msra.mxu0 %v531
  %1900 = vmatprep.subr.mxu0 0.0
  %1901 = vmatpush1.msra.mxu0 %v532
  %1902 = vmatprep.subr.mxu0 0.0
  %1903 = vmatpush1.msra.mxu0 %v533
  %1904 = vmatprep.subr.mxu0 0.0
  %1905 = vmatpush1.msra.mxu0 %v534
  %1906 = vmatprep.subr.mxu0 0.0
  %1907 = vmatpush1.msra.mxu0 %v535
  %1908 = vmatprep.subr.mxu0 0.0
  %1909 = vmatpush1.msra.mxu0 %v536
  %1910 = vmatprep.subr.mxu0 0.0
  %1911 = vmatpush1.msra.mxu0 %v537
  %1912 = vmatprep.subr.mxu0 0.0
  %1913 = vmatpush1.msra.mxu0 %v538
  %1914 = vmatprep.subr.mxu0 0.0
  %1915 = vmatpush1.msra.mxu0 %v539
  %1916 = vmatprep.subr.mxu0 0.0
  %1917 = vmatpush1.msra.mxu0 %v540
  %1918 = vmatprep.subr.mxu0 0.0
  %1919 = vmatpush1.msra.mxu0 %v541
  %1920 = vmatprep.subr.mxu0 0.0
  %1921 = vmatpush1.msra.mxu0 %v542
  %1922 = vmatprep.subr.mxu0 0.0
  %1923 = vmatpush1.msra.mxu0 %v543
  %1924 = vmatprep.subr.mxu0 0.0
  %1925 = vmatpush1.msra.mxu0 %v544
  %1926 = vmatprep.subr.mxu0 0.0
  %1927 = vmatpush1.msra.mxu0 %v545
  %1928 = vmatprep.subr.mxu0 0.0
  %1929 = vmatpush1.msra.mxu0 %v546
  %1930 = vmatprep.subr.mxu0 0.0
  %1931 = vmatpush1.msra.mxu0 %v547
  %1932 = vmatprep.subr.mxu0 0.0
  %1933 = vmatpush1.msra.mxu0 %v548
  %1934 = vmatprep.subr.mxu0 0.0
  %1935 = vmatpush1.msra.mxu0 %v549
  %1936 = vmatprep.subr.mxu0 0.0
  %1937 = vmatpush1.msra.mxu0 %v550
  %1938 = vmatprep.mubr.f32.mxu0 %v49
  %1939 = vmatmul.mubr.f32.gmra.mrb[0].mxu0 %v48
  %v1940 = vpop.f32.mrb[0].mxu0
  %v1941 = vadd.f32 %v1871, %v1940
  %v1942 = vpop.f32.mrb[0].mxu0
  %1943 = vdwg.mxu0
  %1944 = vmatprep.subr.mxu0 0.0
  %1945 = vmatpush1.msra.mxu0 %v551
  %1946 = vmatprep.subr.mxu0 0.0
  %1947 = vmatpush1.msra.mxu0 %v552
  %1948 = vmatprep.subr.mxu0 0.0
  %1949 = vmatpush1.msra.mxu0 %v553
  %1950 = vmatprep.subr.mxu0 0.0
  %1951 = vmatpush1.msra.mxu0 %v554
  %1952 = vmatprep.subr.mxu0 0.0
  %1953 = vmatpush1.msra.mxu0 %v555
  %1954 = vmatprep.subr.mxu0 0.0
  %1955 = vmatpush1.msra.mxu0 %v556
  %1956 = vmatprep.subr.mxu0 0.0
  %1957 = vmatpush1.msra.mxu0 %v557
  %1958 = vmatprep.subr.mxu0 0.0
  %1959 = vmatpush1.msra.mxu0 %v558
  %1960 = vmatprep.subr.mxu0 0.0
  %1961 = vmatpush1.msra.mxu0 %v559
  %1962 = vmatprep.subr.mxu0 0.0
  %1963 = vmatpush1.msra.mxu0 %v560
  %1964 = vmatprep.subr.mxu0 0.0
  %1965 = vmatpush1.msra.mxu0 %v561
  %1966 = vmatprep.subr.mxu0 0.0
  %1967 = vmatpush1.msra.mxu0 %v562
  %1968 = vmatprep.subr.mxu0 0.0
  %1969 = vmatpush1.msra.mxu0 %v563
  %1970 = vmatprep.subr.mxu0 0.0
  %1971 = vmatpush1.msra.mxu0 %v564
  %1972 = vmatprep.subr.mxu0 0.0
  %1973 = vmatpush1.msra.mxu0 %v565
  %1974 = vmatprep.subr.mxu0 0.0
  %1975 = vmatpush1.msra.mxu0 %v566
  %1976 = vmatprep.subr.mxu0 0.0
  %1977 = vmatpush1.msra.mxu0 %v567
  %1978 = vmatprep.subr.mxu0 0.0
  %1979 = vmatpush1.msra.mxu0 %v568
  %1980 = vmatprep.subr.mxu0 0.0
  %1981 = vmatpush1.msra.mxu0 %v569
  %1982 = vmatprep.subr.mxu0 0.0
  %1983 = vmatpush1.msra.mxu0 %v570
  %1984 = vmatprep.subr.mxu0 0.0
  %1985 = vmatpush1.msra.mxu0 %v571
  %1986 = vmatprep.subr.mxu0 0.0
  %1987 = vmatpush1.msra.mxu0 %v572
  %1988 = vmatprep.subr.mxu0 0.0
  %1989 = vmatpush1.msra.mxu0 %v573
  %1990 = vmatprep.subr.mxu0 0.0
  %1991 = vmatpush1.msra.mxu0 %v574
  %1992 = vmatprep.subr.mxu0 0.0
  %1993 = vmatpush1.msra.mxu0 %v575
  %1994 = vmatprep.subr.mxu0 0.0
  %1995 = vmatpush1.msra.mxu0 %v576
  %1996 = vmatprep.subr.mxu0 0.0
  %1997 = vmatpush1.msra.mxu0 %v577
  %1998 = vmatprep.subr.mxu0 0.0
  %1999 = vmatpush1.msra.mxu0 %v578
  %2000 = vmatprep.subr.mxu0 0.0
  %2001 = vmatpush1.msra.mxu0 %v579
  %2002 = vmatprep.subr.mxu0 0.0
  %2003 = vmatpush1.msra.mxu0 %v580
  %2004 = vmatprep.subr.mxu0 0.0
  %2005 = vmatpush1.msra.mxu0 %v581
  %2006 = vmatprep.subr.mxu0 0.0
  %2007 = vmatpush1.msra.mxu0 %v582
  %2008 = vmatprep.mubr.f32.mxu0 %v51
  %2009 = vmatmul.mubr.f32.gmra.mrb[0].mxu0 %v50
  %v2010 = vpop.f32.mrb[0].mxu0
  %v2011 = vadd.f32 %v1941, %v2010
  %v2012 = vpop.f32.mrb[0].mxu0
  %2013 = vdwg.mxu0
  %2014 = vmatprep.subr.mxu0 0.0
  %2015 = vmatpush1.msra.mxu0 %v583
  %2016 = vmatprep.subr.mxu0 0.0
  %2017 = vmatpush1.msra.mxu0 %v584
  %2018 = vmatprep.subr.mxu0 0.0
  %2019 = vmatpush1.msra.mxu0 %v585
  %2020 = vmatprep.subr.mxu0 0.0
  %2021 = vmatpush1.msra.mxu0 %v586
  %2022 = vmatprep.subr.mxu0 0.0
  %2023 = vmatpush1.msra.mxu0 %v587
  %2024 = vmatprep.subr.mxu0 0.0
  %2025 = vmatpush1.msra.mxu0 %v588
  %2026 = vmatprep.subr.mxu0 0.0
  %2027 = vmatpush1.msra.mxu0 %v589
  %2028 = vmatprep.subr.mxu0 0.0
  %2029 = vmatpush1.msra.mxu0 %v590
  %2030 = vmatprep.subr.mxu0 0.0
  %2031 = vmatpush1.msra.mxu0 %v591
  %2032 = vmatprep.subr.mxu0 0.0
  %2033 = vmatpush1.msra.mxu0 %v592
  %2034 = vmatprep.subr.mxu0 0.0
  %2035 = vmatpush1.msra.mxu0 %v593
  %2036 = vmatprep.subr.mxu0 0.0
  %2037 = vmatpush1.msra.mxu0 %v594
  %2038 = vmatprep.subr.mxu0 0.0
  %2039 = vmatpush1.msra.mxu0 %v595
  %2040 = vmatprep.subr.mxu0 0.0
  %2041 = vmatpush1.msra.mxu0 %v596
  %2042 = vmatprep.subr.mxu0 0.0
  %2043 = vmatpush1.msra.mxu0 %v597
  %2044 = vmatprep.subr.mxu0 0.0
  %2045 = vmatpush1.msra.mxu0 %v598
  %2046 = vmatprep.subr.mxu0 0.0
  %2047 = vmatpush1.msra.mxu0 %v599
  %2048 = vmatprep.subr.mxu0 0.0
  %2049 = vmatpush1.msra.mxu0 %v600
  %2050 = vmatprep.subr.mxu0 0.0
  %2051 = vmatpush1.msra.mxu0 %v601
  %2052 = vmatprep.subr.mxu0 0.0
  %2053 = vmatpush1.msra.mxu0 %v602
  %2054 = vmatprep.subr.mxu0 0.0
  %2055 = vmatpush1.msra.mxu0 %v603
  %2056 = vmatprep.subr.mxu0 0.0
  %2057 = vmatpush1.msra.mxu0 %v604
  %2058 = vmatprep.subr.mxu0 0.0
  %2059 = vmatpush1.msra.mxu0 %v605
  %2060 = vmatprep.subr.mxu0 0.0
  %2061 = vmatpush1.msra.mxu0 %v606
  %2062 = vmatprep.subr.mxu0 0.0
  %2063 = vmatpush1.msra.mxu0 %v607
  %2064 = vmatprep.subr.mxu0 0.0
  %2065 = vmatpush1.msra.mxu0 %v608
  %2066 = vmatprep.subr.mxu0 0.0
  %2067 = vmatpush1.msra.mxu0 %v609
  %2068 = vmatprep.subr.mxu0 0.0
  %2069 = vmatpush1.msra.mxu0 %v610
  %2070 = vmatprep.subr.mxu0 0.0
  %2071 = vmatpush1.msra.mxu0 %v611
  %2072 = vmatprep.subr.mxu0 0.0
  %2073 = vmatpush1.msra.mxu0 %v612
  %2074 = vmatprep.subr.mxu0 0.0
  %2075 = vmatpush1.msra.mxu0 %v613
  %2076 = vmatprep.subr.mxu0 0.0
  %2077 = vmatpush1.msra.mxu0 %v614
  %2078 = vmatprep.mubr.f32.mxu0 %v53
  %2079 = vmatmul.mubr.f32.gmra.mrb[0].mxu0 %v52
  %v2080 = vpop.f32.mrb[0].mxu0
  %v2081 = vadd.f32 %v2011, %v2080
  %v2082 = vpop.f32.mrb[0].mxu0
  %2083 = vdwg.mxu0
  %2084 = vmatprep.subr.mxu0 0.0
  %2085 = vmatpush1.msra.mxu0 %v615
  %2086 = vmatprep.subr.mxu0 0.0
  %2087 = vmatpush1.msra.mxu0 %v616
  %2088 = vmatprep.subr.mxu0 0.0
  %2089 = vmatpush1.msra.mxu0 %v617
  %2090 = vmatprep.subr.mxu0 0.0
  %2091 = vmatpush1.msra.mxu0 %v618
  %2092 = vmatprep.subr.mxu0 0.0
  %2093 = vmatpush1.msra.mxu0 %v619
  %2094 = vmatprep.subr.mxu0 0.0
  %2095 = vmatpush1.msra.mxu0 %v620
  %2096 = vmatprep.subr.mxu0 0.0
  %2097 = vmatpush1.msra.mxu0 %v621
  %2098 = vmatprep.subr.mxu0 0.0
  %2099 = vmatpush1.msra.mxu0 %v622
  %2100 = vmatprep.subr.mxu0 0.0
  %2101 = vmatpush1.msra.mxu0 %v623
  %2102 = vmatprep.subr.mxu0 0.0
  %2103 = vmatpush1.msra.mxu0 %v624
  %2104 = vmatprep.subr.mxu0 0.0
  %2105 = vmatpush1.msra.mxu0 %v625
  %2106 = vmatprep.subr.mxu0 0.0
  %2107 = vmatpush1.msra.mxu0 %v626
  %2108 = vmatprep.subr.mxu0 0.0
  %2109 = vmatpush1.msra.mxu0 %v627
  %2110 = vmatprep.subr.mxu0 0.0
  %2111 = vmatpush1.msra.mxu0 %v628
  %2112 = vmatprep.subr.mxu0 0.0
  %2113 = vmatpush1.msra.mxu0 %v629
  %2114 = vmatprep.subr.mxu0 0.0
  %2115 = vmatpush1.msra.mxu0 %v630
  %2116 = vmatprep.subr.mxu0 0.0
  %2117 = vmatpush1.msra.mxu0 %v631
  %2118 = vmatprep.subr.mxu0 0.0
  %2119 = vmatpush1.msra.mxu0 %v632
  %2120 = vmatprep.subr.mxu0 0.0
  %2121 = vmatpush1.msra.mxu0 %v633
  %2122 = vmatprep.subr.mxu0 0.0
  %2123 = vmatpush1.msra.mxu0 %v634
  %2124 = vmatprep.subr.mxu0 0.0
  %2125 = vmatpush1.msra.mxu0 %v635
  %2126 = vmatprep.subr.mxu0 0.0
  %2127 = vmatpush1.msra.mxu0 %v636
  %2128 = vmatprep.subr.mxu0 0.0
  %2129 = vmatpush1.msra.mxu0 %v637
  %2130 = vmatprep.subr.mxu0 0.0
  %2131 = vmatpush1.msra.mxu0 %v638
  %2132 = vmatprep.subr.mxu0 0.0
  %2133 = vmatpush1.msra.mxu0 %v639
  %2134 = vmatprep.subr.mxu0 0.0
  %2135 = vmatpush1.msra.mxu0 %v640
  %2136 = vmatprep.subr.mxu0 0.0
  %2137 = vmatpush1.msra.mxu0 %v641
  %2138 = vmatprep.subr.mxu0 0.0
  %2139 = vmatpush1.msra.mxu0 %v642
  %2140 = vmatprep.subr.mxu0 0.0
  %2141 = vmatpush1.msra.mxu0 %v643
  %2142 = vmatprep.subr.mxu0 0.0
  %2143 = vmatpush1.msra.mxu0 %v644
  %2144 = vmatprep.subr.mxu0 0.0
  %2145 = vmatpush1.msra.mxu0 %v645
  %2146 = vmatprep.subr.mxu0 0.0
  %2147 = vmatpush1.msra.mxu0 %v646
  %2148 = vmatprep.mubr.f32.mxu0 %v55
  %2149 = vmatmul.mubr.f32.gmra.mrb[0].mxu0 %v54
  %v2150 = vpop.f32.mrb[0].mxu0
  %v2151 = vadd.f32 %v2081, %v2150
  %v2152 = vpop.f32.mrb[0].mxu0
  %2153 = vdwg.mxu0
  %2154 = vmatprep.subr.mxu0 0.0
  %2155 = vmatpush1.msra.mxu0 %v647
  %2156 = vmatprep.subr.mxu0 0.0
  %2157 = vmatpush1.msra.mxu0 %v648
  %2158 = vmatprep.subr.mxu0 0.0
  %2159 = vmatpush1.msra.mxu0 %v649
  %2160 = vmatprep.subr.mxu0 0.0
  %2161 = vmatpush1.msra.mxu0 %v650
  %2162 = vmatprep.subr.mxu0 0.0
  %2163 = vmatpush1.msra.mxu0 %v651
  %2164 = vmatprep.subr.mxu0 0.0
  %2165 = vmatpush1.msra.mxu0 %v652
  %2166 = vmatprep.subr.mxu0 0.0
  %2167 = vmatpush1.msra.mxu0 %v653
  %2168 = vmatprep.subr.mxu0 0.0
  %2169 = vmatpush1.msra.mxu0 %v654
  %2170 = vmatprep.subr.mxu0 0.0
  %2171 = vmatpush1.msra.mxu0 %v655
  %2172 = vmatprep.subr.mxu0 0.0
  %2173 = vmatpush1.msra.mxu0 %v656
  %2174 = vmatprep.subr.mxu0 0.0
  %2175 = vmatpush1.msra.mxu0 %v657
  %2176 = vmatprep.subr.mxu0 0.0
  %2177 = vmatpush1.msra.mxu0 %v658
  %2178 = vmatprep.subr.mxu0 0.0
  %2179 = vmatpush1.msra.mxu0 %v659
  %2180 = vmatprep.subr.mxu0 0.0
  %2181 = vmatpush1.msra.mxu0 %v660
  %2182 = vmatprep.subr.mxu0 0.0
  %2183 = vmatpush1.msra.mxu0 %v661
  %2184 = vmatprep.subr.mxu0 0.0
  %2185 = vmatpush1.msra.mxu0 %v662
  %2186 = vmatprep.subr.mxu0 0.0
  %2187 = vmatpush1.msra.mxu0 %v663
  %2188 = vmatprep.subr.mxu0 0.0
  %2189 = vmatpush1.msra.mxu0 %v664
  %2190 = vmatprep.subr.mxu0 0.0
  %2191 = vmatpush1.msra.mxu0 %v665
  %2192 = vmatprep.subr.mxu0 0.0
  %2193 = vmatpush1.msra.mxu0 %v666
  %2194 = vmatprep.subr.mxu0 0.0
  %2195 = vmatpush1.msra.mxu0 %v667
  %2196 = vmatprep.subr.mxu0 0.0
  %2197 = vmatpush1.msra.mxu0 %v668
  %2198 = vmatprep.subr.mxu0 0.0
  %2199 = vmatpush1.msra.mxu0 %v669
  %2200 = vmatprep.subr.mxu0 0.0
  %2201 = vmatpush1.msra.mxu0 %v670
  %2202 = vmatprep.subr.mxu0 0.0
  %2203 = vmatpush1.msra.mxu0 %v671
  %2204 = vmatprep.subr.mxu0 0.0
  %2205 = vmatpush1.msra.mxu0 %v672
  %2206 = vmatprep.subr.mxu0 0.0
  %2207 = vmatpush1.msra.mxu0 %v673
  %2208 = vmatprep.subr.mxu0 0.0
  %2209 = vmatpush1.msra.mxu0 %v674
  %2210 = vmatprep.subr.mxu0 0.0
  %2211 = vmatpush1.msra.mxu0 %v675
  %2212 = vmatprep.subr.mxu0 0.0
  %2213 = vmatpush1.msra.mxu0 %v676
  %2214 = vmatprep.subr.mxu0 0.0
  %2215 = vmatpush1.msra.mxu0 %v677
  %2216 = vmatprep.subr.mxu0 0.0
  %2217 = vmatpush1.msra.mxu0 %v678
  %2218 = vmatprep.mubr.f32.mxu0 %v57
  %2219 = vmatmul.mubr.f32.gmra.mrb[0].mxu0 %v56
  %v2220 = vpop.f32.mrb[0].mxu0
  %v2221 = vadd.f32 %v2151, %v2220
  %v2222 = vpop.f32.mrb[0].mxu0
  %2223 = vdwg.mxu0
  %2224 = vmatprep.subr.mxu0 0.0
  %2225 = vmatpush1.msra.mxu0 %v679
  %2226 = vmatprep.subr.mxu0 0.0
  %2227 = vmatpush1.msra.mxu0 %v680
  %2228 = vmatprep.subr.mxu0 0.0
  %2229 = vmatpush1.msra.mxu0 %v681
  %2230 = vmatprep.subr.mxu0 0.0
  %2231 = vmatpush1.msra.mxu0 %v682
  %2232 = vmatprep.subr.mxu0 0.0
  %2233 = vmatpush1.msra.mxu0 %v683
  %2234 = vmatprep.subr.mxu0 0.0
  %2235 = vmatpush1.msra.mxu0 %v684
  %2236 = vmatprep.subr.mxu0 0.0
  %2237 = vmatpush1.msra.mxu0 %v685
  %2238 = vmatprep.subr.mxu0 0.0
  %2239 = vmatpush1.msra.mxu0 %v686
  %2240 = vmatprep.subr.mxu0 0.0
  %2241 = vmatpush1.msra.mxu0 %v687
  %2242 = vmatprep.subr.mxu0 0.0
  %2243 = vmatpush1.msra.mxu0 %v688
  %2244 = vmatprep.subr.mxu0 0.0
  %2245 = vmatpush1.msra.mxu0 %v689
  %2246 = vmatprep.subr.mxu0 0.0
  %2247 = vmatpush1.msra.mxu0 %v690
  %2248 = vmatprep.subr.mxu0 0.0
  %2249 = vmatpush1.msra.mxu0 %v691
  %2250 = vmatprep.subr.mxu0 0.0
  %2251 = vmatpush1.msra.mxu0 %v692
  %2252 = vmatprep.subr.mxu0 0.0
  %2253 = vmatpush1.msra.mxu0 %v693
  %2254 = vmatprep.subr.mxu0 0.0
  %2255 = vmatpush1.msra.mxu0 %v694
  %2256 = vmatprep.subr.mxu0 0.0
  %2257 = vmatpush1.msra.mxu0 %v695
  %2258 = vmatprep.subr.mxu0 0.0
  %2259 = vmatpush1.msra.mxu0 %v696
  %2260 = vmatprep.subr.mxu0 0.0
  %2261 = vmatpush1.msra.mxu0 %v697
  %2262 = vmatprep.subr.mxu0 0.0
  %2263 = vmatpush1.msra.mxu0 %v698
  %2264 = vmatprep.subr.mxu0 0.0
  %2265 = vmatpush1.msra.mxu0 %v699
  %2266 = vmatprep.subr.mxu0 0.0
  %2267 = vmatpush1.msra.mxu0 %v700
  %2268 = vmatprep.subr.mxu0 0.0
  %2269 = vmatpush1.msra.mxu0 %v701
  %2270 = vmatprep.subr.mxu0 0.0
  %2271 = vmatpush1.msra.mxu0 %v702
  %2272 = vmatprep.subr.mxu0 0.0
  %2273 = vmatpush1.msra.mxu0 %v703
  %2274 = vmatprep.subr.mxu0 0.0
  %2275 = vmatpush1.msra.mxu0 %v704
  %2276 = vmatprep.subr.mxu0 0.0
  %2277 = vmatpush1.msra.mxu0 %v705
  %2278 = vmatprep.subr.mxu0 0.0
  %2279 = vmatpush1.msra.mxu0 %v706
  %2280 = vmatprep.subr.mxu0 0.0
  %2281 = vmatpush1.msra.mxu0 %v707
  %2282 = vmatprep.subr.mxu0 0.0
  %2283 = vmatpush1.msra.mxu0 %v708
  %2284 = vmatprep.subr.mxu0 0.0
  %2285 = vmatpush1.msra.mxu0 %v709
  %2286 = vmatprep.subr.mxu0 0.0
  %2287 = vmatpush1.msra.mxu0 %v710
  %2288 = vmatprep.mubr.f32.mxu0 %v59
  %2289 = vmatmul.mubr.f32.gmra.mrb[0].mxu0 %v58
  %v2290 = vpop.f32.mrb[0].mxu0
  %v2291 = vadd.f32 %v2221, %v2290
  %v2292 = vpop.f32.mrb[0].mxu0
  %2293 = vdwg.mxu0
  %2294 = vmatprep.subr.mxu0 0.0
  %2295 = vmatpush1.msra.mxu0 %v711
  %2296 = vmatprep.subr.mxu0 0.0
  %2297 = vmatpush1.msra.mxu0 %v712
  %2298 = vmatprep.subr.mxu0 0.0
  %2299 = vmatpush1.msra.mxu0 %v713
  %2300 = vmatprep.subr.mxu0 0.0
  %2301 = vmatpush1.msra.mxu0 %v714
  %2302 = vmatprep.subr.mxu0 0.0
  %2303 = vmatpush1.msra.mxu0 %v715
  %2304 = vmatprep.subr.mxu0 0.0
  %2305 = vmatpush1.msra.mxu0 %v716
  %2306 = vmatprep.subr.mxu0 0.0
  %2307 = vmatpush1.msra.mxu0 %v717
  %2308 = vmatprep.subr.mxu0 0.0
  %2309 = vmatpush1.msra.mxu0 %v718
  %2310 = vmatprep.subr.mxu0 0.0
  %2311 = vmatpush1.msra.mxu0 %v719
  %2312 = vmatprep.subr.mxu0 0.0
  %2313 = vmatpush1.msra.mxu0 %v720
  %2314 = vmatprep.subr.mxu0 0.0
  %2315 = vmatpush1.msra.mxu0 %v721
  %2316 = vmatprep.subr.mxu0 0.0
  %2317 = vmatpush1.msra.mxu0 %v722
  %2318 = vmatprep.subr.mxu0 0.0
  %2319 = vmatpush1.msra.mxu0 %v723
  %2320 = vmatprep.subr.mxu0 0.0
  %2321 = vmatpush1.msra.mxu0 %v724
  %2322 = vmatprep.subr.mxu0 0.0
  %2323 = vmatpush1.msra.mxu0 %v725
  %2324 = vmatprep.subr.mxu0 0.0
  %2325 = vmatpush1.msra.mxu0 %v726
  %2326 = vmatprep.subr.mxu0 0.0
  %2327 = vmatpush1.msra.mxu0 %v727
  %2328 = vmatprep.subr.mxu0 0.0
  %2329 = vmatpush1.msra.mxu0 %v728
  %2330 = vmatprep.subr.mxu0 0.0
  %2331 = vmatpush1.msra.mxu0 %v729
  %2332 = vmatprep.subr.mxu0 0.0
  %2333 = vmatpush1.msra.mxu0 %v730
  %2334 = vmatprep.subr.mxu0 0.0
  %2335 = vmatpush1.msra.mxu0 %v731
  %2336 = vmatprep.subr.mxu0 0.0
  %2337 = vmatpush1.msra.mxu0 %v732
  %2338 = vmatprep.subr.mxu0 0.0
  %2339 = vmatpush1.msra.mxu0 %v733
  %2340 = vmatprep.subr.mxu0 0.0
  %2341 = vmatpush1.msra.mxu0 %v734
  %2342 = vmatprep.subr.mxu0 0.0
  %2343 = vmatpush1.msra.mxu0 %v735
  %2344 = vmatprep.subr.mxu0 0.0
  %2345 = vmatpush1.msra.mxu0 %v736
  %2346 = vmatprep.subr.mxu0 0.0
  %2347 = vmatpush1.msra.mxu0 %v737
  %2348 = vmatprep.subr.mxu0 0.0
  %2349 = vmatpush1.msra.mxu0 %v738
  %2350 = vmatprep.subr.mxu0 0.0
  %2351 = vmatpush1.msra.mxu0 %v739
  %2352 = vmatprep.subr.mxu0 0.0
  %2353 = vmatpush1.msra.mxu0 %v740
  %2354 = vmatprep.subr.mxu0 0.0
  %2355 = vmatpush1.msra.mxu0 %v741
  %2356 = vmatprep.subr.mxu0 0.0
  %2357 = vmatpush1.msra.mxu0 %v742
  %2358 = vmatprep.mubr.f32.mxu0 %v61
  %2359 = vmatmul.mubr.f32.gmra.mrb[0].mxu0 %v60
  %v2360 = vpop.f32.mrb[0].mxu0
  %v2361 = vadd.f32 %v2291, %v2360
  %v2362 = vpop.f32.mrb[0].mxu0
  %2363 = vdwg.mxu0
  %2364 = vmatprep.subr.mxu0 0.0
  %2365 = vmatpush1.msra.mxu0 %v743
  %2366 = vmatprep.subr.mxu0 0.0
  %2367 = vmatpush1.msra.mxu0 %v744
  %2368 = vmatprep.subr.mxu0 0.0
  %2369 = vmatpush1.msra.mxu0 %v745
  %2370 = vmatprep.subr.mxu0 0.0
  %2371 = vmatpush1.msra.mxu0 %v746
  %2372 = vmatprep.subr.mxu0 0.0
  %2373 = vmatpush1.msra.mxu0 %v747
  %2374 = vmatprep.subr.mxu0 0.0
  %2375 = vmatpush1.msra.mxu0 %v748
  %2376 = vmatprep.subr.mxu0 0.0
  %2377 = vmatpush1.msra.mxu0 %v749
  %2378 = vmatprep.subr.mxu0 0.0
  %2379 = vmatpush1.msra.mxu0 %v750
  %2380 = vmatprep.subr.mxu0 0.0
  %2381 = vmatpush1.msra.mxu0 %v751
  %2382 = vmatprep.subr.mxu0 0.0
  %2383 = vmatpush1.msra.mxu0 %v752
  %2384 = vmatprep.subr.mxu0 0.0
  %2385 = vmatpush1.msra.mxu0 %v753
  %2386 = vmatprep.subr.mxu0 0.0
  %2387 = vmatpush1.msra.mxu0 %v754
  %2388 = vmatprep.subr.mxu0 0.0
  %2389 = vmatpush1.msra.mxu0 %v755
  %2390 = vmatprep.subr.mxu0 0.0
  %2391 = vmatpush1.msra.mxu0 %v756
  %2392 = vmatprep.subr.mxu0 0.0
  %2393 = vmatpush1.msra.mxu0 %v757
  %2394 = vmatprep.subr.mxu0 0.0
  %2395 = vmatpush1.msra.mxu0 %v758
  %2396 = vmatprep.subr.mxu0 0.0
  %2397 = vmatpush1.msra.mxu0 %v759
  %2398 = vmatprep.subr.mxu0 0.0
  %2399 = vmatpush1.msra.mxu0 %v760
  %2400 = vmatprep.subr.mxu0 0.0
  %2401 = vmatpush1.msra.mxu0 %v761
  %2402 = vmatprep.subr.mxu0 0.0
  %2403 = vmatpush1.msra.mxu0 %v762
  %2404 = vmatprep.subr.mxu0 0.0
  %2405 = vmatpush1.msra.mxu0 %v763
  %2406 = vmatprep.subr.mxu0 0.0
  %2407 = vmatpush1.msra.mxu0 %v764
  %2408 = vmatprep.subr.mxu0 0.0
  %2409 = vmatpush1.msra.mxu0 %v765
  %2410 = vmatprep.subr.mxu0 0.0
  %2411 = vmatpush1.msra.mxu0 %v766
  %2412 = vmatprep.subr.mxu0 0.0
  %2413 = vmatpush1.msra.mxu0 %v767
  %2414 = vmatprep.subr.mxu0 0.0
  %2415 = vmatpush1.msra.mxu0 %v768
  %2416 = vmatprep.subr.mxu0 0.0
  %2417 = vmatpush1.msra.mxu0 %v769
  %2418 = vmatprep.subr.mxu0 0.0
  %2419 = vmatpush1.msra.mxu0 %v770
  %2420 = vmatprep.subr.mxu0 0.0
  %2421 = vmatpush1.msra.mxu0 %v771
  %2422 = vmatprep.subr.mxu0 0.0
  %2423 = vmatpush1.msra.mxu0 %v772
  %2424 = vmatprep.subr.mxu0 0.0
  %2425 = vmatpush1.msra.mxu0 %v773
  %2426 = vmatprep.subr.mxu0 0.0
  %2427 = vmatpush1.msra.mxu0 %v774
  %2428 = vmatprep.mubr.f32.mxu0 %v63
  %2429 = vmatmul.mubr.f32.gmra.mrb[0].mxu0 %v62
  %v2430 = vpop.f32.mrb[0].mxu0
  %v2431 = vadd.f32 %v2361, %v2430
  %v2432 = vpop.f32.mrb[0].mxu0
  %2433 = vdwg.mxu0
  %2434 = vmatprep.subr.mxu0 0.0
  %2435 = vmatpush1.msra.mxu0 %v775
  %2436 = vmatprep.subr.mxu0 0.0
  %2437 = vmatpush1.msra.mxu0 %v776
  %2438 = vmatprep.subr.mxu0 0.0
  %2439 = vmatpush1.msra.mxu0 %v777
  %2440 = vmatprep.subr.mxu0 0.0
  %2441 = vmatpush1.msra.mxu0 %v778
  %2442 = vmatprep.subr.mxu0 0.0
  %2443 = vmatpush1.msra.mxu0 %v779
  %2444 = vmatprep.subr.mxu0 0.0
  %2445 = vmatpush1.msra.mxu0 %v780
  %2446 = vmatprep.subr.mxu0 0.0
  %2447 = vmatpush1.msra.mxu0 %v781
  %2448 = vmatprep.subr.mxu0 0.0
  %2449 = vmatpush1.msra.mxu0 %v782
  %2450 = vmatprep.subr.mxu0 0.0
  %2451 = vmatpush1.msra.mxu0 %v783
  %2452 = vmatprep.subr.mxu0 0.0
  %2453 = vmatpush1.msra.mxu0 %v784
  %2454 = vmatprep.subr.mxu0 0.0
  %2455 = vmatpush1.msra.mxu0 %v785
  %2456 = vmatprep.subr.mxu0 0.0
  %2457 = vmatpush1.msra.mxu0 %v786
  %2458 = vmatprep.subr.mxu0 0.0
  %2459 = vmatpush1.msra.mxu0 %v787
  %2460 = vmatprep.subr.mxu0 0.0
  %2461 = vmatpush1.msra.mxu0 %v788
  %2462 = vmatprep.subr.mxu0 0.0
  %2463 = vmatpush1.msra.mxu0 %v789
  %2464 = vmatprep.subr.mxu0 0.0
  %2465 = vmatpush1.msra.mxu0 %v790
  %2466 = vmatprep.subr.mxu0 0.0
  %2467 = vmatpush1.msra.mxu0 %v791
  %2468 = vmatprep.subr.mxu0 0.0
  %2469 = vmatpush1.msra.mxu0 %v792
  %2470 = vmatprep.subr.mxu0 0.0
  %2471 = vmatpush1.msra.mxu0 %v793
  %2472 = vmatprep.subr.mxu0 0.0
  %2473 = vmatpush1.msra.mxu0 %v794
  %2474 = vmatprep.subr.mxu0 0.0
  %2475 = vmatpush1.msra.mxu0 %v795
  %2476 = vmatprep.subr.mxu0 0.0
  %2477 = vmatpush1.msra.mxu0 %v796
  %2478 = vmatprep.subr.mxu0 0.0
  %2479 = vmatpush1.msra.mxu0 %v797
  %2480 = vmatprep.subr.mxu0 0.0
  %2481 = vmatpush1.msra.mxu0 %v798
  %2482 = vmatprep.subr.mxu0 0.0
  %2483 = vmatpush1.msra.mxu0 %v799
  %2484 = vmatprep.subr.mxu0 0.0
  %2485 = vmatpush1.msra.mxu0 %v800
  %2486 = vmatprep.subr.mxu0 0.0
  %2487 = vmatpush1.msra.mxu0 %v801
  %2488 = vmatprep.subr.mxu0 0.0
  %2489 = vmatpush1.msra.mxu0 %v802
  %2490 = vmatprep.subr.mxu0 0.0
  %2491 = vmatpush1.msra.mxu0 %v803
  %2492 = vmatprep.subr.mxu0 0.0
  %2493 = vmatpush1.msra.mxu0 %v804
  %2494 = vmatprep.subr.mxu0 0.0
  %2495 = vmatpush1.msra.mxu0 %v805
  %2496 = vmatprep.subr.mxu0 0.0
  %2497 = vmatpush1.msra.mxu0 %v806
  %2498 = vmatprep.mubr.f32.mxu0 %v65
  %2499 = vmatmul.mubr.f32.gmra.mrb[0].mxu0 %v64
  %v2500 = vpop.f32.mrb[0].mxu0
  %v2501 = vadd.f32 %v2431, %v2500
  %v2502 = vpop.f32.mrb[0].mxu0
  %2503 = vdwg.mxu0
  %2504 = vmatprep.subr.mxu0 0.0
  %2505 = vmatpush1.msra.mxu0 %v807
  %2506 = vmatprep.subr.mxu0 0.0
  %2507 = vmatpush1.msra.mxu0 %v808
  %2508 = vmatprep.subr.mxu0 0.0
  %2509 = vmatpush1.msra.mxu0 %v809
  %2510 = vmatprep.subr.mxu0 0.0
  %2511 = vmatpush1.msra.mxu0 %v810
  %2512 = vmatprep.subr.mxu0 0.0
  %2513 = vmatpush1.msra.mxu0 %v811
  %2514 = vmatprep.subr.mxu0 0.0
  %2515 = vmatpush1.msra.mxu0 %v812
  %2516 = vmatprep.subr.mxu0 0.0
  %2517 = vmatpush1.msra.mxu0 %v813
  %2518 = vmatprep.subr.mxu0 0.0
  %2519 = vmatpush1.msra.mxu0 %v814
  %2520 = vmatprep.subr.mxu0 0.0
  %2521 = vmatpush1.msra.mxu0 %v815
  %2522 = vmatprep.subr.mxu0 0.0
  %2523 = vmatpush1.msra.mxu0 %v816
  %2524 = vmatprep.subr.mxu0 0.0
  %2525 = vmatpush1.msra.mxu0 %v817
  %2526 = vmatprep.subr.mxu0 0.0
  %2527 = vmatpush1.msra.mxu0 %v818
  %2528 = vmatprep.subr.mxu0 0.0
  %2529 = vmatpush1.msra.mxu0 %v819
  %2530 = vmatprep.subr.mxu0 0.0
  %2531 = vmatpush1.msra.mxu0 %v820
  %2532 = vmatprep.subr.mxu0 0.0
  %2533 = vmatpush1.msra.mxu0 %v821
  %2534 = vmatprep.subr.mxu0 0.0
  %2535 = vmatpush1.msra.mxu0 %v822
  %2536 = vmatprep.subr.mxu0 0.0
  %2537 = vmatpush1.msra.mxu0 %v823
  %2538 = vmatprep.subr.mxu0 0.0
  %2539 = vmatpush1.msra.mxu0 %v824
  %2540 = vmatprep.subr.mxu0 0.0
  %2541 = vmatpush1.msra.mxu0 %v825
  %2542 = vmatprep.subr.mxu0 0.0
  %2543 = vmatpush1.msra.mxu0 %v826
  %2544 = vmatprep.subr.mxu0 0.0
  %2545 = vmatpush1.msra.mxu0 %v827
  %2546 = vmatprep.subr.mxu0 0.0
  %2547 = vmatpush1.msra.mxu0 %v828
  %2548 = vmatprep.subr.mxu0 0.0
  %2549 = vmatpush1.msra.mxu0 %v829
  %2550 = vmatprep.subr.mxu0 0.0
  %2551 = vmatpush1.msra.mxu0 %v830
  %2552 = vmatprep.subr.mxu0 0.0
  %2553 = vmatpush1.msra.mxu0 %v831
  %2554 = vmatprep.subr.mxu0 0.0
  %2555 = vmatpush1.msra.mxu0 %v832
  %2556 = vmatprep.subr.mxu0 0.0
  %2557 = vmatpush1.msra.mxu0 %v833
  %2558 = vmatprep.subr.mxu0 0.0
  %2559 = vmatpush1.msra.mxu0 %v834
  %2560 = vmatprep.subr.mxu0 0.0
  %2561 = vmatpush1.msra.mxu0 %v835
  %2562 = vmatprep.subr.mxu0 0.0
  %2563 = vmatpush1.msra.mxu0 %v836
  %2564 = vmatprep.subr.mxu0 0.0
  %2565 = vmatpush1.msra.mxu0 %v837
  %2566 = vmatprep.subr.mxu0 0.0
  %2567 = vmatpush1.msra.mxu0 %v838
  %2568 = vmatprep.mubr.f32.mxu0 %v67
  %2569 = vmatmul.mubr.f32.gmra.mrb[0].mxu0 %v66
  %v2570 = vpop.f32.mrb[0].mxu0
  %v2571 = vadd.f32 %v2501, %v2570
  %v2572 = vpop.f32.mrb[0].mxu0
  %2573 = vdwg.mxu0
  %2574 = vmatprep.subr.mxu0 0.0
  %2575 = vmatpush1.msra.mxu0 %v839
  %2576 = vmatprep.subr.mxu0 0.0
  %2577 = vmatpush1.msra.mxu0 %v840
  %2578 = vmatprep.subr.mxu0 0.0
  %2579 = vmatpush1.msra.mxu0 %v841
  %2580 = vmatprep.subr.mxu0 0.0
  %2581 = vmatpush1.msra.mxu0 %v842
  %2582 = vmatprep.subr.mxu0 0.0
  %2583 = vmatpush1.msra.mxu0 %v843
  %2584 = vmatprep.subr.mxu0 0.0
  %2585 = vmatpush1.msra.mxu0 %v844
  %2586 = vmatprep.subr.mxu0 0.0
  %2587 = vmatpush1.msra.mxu0 %v845
  %2588 = vmatprep.subr.mxu0 0.0
  %2589 = vmatpush1.msra.mxu0 %v846
  %2590 = vmatprep.subr.mxu0 0.0
  %2591 = vmatpush1.msra.mxu0 %v847
  %2592 = vmatprep.subr.mxu0 0.0
  %2593 = vmatpush1.msra.mxu0 %v848
  %2594 = vmatprep.subr.mxu0 0.0
  %2595 = vmatpush1.msra.mxu0 %v849
  %2596 = vmatprep.subr.mxu0 0.0
  %2597 = vmatpush1.msra.mxu0 %v850
  %2598 = vmatprep.subr.mxu0 0.0
  %2599 = vmatpush1.msra.mxu0 %v851
  %2600 = vmatprep.subr.mxu0 0.0
  %2601 = vmatpush1.msra.mxu0 %v852
  %2602 = vmatprep.subr.mxu0 0.0
  %2603 = vmatpush1.msra.mxu0 %v853
  %2604 = vmatprep.subr.mxu0 0.0
  %2605 = vmatpush1.msra.mxu0 %v854
  %2606 = vmatprep.subr.mxu0 0.0
  %2607 = vmatpush1.msra.mxu0 %v855
  %2608 = vmatprep.subr.mxu0 0.0
  %2609 = vmatpush1.msra.mxu0 %v856
  %2610 = vmatprep.subr.mxu0 0.0
  %2611 = vmatpush1.msra.mxu0 %v857
  %2612 = vmatprep.subr.mxu0 0.0
  %2613 = vmatpush1.msra.mxu0 %v858
  %2614 = vmatprep.subr.mxu0 0.0
  %2615 = vmatpush1.msra.mxu0 %v859
  %2616 = vmatprep.subr.mxu0 0.0
  %2617 = vmatpush1.msra.mxu0 %v860
  %2618 = vmatprep.subr.mxu0 0.0
  %2619 = vmatpush1.msra.mxu0 %v861
  %2620 = vmatprep.subr.mxu0 0.0
  %2621 = vmatpush1.msra.mxu0 %v862
  %2622 = vmatprep.subr.mxu0 0.0
  %2623 = vmatpush1.msra.mxu0 %v863
  %2624 = vmatprep.subr.mxu0 0.0
  %2625 = vmatpush1.msra.mxu0 %v864
  %2626 = vmatprep.subr.mxu0 0.0
  %2627 = vmatpush1.msra.mxu0 %v865
  %2628 = vmatprep.subr.mxu0 0.0
  %2629 = vmatpush1.msra.mxu0 %v866
  %2630 = vmatprep.subr.mxu0 0.0
  %2631 = vmatpush1.msra.mxu0 %v867
  %2632 = vmatprep.subr.mxu0 0.0
  %2633 = vmatpush1.msra.mxu0 %v868
  %2634 = vmatprep.subr.mxu0 0.0
  %2635 = vmatpush1.msra.mxu0 %v869
  %2636 = vmatprep.subr.mxu0 0.0
  %2637 = vmatpush1.msra.mxu0 %v870
  %2638 = vmatprep.mubr.f32.mxu0 %v69
  %2639 = vmatmul.mubr.f32.gmra.mrb[0].mxu0 %v68
  %v2640 = vpop.f32.mrb[0].mxu0
  %v2641 = vadd.f32 %v2571, %v2640
  %v2642 = vpop.f32.mrb[0].mxu0
  %2643 = vdwg.mxu0
  %2644 = vmatprep.subr.mxu0 0.0
  %2645 = vmatpush1.msra.mxu0 %v871
  %2646 = vmatprep.subr.mxu0 0.0
  %2647 = vmatpush1.msra.mxu0 %v872
  %2648 = vmatprep.subr.mxu0 0.0
  %2649 = vmatpush1.msra.mxu0 %v873
  %2650 = vmatprep.subr.mxu0 0.0
  %2651 = vmatpush1.msra.mxu0 %v874
  %2652 = vmatprep.subr.mxu0 0.0
  %2653 = vmatpush1.msra.mxu0 %v875
  %2654 = vmatprep.subr.mxu0 0.0
  %2655 = vmatpush1.msra.mxu0 %v876
  %2656 = vmatprep.subr.mxu0 0.0
  %2657 = vmatpush1.msra.mxu0 %v877
  %2658 = vmatprep.subr.mxu0 0.0
  %2659 = vmatpush1.msra.mxu0 %v878
  %2660 = vmatprep.subr.mxu0 0.0
  %2661 = vmatpush1.msra.mxu0 %v879
  %2662 = vmatprep.subr.mxu0 0.0
  %2663 = vmatpush1.msra.mxu0 %v880
  %2664 = vmatprep.subr.mxu0 0.0
  %2665 = vmatpush1.msra.mxu0 %v881
  %2666 = vmatprep.subr.mxu0 0.0
  %2667 = vmatpush1.msra.mxu0 %v882
  %2668 = vmatprep.subr.mxu0 0.0
  %2669 = vmatpush1.msra.mxu0 %v883
  %2670 = vmatprep.subr.mxu0 0.0
  %2671 = vmatpush1.msra.mxu0 %v884
  %2672 = vmatprep.subr.mxu0 0.0
  %2673 = vmatpush1.msra.mxu0 %v885
  %2674 = vmatprep.subr.mxu0 0.0
  %2675 = vmatpush1.msra.mxu0 %v886
  %2676 = vmatprep.subr.mxu0 0.0
  %2677 = vmatpush1.msra.mxu0 0.0
  %2678 = vmatprep.subr.mxu0 0.0
  %2679 = vmatpush1.msra.mxu0 0.0
  %2680 = vmatprep.subr.mxu0 0.0
  %2681 = vmatpush1.msra.mxu0 0.0
  %2682 = vmatprep.subr.mxu0 0.0
  %2683 = vmatpush1.msra.mxu0 0.0
  %2684 = vmatprep.subr.mxu0 0.0
  %2685 = vmatpush1.msra.mxu0 0.0
  %2686 = vmatprep.subr.mxu0 0.0
  %2687 = vmatpush1.msra.mxu0 0.0
  %2688 = vmatprep.subr.mxu0 0.0
  %2689 = vmatpush1.msra.mxu0 0.0
  %2690 = vmatprep.subr.mxu0 0.0
  %2691 = vmatpush1.msra.mxu0 0.0
  %2692 = vmatprep.subr.mxu0 0.0
  %2693 = vmatpush1.msra.mxu0 0.0
  %2694 = vmatprep.subr.mxu0 0.0
  %2695 = vmatpush1.msra.mxu0 0.0
  %2696 = vmatprep.subr.mxu0 0.0
  %2697 = vmatpush1.msra.mxu0 0.0
  %2698 = vmatprep.subr.mxu0 0.0
  %2699 = vmatpush1.msra.mxu0 0.0
  %2700 = vmatprep.subr.mxu0 0.0
  %2701 = vmatpush1.msra.mxu0 0.0
  %2702 = vmatprep.subr.mxu0 0.0
  %2703 = vmatpush1.msra.mxu0 0.0
  %2704 = vmatprep.subr.mxu0 0.0
  %2705 = vmatpush1.msra.mxu0 0.0
  %2706 = vmatprep.subr.mxu0 0.0
  %2707 = vmatpush1.msra.mxu0 0.0
  %2708 = vmatprep.mubr.f32.mxu0 0.0
  %2709 = vmatmul.mubr.f32.gmra.mrb[0].mxu0 %v70
  %v2710 = vpop.f32.mrb[0].mxu0
  %v2711 = vadd.f32 %v2641, %v2710
  %v2712 = vpop.f32.mrb[0].mxu0
  %2713 = vdwg.mxu0
  %v2714 = vmax.f32 %v2711, 0.0
  %v2715 = vld [vmem:[%s3] sm:$0xff]
  %v2716 = vld [vmem:[%s3 + $0x8] sm:$0xff]
  %v2717 = vld [vmem:[%s3 + $0x10] sm:$0xff]
  %v2718 = vld [vmem:[%s3 + $0x18] sm:$0xff]
  %v2719 = vld [vmem:[%s3 + $0x20] sm:$0xff]
  %v2720 = vld [vmem:[%s3 + $0x28] sm:$0xff]
  %v2721 = vld [vmem:[%s3 + $0x30] sm:$0xff]
  %v2722 = vld [vmem:[%s3 + $0x38] sm:$0xff]
  %v2723 = vld [vmem:[%s4] sm:$0x1]
  %v2725 = vlaneseq
  %v2726 = vshrl.u32 %v2725, 7
  %v2727 = vsub.s32 0, %v2726
  %v2728 = vrot.slane %v2723, %v2727
  %vm2730 = vcmask 523264
  %v2732 = vsel %vm2730, %v2714, 0
  %2734 = vmatprep.subr.mxu0 0.0
  %2735 = vmatpush1.msra.mxu0 %v2715
  %2736 = vmatprep.subr.mxu0 0.0
  %2737 = vmatpush1.msra.mxu0 %v2716
  %2738 = vmatprep.subr.mxu0 0.0
  %2739 = vmatpush1.msra.mxu0 %v2717
  %2740 = vmatprep.subr.mxu0 0.0
  %2741 = vmatpush1.msra.mxu0 %v2718
  %2742 = vmatprep.subr.mxu0 0.0
  %2743 = vmatpush1.msra.mxu0 %v2719
  %2744 = vmatprep.subr.mxu0 0.0
  %2745 = vmatpush1.msra.mxu0 %v2720
  %2746 = vmatprep.subr.mxu0 0.0
  %2747 = vmatpush1.msra.mxu0 %v2721
  %2748 = vmatprep.subr.mxu0 0.0
  %2749 = vmatpush1.msra.mxu0 %v2722
  %2750 = vmatprep.subr.mxu0 0.0
  %2751 = vmatpush1.msra.mxu0 0.0
  %2752 = vmatprep.subr.mxu0 0.0
  %2753 = vmatpush1.msra.mxu0 0.0
  %2754 = vmatprep.subr.mxu0 0.0
  %2755 = vmatpush1.msra.mxu0 0.0
  %2756 = vmatprep.subr.mxu0 0.0
  %2757 = vmatpush1.msra.mxu0 0.0
  %2758 = vmatprep.subr.mxu0 0.0
  %2759 = vmatpush1.msra.mxu0 0.0
  %2760 = vmatprep.subr.mxu0 0.0
  %2761 = vmatpush1.msra.mxu0 0.0
  %2762 = vmatprep.subr.mxu0 0.0
  %2763 = vmatpush1.msra.mxu0 0.0
  %2764 = vmatprep.subr.mxu0 0.0
  %2765 = vmatpush1.msra.mxu0 0.0
  %2766 = vmatprep.subr.mxu0 0.0
  %2767 = vmatpush1.msra.mxu0 0.0
  %2768 = vmatprep.subr.mxu0 0.0
  %2769 = vmatpush1.msra.mxu0 0.0
  %2770 = vmatprep.subr.mxu0 0.0
  %2771 = vmatpush1.msra.mxu0 0.0
  %2772 = vmatprep.subr.mxu0 0.0
  %2773 = vmatpush1.msra.mxu0 0.0
  %2774 = vmatprep.subr.mxu0 0.0
  %2775 = vmatpush1.msra.mxu0 0.0
  %2776 = vmatprep.subr.mxu0 0.0
  %2777 = vmatpush1.msra.mxu0 0.0
  %2778 = vmatprep.subr.mxu0 0.0
  %2779 = vmatpush1.msra.mxu0 0.0
  %2780 = vmatprep.subr.mxu0 0.0
  %2781 = vmatpush1.msra.mxu0 0.0
  %2782 = vmatprep.subr.mxu0 0.0
  %2783 = vmatpush1.msra.mxu0 0.0
  %2784 = vmatprep.subr.mxu0 0.0
  %2785 = vmatpush1.msra.mxu0 0.0
  %2786 = vmatprep.subr.mxu0 0.0
  %2787 = vmatpush1.msra.mxu0 0.0
  %2788 = vmatprep.subr.mxu0 0.0
  %2789 = vmatpush1.msra.mxu0 0.0
  %2790 = vmatprep.subr.mxu0 0.0
  %2791 = vmatpush1.msra.mxu0 0.0
  %2792 = vmatprep.subr.mxu0 0.0
  %2793 = vmatpush1.msra.mxu0 0.0
  %2794 = vmatprep.subr.mxu0 0.0
  %2795 = vmatpush1.msra.mxu0 0.0
  %2796 = vmatprep.subr.mxu0 0.0
  %2797 = vmatpush1.msra.mxu0 0.0
  %2798 = vmatprep.mubr.f32.mxu0 0.0
  %2799 = vmatmul.mubr.f32.gmra.mrb[0].mxu0 %v2732
  %v2800 = vpop.f32.mrb[0].mxu0
  %v2801 = vadd.f32 %v2728, %v2800
  %v2802 = vpop.f32.mrb[0].mxu0
  %2803 = vdwg.mxu0
  %2804 = vst [vmem:[%s5] sm:$0xff] %v2801
  // Predicated region
  $region22: #{csi1dcnn_forward.3} parent=0 // pred_check
    _
  $region23: #{csi1dcnn_forward.3} parent=0 // pred_check_branch
    %2806 = sbr.rel (0) target = $region25
  $region24: #{csi1dcnn_forward.3} parent=0 // pred_region
    _
  $region25: #{csi1dcnn_forward.3} parent=0 // pred_fallthru
    _
  // Predicated region
  $region26: #{csi1dcnn_forward.3} parent=0 // pred_check
    _
  $region27: #{csi1dcnn_forward.3} parent=0 // pred_check_branch
    %2808 = sbr.rel (0) target = $region29
  $region28: #{csi1dcnn_forward.3} parent=0 // pred_region
    _
  $region29: #{csi1dcnn_forward.3} parent=0 // pred_fallthru
    _

</llo_original>
